<compile_context>
chip_gen: v6e
topology: v6e:2x2x1
jax: 0.10.0
libtpu: 0.0.40
codegen_flags: <defaults>
</compile_context>

<pallas_src>
import functools

import jax
import jax.numpy as jnp
from jax import lax
from jax.experimental import pallas as pl
from jax.experimental.pallas import tpu as pltpu

HIDDEN_SIZE = 256   # from the module
N_VOCAB = 64        # synthetic vocab size (data-dependent in the original script)


def _sigmoid(x):
    # Single EUP tanh instead of exp + divide.
    return 0.5 * jnp.tanh(0.5 * x) + 0.5


def char_model_kernel(x_ref, wih_ref, whh_ref, b_ref, wlin_ref, blin_ref, out_ref):
    """Whole forward pass for one (padded) batch: LSTM recurrence + Linear."""
    T, B, _ = x_ref.shape
    H = whh_ref.shape[1]

    # Hoist every loop-invariant load out of the recurrence.
    x = x_ref[...]                        # (T, B, 1) f32
    wih = wih_ref[...]                    # (1, 4H)   f32
    bias = b_ref[...]                     # (1, 4H)   f32
    whh_i = whh_ref[0]                    # (H, H)    f32  per-gate W_hh^T
    whh_f = whh_ref[1]
    whh_g = whh_ref[2]
    whh_o = whh_ref[3]

    # Input contribution + bias for ALL timesteps, computed once
    # (input_size == 1, so this is a scale + shift per step).
    # (T, B, 1) * (1, 1, 4H) + (1, 1, 4H) -> (T, B, 4H)
    gates_x = x * wih[None, :, :] + bias[None, :, :]

    # h_0 = c_0 = 0 (PyTorch default when no initial state is passed).
    # State lives in vregs (loop carry); T is static and tiny, so a fully
    # unrolled Python loop exposes the whole chain to the scheduler.
    h = jnp.zeros((B, H), jnp.float32)
    c = jnp.zeros((B, H), jnp.float32)

    for t in range(T):
        gx = gates_x[t]                   # (B, 4H); gate slices are lane-aligned
        i = _sigmoid(gx[:, 0:H] +
                     jnp.dot(h, whh_i, preferred_element_type=jnp.float32))
        f = _sigmoid(gx[:, H:2 * H] +
                     jnp.dot(h, whh_f, preferred_element_type=jnp.float32))
        g = jnp.tanh(gx[:, 2 * H:3 * H] +
                     jnp.dot(h, whh_g, preferred_element_type=jnp.float32))
        o = _sigmoid(gx[:, 3 * H:4 * H] +
                     jnp.dot(h, whh_o, preferred_element_type=jnp.float32))
        c = f * c + i * g                 # f32 cell state
        h = o * jnp.tanh(c)               # f32 hidden state

    # x = x[:, -1, :]; x = linear(dropout(x))   (dropout = identity in eval).
    # Final projection: bf16 operands, f32 accumulation (non-recurrent).
    out_ref[...] = (jnp.dot(h.astype(jnp.bfloat16), wlin_ref[...],
                            preferred_element_type=jnp.float32)
                    + blin_ref[...]).astype(out_ref.dtype)


@functools.partial(jax.jit, static_argnames=("hidden_size",))
def char_model_forward(x, w_ih, w_hh, b_ih, b_hh, w_lin, b_lin,
                       *, hidden_size=HIDDEN_SIZE):
    """x: (B, T, 1) float32 -> logits (B, n_vocab) float32."""
    B, T, _ = x.shape
    V = w_lin.shape[0]
    H = hidden_size
    Bp = max(8, ((B + 7) // 8) * 8)               # sublane-dense batch
    Vp = max(128, ((V + 127) // 128) * 128)       # lane-dense output width

    # (B, T, 1) -> time-major, batch zero-padded to a full sublane tile.
    x_tb1 = jnp.zeros((T, Bp, 1), jnp.float32).at[:, :B, :].set(
        jnp.transpose(x.astype(jnp.float32), (1, 0, 2)))

    # PyTorch gate order [i, f, g, o]; per-gate W_hh^T blocks, all f32.
    wih_t = w_ih.astype(jnp.float32).reshape(1, 4 * H)                 # (1, 4H)
    whh_t = jnp.transpose(w_hh.astype(jnp.float32).reshape(4, H, H),
                          (0, 2, 1))                                   # (4, H, H)
    b = (b_ih + b_hh).reshape(1, 4 * H).astype(jnp.float32)            # (1, 4H)
    wlin_t = jnp.zeros((H, Vp), jnp.bfloat16).at[:, :V].set(
        w_lin.T.astype(jnp.bfloat16))                                  # (H, Vp)
    blin = jnp.zeros((1, Vp), jnp.float32).at[:, :V].set(
        b_lin.astype(jnp.float32))                                     # (1, Vp)

    vmem = pl.BlockSpec(memory_space=pltpu.MemorySpace.VMEM)
    out = pl.pallas_call(
        char_model_kernel,
        out_shape=jax.ShapeDtypeStruct((Bp, Vp), jnp.float32),
        in_specs=[vmem] * 6,
        out_specs=vmem,
    )(x_tb1, wih_t, whh_t, b, wlin_t, blin)
    return out[:B, :V]


def reference_forward(x, w_ih, w_hh, b_ih, b_hh, w_lin, b_lin):
    """Pure-JAX f32 reference mirroring torch.nn.LSTM + Linear (eval mode)."""
    B, T, _ = x.shape
    H = HIDDEN_SIZE
    h = jnp.zeros((B, H), jnp.float32)
    c = jnp.zeros((B, H), jnp.float32)

    def step(carry, x_t):
        h, c = carry
        gates = x_t @ w_ih.T + h @ w_hh.T + b_ih + b_hh
        i = jax.nn.sigmoid(gates[:, 0:H])
        f = jax.nn.sigmoid(gates[:, H:2 * H])
        g = jnp.tanh(gates[:, 2 * H:3 * H])
        o = jax.nn.sigmoid(gates[:, 3 * H:4 * H])
        c = f * c + i * g
        h = o * jnp.tanh(c)
        return (h, c), None

    (h, _), _ = lax.scan(step, (h, c), jnp.transpose(x, (1, 0, 2)))
    return h @ w_lin.T + b_lin


if __name__ == "__main__":
    B, T, H, V = 2, 8, HIDDEN_SIZE, N_VOCAB

    key = jax.random.PRNGKey(0)
    ks = jax.random.split(key, 7)
    k_lstm = 1.0 / jnp.sqrt(H)       # PyTorch default init bound for LSTM
    k_lin = 1.0 / jnp.sqrt(H)        # Linear: 1/sqrt(in_features)

    w_ih = jax.random.uniform(ks[0], (4 * H, 1), jnp.float32, -k_lstm, k_lstm)
    w_hh = jax.random.uniform(ks[1], (4 * H, H), jnp.float32, -k_lstm, k_lstm)
    b_ih = jax.random.uniform(ks[2], (4 * H,), jnp.float32, -k_lstm, k_lstm)
    b_hh = jax.random.uniform(ks[3], (4 * H,), jnp.float32, -k_lstm, k_lstm)
    w_lin = jax.random.uniform(ks[4], (V, H), jnp.float32, -k_lin, k_lin)
    b_lin = jax.random.uniform(ks[5], (V,), jnp.float32, -k_lin, k_lin)

    x = jax.random.uniform(ks[6], (B, T, 1), jnp.float32)   # normalized char codes

    out = char_model_forward(x, w_ih, w_hh, b_ih, b_hh, w_lin, b_lin)
    out = jax.block_until_ready(out)

    ref = reference_forward(x, w_ih, w_hh, b_ih, b_hh, w_lin, b_lin)
    assert out.shape == (B, V)
    # f32 recurrence + bf16 final projection; tolerance covers the bf16
    # projection cast and any reduced-precision MXU pass on the f32 dots.
    assert jnp.allclose(out, ref, atol=2e-2, rtol=2e-2), "mismatch vs reference"

    print("KERNEL_OK")
</pallas_src>

<mosaic_0001>
module attributes {stable_mosaic.version = 11 : i64} {
  func.func @char_model_kernel(%arg0: memref<8x8x1xf32, #tpu.memory_space<vmem>>, %arg1: memref<1x1024xf32, #tpu.memory_space<vmem>>, %arg2: memref<4x256x256xf32, #tpu.memory_space<vmem>>, %arg3: memref<1x1024xf32, #tpu.memory_space<vmem>>, %arg4: memref<256x128xbf16, #tpu.memory_space<vmem>>, %arg5: memref<1x128xf32, #tpu.memory_space<vmem>>, %arg6: memref<8x128xf32, #tpu.memory_space<vmem>>) attributes {dimension_semantics = [], scalar_prefetch = 0 : i64, scratch_operands = 0 : i64, tpu.core_type = #tpu.core_type<tc>} {
    %c0 = arith.constant 0 : index
    %c0_0 = arith.constant 0 : index
    %c0_1 = arith.constant 0 : index
    %0 = vector.load %arg0[%c0, %c0_0, %c0_1] : memref<8x8x1xf32, #tpu.memory_space<vmem>>, vector<8x8x1xf32>
    %c0_2 = arith.constant 0 : index
    %c0_3 = arith.constant 0 : index
    %1 = vector.load %arg1[%c0_2, %c0_3] : memref<1x1024xf32, #tpu.memory_space<vmem>>, vector<1x1024xf32>
    %c0_4 = arith.constant 0 : index
    %c0_5 = arith.constant 0 : index
    %2 = vector.load %arg3[%c0_4, %c0_5] : memref<1x1024xf32, #tpu.memory_space<vmem>>, vector<1x1024xf32>
    %c0_6 = arith.constant 0 : index
    %c0_7 = arith.constant 0 : index
    %c0_8 = arith.constant 0 : index
    %3 = vector.load %arg2[%c0_6, %c0_7, %c0_8] : memref<4x256x256xf32, #tpu.memory_space<vmem>>, vector<1x256x256xf32>
    %4 = vector.shape_cast %3 : vector<1x256x256xf32> to vector<256x256xf32>
    %c1 = arith.constant 1 : index
    %c0_9 = arith.constant 0 : index
    %c0_10 = arith.constant 0 : index
    %5 = vector.load %arg2[%c1, %c0_9, %c0_10] : memref<4x256x256xf32, #tpu.memory_space<vmem>>, vector<1x256x256xf32>
    %6 = vector.shape_cast %5 : vector<1x256x256xf32> to vector<256x256xf32>
    %c2 = arith.constant 2 : index
    %c0_11 = arith.constant 0 : index
    %c0_12 = arith.constant 0 : index
    %7 = vector.load %arg2[%c2, %c0_11, %c0_12] : memref<4x256x256xf32, #tpu.memory_space<vmem>>, vector<1x256x256xf32>
    %8 = vector.shape_cast %7 : vector<1x256x256xf32> to vector<256x256xf32>
    %c3 = arith.constant 3 : index
    %c0_13 = arith.constant 0 : index
    %c0_14 = arith.constant 0 : index
    %9 = vector.load %arg2[%c3, %c0_13, %c0_14] : memref<4x256x256xf32, #tpu.memory_space<vmem>>, vector<1x256x256xf32>
    %10 = vector.shape_cast %9 : vector<1x256x256xf32> to vector<256x256xf32>
    %11 = vector.shape_cast %1 : vector<1x1024xf32> to vector<1x1x1024xf32>
    %12 = vector.broadcast %0 : vector<8x8x1xf32> to vector<8x8x1024xf32>
    %13 = vector.broadcast %11 : vector<1x1x1024xf32> to vector<8x8x1024xf32>
    %14 = arith.mulf %12, %13 : vector<8x8x1024xf32>
    %15 = vector.shape_cast %2 : vector<1x1024xf32> to vector<1x1x1024xf32>
    %16 = vector.broadcast %15 : vector<1x1x1024xf32> to vector<8x8x1024xf32>
    %17 = arith.addf %14, %16 : vector<8x8x1024xf32>
    %cst = arith.constant 0.000000e+00 : f32
    %18 = vector.broadcast %cst : f32 to vector<8x256xf32>
    %cst_15 = arith.constant 0.000000e+00 : f32
    %19 = vector.broadcast %cst_15 : f32 to vector<8x256xf32>
    %20 = vector.extract_strided_slice %17 {offsets = [0, 0, 0], sizes = [1, 8, 1024], strides = [1, 1, 1]} : vector<8x8x1024xf32> to vector<1x8x1024xf32>
    %21 = vector.shape_cast %20 : vector<1x8x1024xf32> to vector<8x1024xf32>
    %22 = vector.extract_strided_slice %21 {offsets = [0, 0], sizes = [8, 256], strides = [1, 1]} : vector<8x1024xf32> to vector<8x256xf32>
    %cst_16 = arith.constant dense<0.000000e+00> : vector<8x256xf32>
    %23 = tpu.matmul %18, %4, %cst_16 {dimension_numbers = #tpu.dot_dimension_numbers<[1], [0], [0], [1], [0, 0, 1, 1], [], []>} : vector<8x256xf32>, vector<256x256xf32>, vector<8x256xf32> -> vector<8x256xf32>
    %24 = arith.addf %22, %23 : vector<8x256xf32>
    %cst_17 = arith.constant 5.000000e-01 : f32
    %25 = vector.broadcast %cst_17 : f32 to vector<8x256xf32>
    %26 = arith.mulf %25, %24 : vector<8x256xf32>
    %27 = math.tanh %26 : vector<8x256xf32>
    %cst_18 = arith.constant 5.000000e-01 : f32
    %28 = vector.broadcast %cst_18 : f32 to vector<8x256xf32>
    %29 = arith.mulf %28, %27 : vector<8x256xf32>
    %cst_19 = arith.constant 5.000000e-01 : f32
    %30 = vector.broadcast %cst_19 : f32 to vector<8x256xf32>
    %31 = arith.addf %29, %30 : vector<8x256xf32>
    %32 = vector.extract_strided_slice %21 {offsets = [0, 256], sizes = [8, 256], strides = [1, 1]} : vector<8x1024xf32> to vector<8x256xf32>
    %cst_20 = arith.constant dense<0.000000e+00> : vector<8x256xf32>
    %33 = tpu.matmul %18, %6, %cst_20 {dimension_numbers = #tpu.dot_dimension_numbers<[1], [0], [0], [1], [0, 0, 1, 1], [], []>} : vector<8x256xf32>, vector<256x256xf32>, vector<8x256xf32> -> vector<8x256xf32>
    %34 = arith.addf %32, %33 : vector<8x256xf32>
    %cst_21 = arith.constant 5.000000e-01 : f32
    %35 = vector.broadcast %cst_21 : f32 to vector<8x256xf32>
    %36 = arith.mulf %35, %34 : vector<8x256xf32>
    %37 = math.tanh %36 : vector<8x256xf32>
    %cst_22 = arith.constant 5.000000e-01 : f32
    %38 = vector.broadcast %cst_22 : f32 to vector<8x256xf32>
    %39 = arith.mulf %38, %37 : vector<8x256xf32>
    %cst_23 = arith.constant 5.000000e-01 : f32
    %40 = vector.broadcast %cst_23 : f32 to vector<8x256xf32>
    %41 = arith.addf %39, %40 : vector<8x256xf32>
    %42 = vector.extract_strided_slice %21 {offsets = [0, 512], sizes = [8, 256], strides = [1, 1]} : vector<8x1024xf32> to vector<8x256xf32>
    %cst_24 = arith.constant dense<0.000000e+00> : vector<8x256xf32>
    %43 = tpu.matmul %18, %8, %cst_24 {dimension_numbers = #tpu.dot_dimension_numbers<[1], [0], [0], [1], [0, 0, 1, 1], [], []>} : vector<8x256xf32>, vector<256x256xf32>, vector<8x256xf32> -> vector<8x256xf32>
    %44 = arith.addf %42, %43 : vector<8x256xf32>
    %45 = math.tanh %44 : vector<8x256xf32>
    %46 = vector.extract_strided_slice %21 {offsets = [0, 768], sizes = [8, 256], strides = [1, 1]} : vector<8x1024xf32> to vector<8x256xf32>
    %cst_25 = arith.constant dense<0.000000e+00> : vector<8x256xf32>
    %47 = tpu.matmul %18, %10, %cst_25 {dimension_numbers = #tpu.dot_dimension_numbers<[1], [0], [0], [1], [0, 0, 1, 1], [], []>} : vector<8x256xf32>, vector<256x256xf32>, vector<8x256xf32> -> vector<8x256xf32>
    %48 = arith.addf %46, %47 : vector<8x256xf32>
    %cst_26 = arith.constant 5.000000e-01 : f32
    %49 = vector.broadcast %cst_26 : f32 to vector<8x256xf32>
    %50 = arith.mulf %49, %48 : vector<8x256xf32>
    %51 = math.tanh %50 : vector<8x256xf32>
    %cst_27 = arith.constant 5.000000e-01 : f32
    %52 = vector.broadcast %cst_27 : f32 to vector<8x256xf32>
    %53 = arith.mulf %52, %51 : vector<8x256xf32>
    %cst_28 = arith.constant 5.000000e-01 : f32
    %54 = vector.broadcast %cst_28 : f32 to vector<8x256xf32>
    %55 = arith.addf %53, %54 : vector<8x256xf32>
    %56 = arith.mulf %41, %19 : vector<8x256xf32>
    %57 = arith.mulf %31, %45 : vector<8x256xf32>
    %58 = arith.addf %56, %57 : vector<8x256xf32>
    %59 = math.tanh %58 : vector<8x256xf32>
    %60 = arith.mulf %55, %59 : vector<8x256xf32>
    %61 = vector.extract_strided_slice %17 {offsets = [1, 0, 0], sizes = [1, 8, 1024], strides = [1, 1, 1]} : vector<8x8x1024xf32> to vector<1x8x1024xf32>
    %62 = vector.shape_cast %61 : vector<1x8x1024xf32> to vector<8x1024xf32>
    %63 = vector.extract_strided_slice %62 {offsets = [0, 0], sizes = [8, 256], strides = [1, 1]} : vector<8x1024xf32> to vector<8x256xf32>
    %cst_29 = arith.constant dense<0.000000e+00> : vector<8x256xf32>
    %64 = tpu.matmul %60, %4, %cst_29 {dimension_numbers = #tpu.dot_dimension_numbers<[1], [0], [0], [1], [0, 0, 1, 1], [], []>} : vector<8x256xf32>, vector<256x256xf32>, vector<8x256xf32> -> vector<8x256xf32>
    %65 = arith.addf %63, %64 : vector<8x256xf32>
    %cst_30 = arith.constant 5.000000e-01 : f32
    %66 = vector.broadcast %cst_30 : f32 to vector<8x256xf32>
    %67 = arith.mulf %66, %65 : vector<8x256xf32>
    %68 = math.tanh %67 : vector<8x256xf32>
    %cst_31 = arith.constant 5.000000e-01 : f32
    %69 = vector.broadcast %cst_31 : f32 to vector<8x256xf32>
    %70 = arith.mulf %69, %68 : vector<8x256xf32>
    %cst_32 = arith.constant 5.000000e-01 : f32
    %71 = vector.broadcast %cst_32 : f32 to vector<8x256xf32>
    %72 = arith.addf %70, %71 : vector<8x256xf32>
    %73 = vector.extract_strided_slice %62 {offsets = [0, 256], sizes = [8, 256], strides = [1, 1]} : vector<8x1024xf32> to vector<8x256xf32>
    %cst_33 = arith.constant dense<0.000000e+00> : vector<8x256xf32>
    %74 = tpu.matmul %60, %6, %cst_33 {dimension_numbers = #tpu.dot_dimension_numbers<[1], [0], [0], [1], [0, 0, 1, 1], [], []>} : vector<8x256xf32>, vector<256x256xf32>, vector<8x256xf32> -> vector<8x256xf32>
    %75 = arith.addf %73, %74 : vector<8x256xf32>
    %cst_34 = arith.constant 5.000000e-01 : f32
    %76 = vector.broadcast %cst_34 : f32 to vector<8x256xf32>
    %77 = arith.mulf %76, %75 : vector<8x256xf32>
    %78 = math.tanh %77 : vector<8x256xf32>
    %cst_35 = arith.constant 5.000000e-01 : f32
    %79 = vector.broadcast %cst_35 : f32 to vector<8x256xf32>
    %80 = arith.mulf %79, %78 : vector<8x256xf32>
    %cst_36 = arith.constant 5.000000e-01 : f32
    %81 = vector.broadcast %cst_36 : f32 to vector<8x256xf32>
    %82 = arith.addf %80, %81 : vector<8x256xf32>
    %83 = vector.extract_strided_slice %62 {offsets = [0, 512], sizes = [8, 256], strides = [1, 1]} : vector<8x1024xf32> to vector<8x256xf32>
    %cst_37 = arith.constant dense<0.000000e+00> : vector<8x256xf32>
    %84 = tpu.matmul %60, %8, %cst_37 {dimension_numbers = #tpu.dot_dimension_numbers<[1], [0], [0], [1], [0, 0, 1, 1], [], []>} : vector<8x256xf32>, vector<256x256xf32>, vector<8x256xf32> -> vector<8x256xf32>
    %85 = arith.addf %83, %84 : vector<8x256xf32>
    %86 = math.tanh %85 : vector<8x256xf32>
    %87 = vector.extract_strided_slice %62 {offsets = [0, 768], sizes = [8, 256], strides = [1, 1]} : vector<8x1024xf32> to vector<8x256xf32>
    %cst_38 = arith.constant dense<0.000000e+00> : vector<8x256xf32>
    %88 = tpu.matmul %60, %10, %cst_38 {dimension_numbers = #tpu.dot_dimension_numbers<[1], [0], [0], [1], [0, 0, 1, 1], [], []>} : vector<8x256xf32>, vector<256x256xf32>, vector<8x256xf32> -> vector<8x256xf32>
    %89 = arith.addf %87, %88 : vector<8x256xf32>
    %cst_39 = arith.constant 5.000000e-01 : f32
    %90 = vector.broadcast %cst_39 : f32 to vector<8x256xf32>
    %91 = arith.mulf %90, %89 : vector<8x256xf32>
    %92 = math.tanh %91 : vector<8x256xf32>
    %cst_40 = arith.constant 5.000000e-01 : f32
    %93 = vector.broadcast %cst_40 : f32 to vector<8x256xf32>
    %94 = arith.mulf %93, %92 : vector<8x256xf32>
    %cst_41 = arith.constant 5.000000e-01 : f32
    %95 = vector.broadcast %cst_41 : f32 to vector<8x256xf32>
    %96 = arith.addf %94, %95 : vector<8x256xf32>
    %97 = arith.mulf %82, %58 : vector<8x256xf32>
    %98 = arith.mulf %72, %86 : vector<8x256xf32>
    %99 = arith.addf %97, %98 : vector<8x256xf32>
    %100 = math.tanh %99 : vector<8x256xf32>
    %101 = arith.mulf %96, %100 : vector<8x256xf32>
    %102 = vector.extract_strided_slice %17 {offsets = [2, 0, 0], sizes = [1, 8, 1024], strides = [1, 1, 1]} : vector<8x8x1024xf32> to vector<1x8x1024xf32>
    %103 = vector.shape_cast %102 : vector<1x8x1024xf32> to vector<8x1024xf32>
    %104 = vector.extract_strided_slice %103 {offsets = [0, 0], sizes = [8, 256], strides = [1, 1]} : vector<8x1024xf32> to vector<8x256xf32>
    %cst_42 = arith.constant dense<0.000000e+00> : vector<8x256xf32>
    %105 = tpu.matmul %101, %4, %cst_42 {dimension_numbers = #tpu.dot_dimension_numbers<[1], [0], [0], [1], [0, 0, 1, 1], [], []>} : vector<8x256xf32>, vector<256x256xf32>, vector<8x256xf32> -> vector<8x256xf32>
    %106 = arith.addf %104, %105 : vector<8x256xf32>
    %cst_43 = arith.constant 5.000000e-01 : f32
    %107 = vector.broadcast %cst_43 : f32 to vector<8x256xf32>
    %108 = arith.mulf %107, %106 : vector<8x256xf32>
    %109 = math.tanh %108 : vector<8x256xf32>
    %cst_44 = arith.constant 5.000000e-01 : f32
    %110 = vector.broadcast %cst_44 : f32 to vector<8x256xf32>
    %111 = arith.mulf %110, %109 : vector<8x256xf32>
    %cst_45 = arith.constant 5.000000e-01 : f32
    %112 = vector.broadcast %cst_45 : f32 to vector<8x256xf32>
    %113 = arith.addf %111, %112 : vector<8x256xf32>
    %114 = vector.extract_strided_slice %103 {offsets = [0, 256], sizes = [8, 256], strides = [1, 1]} : vector<8x1024xf32> to vector<8x256xf32>
    %cst_46 = arith.constant dense<0.000000e+00> : vector<8x256xf32>
    %115 = tpu.matmul %101, %6, %cst_46 {dimension_numbers = #tpu.dot_dimension_numbers<[1], [0], [0], [1], [0, 0, 1, 1], [], []>} : vector<8x256xf32>, vector<256x256xf32>, vector<8x256xf32> -> vector<8x256xf32>
    %116 = arith.addf %114, %115 : vector<8x256xf32>
    %cst_47 = arith.constant 5.000000e-01 : f32
    %117 = vector.broadcast %cst_47 : f32 to vector<8x256xf32>
    %118 = arith.mulf %117, %116 : vector<8x256xf32>
    %119 = math.tanh %118 : vector<8x256xf32>
    %cst_48 = arith.constant 5.000000e-01 : f32
    %120 = vector.broadcast %cst_48 : f32 to vector<8x256xf32>
    %121 = arith.mulf %120, %119 : vector<8x256xf32>
    %cst_49 = arith.constant 5.000000e-01 : f32
    %122 = vector.broadcast %cst_49 : f32 to vector<8x256xf32>
    %123 = arith.addf %121, %122 : vector<8x256xf32>
    %124 = vector.extract_strided_slice %103 {offsets = [0, 512], sizes = [8, 256], strides = [1, 1]} : vector<8x1024xf32> to vector<8x256xf32>
    %cst_50 = arith.constant dense<0.000000e+00> : vector<8x256xf32>
    %125 = tpu.matmul %101, %8, %cst_50 {dimension_numbers = #tpu.dot_dimension_numbers<[1], [0], [0], [1], [0, 0, 1, 1], [], []>} : vector<8x256xf32>, vector<256x256xf32>, vector<8x256xf32> -> vector<8x256xf32>
    %126 = arith.addf %124, %125 : vector<8x256xf32>
    %127 = math.tanh %126 : vector<8x256xf32>
    %128 = vector.extract_strided_slice %103 {offsets = [0, 768], sizes = [8, 256], strides = [1, 1]} : vector<8x1024xf32> to vector<8x256xf32>
    %cst_51 = arith.constant dense<0.000000e+00> : vector<8x256xf32>
    %129 = tpu.matmul %101, %10, %cst_51 {dimension_numbers = #tpu.dot_dimension_numbers<[1], [0], [0], [1], [0, 0, 1, 1], [], []>} : vector<8x256xf32>, vector<256x256xf32>, vector<8x256xf32> -> vector<8x256xf32>
    %130 = arith.addf %128, %129 : vector<8x256xf32>
    %cst_52 = arith.constant 5.000000e-01 : f32
    %131 = vector.broadcast %cst_52 : f32 to vector<8x256xf32>
    %132 = arith.mulf %131, %130 : vector<8x256xf32>
    %133 = math.tanh %132 : vector<8x256xf32>
    %cst_53 = arith.constant 5.000000e-01 : f32
    %134 = vector.broadcast %cst_53 : f32 to vector<8x256xf32>
    %135 = arith.mulf %134, %133 : vector<8x256xf32>
    %cst_54 = arith.constant 5.000000e-01 : f32
    %136 = vector.broadcast %cst_54 : f32 to vector<8x256xf32>
    %137 = arith.addf %135, %136 : vector<8x256xf32>
    %138 = arith.mulf %123, %99 : vector<8x256xf32>
    %139 = arith.mulf %113, %127 : vector<8x256xf32>
    %140 = arith.addf %138, %139 : vector<8x256xf32>
    %141 = math.tanh %140 : vector<8x256xf32>
    %142 = arith.mulf %137, %141 : vector<8x256xf32>
    %143 = vector.extract_strided_slice %17 {offsets = [3, 0, 0], sizes = [1, 8, 1024], strides = [1, 1, 1]} : vector<8x8x1024xf32> to vector<1x8x1024xf32>
    %144 = vector.shape_cast %143 : vector<1x8x1024xf32> to vector<8x1024xf32>
    %145 = vector.extract_strided_slice %144 {offsets = [0, 0], sizes = [8, 256], strides = [1, 1]} : vector<8x1024xf32> to vector<8x256xf32>
    %cst_55 = arith.constant dense<0.000000e+00> : vector<8x256xf32>
    %146 = tpu.matmul %142, %4, %cst_55 {dimension_numbers = #tpu.dot_dimension_numbers<[1], [0], [0], [1], [0, 0, 1, 1], [], []>} : vector<8x256xf32>, vector<256x256xf32>, vector<8x256xf32> -> vector<8x256xf32>
    %147 = arith.addf %145, %146 : vector<8x256xf32>
    %cst_56 = arith.constant 5.000000e-01 : f32
    %148 = vector.broadcast %cst_56 : f32 to vector<8x256xf32>
    %149 = arith.mulf %148, %147 : vector<8x256xf32>
    %150 = math.tanh %149 : vector<8x256xf32>
    %cst_57 = arith.constant 5.000000e-01 : f32
    %151 = vector.broadcast %cst_57 : f32 to vector<8x256xf32>
    %152 = arith.mulf %151, %150 : vector<8x256xf32>
    %cst_58 = arith.constant 5.000000e-01 : f32
    %153 = vector.broadcast %cst_58 : f32 to vector<8x256xf32>
    %154 = arith.addf %152, %153 : vector<8x256xf32>
    %155 = vector.extract_strided_slice %144 {offsets = [0, 256], sizes = [8, 256], strides = [1, 1]} : vector<8x1024xf32> to vector<8x256xf32>
    %cst_59 = arith.constant dense<0.000000e+00> : vector<8x256xf32>
    %156 = tpu.matmul %142, %6, %cst_59 {dimension_numbers = #tpu.dot_dimension_numbers<[1], [0], [0], [1], [0, 0, 1, 1], [], []>} : vector<8x256xf32>, vector<256x256xf32>, vector<8x256xf32> -> vector<8x256xf32>
    %157 = arith.addf %155, %156 : vector<8x256xf32>
    %cst_60 = arith.constant 5.000000e-01 : f32
    %158 = vector.broadcast %cst_60 : f32 to vector<8x256xf32>
    %159 = arith.mulf %158, %157 : vector<8x256xf32>
    %160 = math.tanh %159 : vector<8x256xf32>
    %cst_61 = arith.constant 5.000000e-01 : f32
    %161 = vector.broadcast %cst_61 : f32 to vector<8x256xf32>
    %162 = arith.mulf %161, %160 : vector<8x256xf32>
    %cst_62 = arith.constant 5.000000e-01 : f32
    %163 = vector.broadcast %cst_62 : f32 to vector<8x256xf32>
    %164 = arith.addf %162, %163 : vector<8x256xf32>
    %165 = vector.extract_strided_slice %144 {offsets = [0, 512], sizes = [8, 256], strides = [1, 1]} : vector<8x1024xf32> to vector<8x256xf32>
    %cst_63 = arith.constant dense<0.000000e+00> : vector<8x256xf32>
    %166 = tpu.matmul %142, %8, %cst_63 {dimension_numbers = #tpu.dot_dimension_numbers<[1], [0], [0], [1], [0, 0, 1, 1], [], []>} : vector<8x256xf32>, vector<256x256xf32>, vector<8x256xf32> -> vector<8x256xf32>
    %167 = arith.addf %165, %166 : vector<8x256xf32>
    %168 = math.tanh %167 : vector<8x256xf32>
    %169 = vector.extract_strided_slice %144 {offsets = [0, 768], sizes = [8, 256], strides = [1, 1]} : vector<8x1024xf32> to vector<8x256xf32>
    %cst_64 = arith.constant dense<0.000000e+00> : vector<8x256xf32>
    %170 = tpu.matmul %142, %10, %cst_64 {dimension_numbers = #tpu.dot_dimension_numbers<[1], [0], [0], [1], [0, 0, 1, 1], [], []>} : vector<8x256xf32>, vector<256x256xf32>, vector<8x256xf32> -> vector<8x256xf32>
    %171 = arith.addf %169, %170 : vector<8x256xf32>
    %cst_65 = arith.constant 5.000000e-01 : f32
    %172 = vector.broadcast %cst_65 : f32 to vector<8x256xf32>
    %173 = arith.mulf %172, %171 : vector<8x256xf32>
    %174 = math.tanh %173 : vector<8x256xf32>
    %cst_66 = arith.constant 5.000000e-01 : f32
    %175 = vector.broadcast %cst_66 : f32 to vector<8x256xf32>
    %176 = arith.mulf %175, %174 : vector<8x256xf32>
    %cst_67 = arith.constant 5.000000e-01 : f32
    %177 = vector.broadcast %cst_67 : f32 to vector<8x256xf32>
    %178 = arith.addf %176, %177 : vector<8x256xf32>
    %179 = arith.mulf %164, %140 : vector<8x256xf32>
    %180 = arith.mulf %154, %168 : vector<8x256xf32>
    %181 = arith.addf %179, %180 : vector<8x256xf32>
    %182 = math.tanh %181 : vector<8x256xf32>
    %183 = arith.mulf %178, %182 : vector<8x256xf32>
    %184 = vector.extract_strided_slice %17 {offsets = [4, 0, 0], sizes = [1, 8, 1024], strides = [1, 1, 1]} : vector<8x8x1024xf32> to vector<1x8x1024xf32>
    %185 = vector.shape_cast %184 : vector<1x8x1024xf32> to vector<8x1024xf32>
    %186 = vector.extract_strided_slice %185 {offsets = [0, 0], sizes = [8, 256], strides = [1, 1]} : vector<8x1024xf32> to vector<8x256xf32>
    %cst_68 = arith.constant dense<0.000000e+00> : vector<8x256xf32>
    %187 = tpu.matmul %183, %4, %cst_68 {dimension_numbers = #tpu.dot_dimension_numbers<[1], [0], [0], [1], [0, 0, 1, 1], [], []>} : vector<8x256xf32>, vector<256x256xf32>, vector<8x256xf32> -> vector<8x256xf32>
    %188 = arith.addf %186, %187 : vector<8x256xf32>
    %cst_69 = arith.constant 5.000000e-01 : f32
    %189 = vector.broadcast %cst_69 : f32 to vector<8x256xf32>
    %190 = arith.mulf %189, %188 : vector<8x256xf32>
    %191 = math.tanh %190 : vector<8x256xf32>
    %cst_70 = arith.constant 5.000000e-01 : f32
    %192 = vector.broadcast %cst_70 : f32 to vector<8x256xf32>
    %193 = arith.mulf %192, %191 : vector<8x256xf32>
    %cst_71 = arith.constant 5.000000e-01 : f32
    %194 = vector.broadcast %cst_71 : f32 to vector<8x256xf32>
    %195 = arith.addf %193, %194 : vector<8x256xf32>
    %196 = vector.extract_strided_slice %185 {offsets = [0, 256], sizes = [8, 256], strides = [1, 1]} : vector<8x1024xf32> to vector<8x256xf32>
    %cst_72 = arith.constant dense<0.000000e+00> : vector<8x256xf32>
    %197 = tpu.matmul %183, %6, %cst_72 {dimension_numbers = #tpu.dot_dimension_numbers<[1], [0], [0], [1], [0, 0, 1, 1], [], []>} : vector<8x256xf32>, vector<256x256xf32>, vector<8x256xf32> -> vector<8x256xf32>
    %198 = arith.addf %196, %197 : vector<8x256xf32>
    %cst_73 = arith.constant 5.000000e-01 : f32
    %199 = vector.broadcast %cst_73 : f32 to vector<8x256xf32>
    %200 = arith.mulf %199, %198 : vector<8x256xf32>
    %201 = math.tanh %200 : vector<8x256xf32>
    %cst_74 = arith.constant 5.000000e-01 : f32
    %202 = vector.broadcast %cst_74 : f32 to vector<8x256xf32>
    %203 = arith.mulf %202, %201 : vector<8x256xf32>
    %cst_75 = arith.constant 5.000000e-01 : f32
    %204 = vector.broadcast %cst_75 : f32 to vector<8x256xf32>
    %205 = arith.addf %203, %204 : vector<8x256xf32>
    %206 = vector.extract_strided_slice %185 {offsets = [0, 512], sizes = [8, 256], strides = [1, 1]} : vector<8x1024xf32> to vector<8x256xf32>
    %cst_76 = arith.constant dense<0.000000e+00> : vector<8x256xf32>
    %207 = tpu.matmul %183, %8, %cst_76 {dimension_numbers = #tpu.dot_dimension_numbers<[1], [0], [0], [1], [0, 0, 1, 1], [], []>} : vector<8x256xf32>, vector<256x256xf32>, vector<8x256xf32> -> vector<8x256xf32>
    %208 = arith.addf %206, %207 : vector<8x256xf32>
    %209 = math.tanh %208 : vector<8x256xf32>
    %210 = vector.extract_strided_slice %185 {offsets = [0, 768], sizes = [8, 256], strides = [1, 1]} : vector<8x1024xf32> to vector<8x256xf32>
    %cst_77 = arith.constant dense<0.000000e+00> : vector<8x256xf32>
    %211 = tpu.matmul %183, %10, %cst_77 {dimension_numbers = #tpu.dot_dimension_numbers<[1], [0], [0], [1], [0, 0, 1, 1], [], []>} : vector<8x256xf32>, vector<256x256xf32>, vector<8x256xf32> -> vector<8x256xf32>
    %212 = arith.addf %210, %211 : vector<8x256xf32>
    %cst_78 = arith.constant 5.000000e-01 : f32
    %213 = vector.broadcast %cst_78 : f32 to vector<8x256xf32>
    %214 = arith.mulf %213, %212 : vector<8x256xf32>
    %215 = math.tanh %214 : vector<8x256xf32>
    %cst_79 = arith.constant 5.000000e-01 : f32
    %216 = vector.broadcast %cst_79 : f32 to vector<8x256xf32>
    %217 = arith.mulf %216, %215 : vector<8x256xf32>
    %cst_80 = arith.constant 5.000000e-01 : f32
    %218 = vector.broadcast %cst_80 : f32 to vector<8x256xf32>
    %219 = arith.addf %217, %218 : vector<8x256xf32>
    %220 = arith.mulf %205, %181 : vector<8x256xf32>
    %221 = arith.mulf %195, %209 : vector<8x256xf32>
    %222 = arith.addf %220, %221 : vector<8x256xf32>
    %223 = math.tanh %222 : vector<8x256xf32>
    %224 = arith.mulf %219, %223 : vector<8x256xf32>
    %225 = vector.extract_strided_slice %17 {offsets = [5, 0, 0], sizes = [1, 8, 1024], strides = [1, 1, 1]} : vector<8x8x1024xf32> to vector<1x8x1024xf32>
    %226 = vector.shape_cast %225 : vector<1x8x1024xf32> to vector<8x1024xf32>
    %227 = vector.extract_strided_slice %226 {offsets = [0, 0], sizes = [8, 256], strides = [1, 1]} : vector<8x1024xf32> to vector<8x256xf32>
    %cst_81 = arith.constant dense<0.000000e+00> : vector<8x256xf32>
    %228 = tpu.matmul %224, %4, %cst_81 {dimension_numbers = #tpu.dot_dimension_numbers<[1], [0], [0], [1], [0, 0, 1, 1], [], []>} : vector<8x256xf32>, vector<256x256xf32>, vector<8x256xf32> -> vector<8x256xf32>
    %229 = arith.addf %227, %228 : vector<8x256xf32>
    %cst_82 = arith.constant 5.000000e-01 : f32
    %230 = vector.broadcast %cst_82 : f32 to vector<8x256xf32>
    %231 = arith.mulf %230, %229 : vector<8x256xf32>
    %232 = math.tanh %231 : vector<8x256xf32>
    %cst_83 = arith.constant 5.000000e-01 : f32
    %233 = vector.broadcast %cst_83 : f32 to vector<8x256xf32>
    %234 = arith.mulf %233, %232 : vector<8x256xf32>
    %cst_84 = arith.constant 5.000000e-01 : f32
    %235 = vector.broadcast %cst_84 : f32 to vector<8x256xf32>
    %236 = arith.addf %234, %235 : vector<8x256xf32>
    %237 = vector.extract_strided_slice %226 {offsets = [0, 256], sizes = [8, 256], strides = [1, 1]} : vector<8x1024xf32> to vector<8x256xf32>
    %cst_85 = arith.constant dense<0.000000e+00> : vector<8x256xf32>
    %238 = tpu.matmul %224, %6, %cst_85 {dimension_numbers = #tpu.dot_dimension_numbers<[1], [0], [0], [1], [0, 0, 1, 1], [], []>} : vector<8x256xf32>, vector<256x256xf32>, vector<8x256xf32> -> vector<8x256xf32>
    %239 = arith.addf %237, %238 : vector<8x256xf32>
    %cst_86 = arith.constant 5.000000e-01 : f32
    %240 = vector.broadcast %cst_86 : f32 to vector<8x256xf32>
    %241 = arith.mulf %240, %239 : vector<8x256xf32>
    %242 = math.tanh %241 : vector<8x256xf32>
    %cst_87 = arith.constant 5.000000e-01 : f32
    %243 = vector.broadcast %cst_87 : f32 to vector<8x256xf32>
    %244 = arith.mulf %243, %242 : vector<8x256xf32>
    %cst_88 = arith.constant 5.000000e-01 : f32
    %245 = vector.broadcast %cst_88 : f32 to vector<8x256xf32>
    %246 = arith.addf %244, %245 : vector<8x256xf32>
    %247 = vector.extract_strided_slice %226 {offsets = [0, 512], sizes = [8, 256], strides = [1, 1]} : vector<8x1024xf32> to vector<8x256xf32>
    %cst_89 = arith.constant dense<0.000000e+00> : vector<8x256xf32>
    %248 = tpu.matmul %224, %8, %cst_89 {dimension_numbers = #tpu.dot_dimension_numbers<[1], [0], [0], [1], [0, 0, 1, 1], [], []>} : vector<8x256xf32>, vector<256x256xf32>, vector<8x256xf32> -> vector<8x256xf32>
    %249 = arith.addf %247, %248 : vector<8x256xf32>
    %250 = math.tanh %249 : vector<8x256xf32>
    %251 = vector.extract_strided_slice %226 {offsets = [0, 768], sizes = [8, 256], strides = [1, 1]} : vector<8x1024xf32> to vector<8x256xf32>
    %cst_90 = arith.constant dense<0.000000e+00> : vector<8x256xf32>
    %252 = tpu.matmul %224, %10, %cst_90 {dimension_numbers = #tpu.dot_dimension_numbers<[1], [0], [0], [1], [0, 0, 1, 1], [], []>} : vector<8x256xf32>, vector<256x256xf32>, vector<8x256xf32> -> vector<8x256xf32>
    %253 = arith.addf %251, %252 : vector<8x256xf32>
    %cst_91 = arith.constant 5.000000e-01 : f32
    %254 = vector.broadcast %cst_91 : f32 to vector<8x256xf32>
    %255 = arith.mulf %254, %253 : vector<8x256xf32>
    %256 = math.tanh %255 : vector<8x256xf32>
    %cst_92 = arith.constant 5.000000e-01 : f32
    %257 = vector.broadcast %cst_92 : f32 to vector<8x256xf32>
    %258 = arith.mulf %257, %256 : vector<8x256xf32>
    %cst_93 = arith.constant 5.000000e-01 : f32
    %259 = vector.broadcast %cst_93 : f32 to vector<8x256xf32>
    %260 = arith.addf %258, %259 : vector<8x256xf32>
    %261 = arith.mulf %246, %222 : vector<8x256xf32>
    %262 = arith.mulf %236, %250 : vector<8x256xf32>
    %263 = arith.addf %261, %262 : vector<8x256xf32>
    %264 = math.tanh %263 : vector<8x256xf32>
    %265 = arith.mulf %260, %264 : vector<8x256xf32>
    %266 = vector.extract_strided_slice %17 {offsets = [6, 0, 0], sizes = [1, 8, 1024], strides = [1, 1, 1]} : vector<8x8x1024xf32> to vector<1x8x1024xf32>
    %267 = vector.shape_cast %266 : vector<1x8x1024xf32> to vector<8x1024xf32>
    %268 = vector.extract_strided_slice %267 {offsets = [0, 0], sizes = [8, 256], strides = [1, 1]} : vector<8x1024xf32> to vector<8x256xf32>
    %cst_94 = arith.constant dense<0.000000e+00> : vector<8x256xf32>
    %269 = tpu.matmul %265, %4, %cst_94 {dimension_numbers = #tpu.dot_dimension_numbers<[1], [0], [0], [1], [0, 0, 1, 1], [], []>} : vector<8x256xf32>, vector<256x256xf32>, vector<8x256xf32> -> vector<8x256xf32>
    %270 = arith.addf %268, %269 : vector<8x256xf32>
    %cst_95 = arith.constant 5.000000e-01 : f32
    %271 = vector.broadcast %cst_95 : f32 to vector<8x256xf32>
    %272 = arith.mulf %271, %270 : vector<8x256xf32>
    %273 = math.tanh %272 : vector<8x256xf32>
    %cst_96 = arith.constant 5.000000e-01 : f32
    %274 = vector.broadcast %cst_96 : f32 to vector<8x256xf32>
    %275 = arith.mulf %274, %273 : vector<8x256xf32>
    %cst_97 = arith.constant 5.000000e-01 : f32
    %276 = vector.broadcast %cst_97 : f32 to vector<8x256xf32>
    %277 = arith.addf %275, %276 : vector<8x256xf32>
    %278 = vector.extract_strided_slice %267 {offsets = [0, 256], sizes = [8, 256], strides = [1, 1]} : vector<8x1024xf32> to vector<8x256xf32>
    %cst_98 = arith.constant dense<0.000000e+00> : vector<8x256xf32>
    %279 = tpu.matmul %265, %6, %cst_98 {dimension_numbers = #tpu.dot_dimension_numbers<[1], [0], [0], [1], [0, 0, 1, 1], [], []>} : vector<8x256xf32>, vector<256x256xf32>, vector<8x256xf32> -> vector<8x256xf32>
    %280 = arith.addf %278, %279 : vector<8x256xf32>
    %cst_99 = arith.constant 5.000000e-01 : f32
    %281 = vector.broadcast %cst_99 : f32 to vector<8x256xf32>
    %282 = arith.mulf %281, %280 : vector<8x256xf32>
    %283 = math.tanh %282 : vector<8x256xf32>
    %cst_100 = arith.constant 5.000000e-01 : f32
    %284 = vector.broadcast %cst_100 : f32 to vector<8x256xf32>
    %285 = arith.mulf %284, %283 : vector<8x256xf32>
    %cst_101 = arith.constant 5.000000e-01 : f32
    %286 = vector.broadcast %cst_101 : f32 to vector<8x256xf32>
    %287 = arith.addf %285, %286 : vector<8x256xf32>
    %288 = vector.extract_strided_slice %267 {offsets = [0, 512], sizes = [8, 256], strides = [1, 1]} : vector<8x1024xf32> to vector<8x256xf32>
    %cst_102 = arith.constant dense<0.000000e+00> : vector<8x256xf32>
    %289 = tpu.matmul %265, %8, %cst_102 {dimension_numbers = #tpu.dot_dimension_numbers<[1], [0], [0], [1], [0, 0, 1, 1], [], []>} : vector<8x256xf32>, vector<256x256xf32>, vector<8x256xf32> -> vector<8x256xf32>
    %290 = arith.addf %288, %289 : vector<8x256xf32>
    %291 = math.tanh %290 : vector<8x256xf32>
    %292 = vector.extract_strided_slice %267 {offsets = [0, 768], sizes = [8, 256], strides = [1, 1]} : vector<8x1024xf32> to vector<8x256xf32>
    %cst_103 = arith.constant dense<0.000000e+00> : vector<8x256xf32>
    %293 = tpu.matmul %265, %10, %cst_103 {dimension_numbers = #tpu.dot_dimension_numbers<[1], [0], [0], [1], [0, 0, 1, 1], [], []>} : vector<8x256xf32>, vector<256x256xf32>, vector<8x256xf32> -> vector<8x256xf32>
    %294 = arith.addf %292, %293 : vector<8x256xf32>
    %cst_104 = arith.constant 5.000000e-01 : f32
    %295 = vector.broadcast %cst_104 : f32 to vector<8x256xf32>
    %296 = arith.mulf %295, %294 : vector<8x256xf32>
    %297 = math.tanh %296 : vector<8x256xf32>
    %cst_105 = arith.constant 5.000000e-01 : f32
    %298 = vector.broadcast %cst_105 : f32 to vector<8x256xf32>
    %299 = arith.mulf %298, %297 : vector<8x256xf32>
    %cst_106 = arith.constant 5.000000e-01 : f32
    %300 = vector.broadcast %cst_106 : f32 to vector<8x256xf32>
    %301 = arith.addf %299, %300 : vector<8x256xf32>
    %302 = arith.mulf %287, %263 : vector<8x256xf32>
    %303 = arith.mulf %277, %291 : vector<8x256xf32>
    %304 = arith.addf %302, %303 : vector<8x256xf32>
    %305 = math.tanh %304 : vector<8x256xf32>
    %306 = arith.mulf %301, %305 : vector<8x256xf32>
    %307 = vector.extract_strided_slice %17 {offsets = [7, 0, 0], sizes = [1, 8, 1024], strides = [1, 1, 1]} : vector<8x8x1024xf32> to vector<1x8x1024xf32>
    %308 = vector.shape_cast %307 : vector<1x8x1024xf32> to vector<8x1024xf32>
    %309 = vector.extract_strided_slice %308 {offsets = [0, 0], sizes = [8, 256], strides = [1, 1]} : vector<8x1024xf32> to vector<8x256xf32>
    %cst_107 = arith.constant dense<0.000000e+00> : vector<8x256xf32>
    %310 = tpu.matmul %306, %4, %cst_107 {dimension_numbers = #tpu.dot_dimension_numbers<[1], [0], [0], [1], [0, 0, 1, 1], [], []>} : vector<8x256xf32>, vector<256x256xf32>, vector<8x256xf32> -> vector<8x256xf32>
    %311 = arith.addf %309, %310 : vector<8x256xf32>
    %cst_108 = arith.constant 5.000000e-01 : f32
    %312 = vector.broadcast %cst_108 : f32 to vector<8x256xf32>
    %313 = arith.mulf %312, %311 : vector<8x256xf32>
    %314 = math.tanh %313 : vector<8x256xf32>
    %cst_109 = arith.constant 5.000000e-01 : f32
    %315 = vector.broadcast %cst_109 : f32 to vector<8x256xf32>
    %316 = arith.mulf %315, %314 : vector<8x256xf32>
    %cst_110 = arith.constant 5.000000e-01 : f32
    %317 = vector.broadcast %cst_110 : f32 to vector<8x256xf32>
    %318 = arith.addf %316, %317 : vector<8x256xf32>
    %319 = vector.extract_strided_slice %308 {offsets = [0, 256], sizes = [8, 256], strides = [1, 1]} : vector<8x1024xf32> to vector<8x256xf32>
    %cst_111 = arith.constant dense<0.000000e+00> : vector<8x256xf32>
    %320 = tpu.matmul %306, %6, %cst_111 {dimension_numbers = #tpu.dot_dimension_numbers<[1], [0], [0], [1], [0, 0, 1, 1], [], []>} : vector<8x256xf32>, vector<256x256xf32>, vector<8x256xf32> -> vector<8x256xf32>
    %321 = arith.addf %319, %320 : vector<8x256xf32>
    %cst_112 = arith.constant 5.000000e-01 : f32
    %322 = vector.broadcast %cst_112 : f32 to vector<8x256xf32>
    %323 = arith.mulf %322, %321 : vector<8x256xf32>
    %324 = math.tanh %323 : vector<8x256xf32>
    %cst_113 = arith.constant 5.000000e-01 : f32
    %325 = vector.broadcast %cst_113 : f32 to vector<8x256xf32>
    %326 = arith.mulf %325, %324 : vector<8x256xf32>
    %cst_114 = arith.constant 5.000000e-01 : f32
    %327 = vector.broadcast %cst_114 : f32 to vector<8x256xf32>
    %328 = arith.addf %326, %327 : vector<8x256xf32>
    %329 = vector.extract_strided_slice %308 {offsets = [0, 512], sizes = [8, 256], strides = [1, 1]} : vector<8x1024xf32> to vector<8x256xf32>
    %cst_115 = arith.constant dense<0.000000e+00> : vector<8x256xf32>
    %330 = tpu.matmul %306, %8, %cst_115 {dimension_numbers = #tpu.dot_dimension_numbers<[1], [0], [0], [1], [0, 0, 1, 1], [], []>} : vector<8x256xf32>, vector<256x256xf32>, vector<8x256xf32> -> vector<8x256xf32>
    %331 = arith.addf %329, %330 : vector<8x256xf32>
    %332 = math.tanh %331 : vector<8x256xf32>
    %333 = vector.extract_strided_slice %308 {offsets = [0, 768], sizes = [8, 256], strides = [1, 1]} : vector<8x1024xf32> to vector<8x256xf32>
    %cst_116 = arith.constant dense<0.000000e+00> : vector<8x256xf32>
    %334 = tpu.matmul %306, %10, %cst_116 {dimension_numbers = #tpu.dot_dimension_numbers<[1], [0], [0], [1], [0, 0, 1, 1], [], []>} : vector<8x256xf32>, vector<256x256xf32>, vector<8x256xf32> -> vector<8x256xf32>
    %335 = arith.addf %333, %334 : vector<8x256xf32>
    %cst_117 = arith.constant 5.000000e-01 : f32
    %336 = vector.broadcast %cst_117 : f32 to vector<8x256xf32>
    %337 = arith.mulf %336, %335 : vector<8x256xf32>
    %338 = math.tanh %337 : vector<8x256xf32>
    %cst_118 = arith.constant 5.000000e-01 : f32
    %339 = vector.broadcast %cst_118 : f32 to vector<8x256xf32>
    %340 = arith.mulf %339, %338 : vector<8x256xf32>
    %cst_119 = arith.constant 5.000000e-01 : f32
    %341 = vector.broadcast %cst_119 : f32 to vector<8x256xf32>
    %342 = arith.addf %340, %341 : vector<8x256xf32>
    %343 = arith.mulf %328, %304 : vector<8x256xf32>
    %344 = arith.mulf %318, %332 : vector<8x256xf32>
    %345 = arith.addf %343, %344 : vector<8x256xf32>
    %346 = math.tanh %345 : vector<8x256xf32>
    %347 = arith.mulf %342, %346 : vector<8x256xf32>
    %348 = arith.truncf %347 : vector<8x256xf32> to vector<8x256xbf16>
    %c0_120 = arith.constant 0 : index
    %c0_121 = arith.constant 0 : index
    %349 = vector.load %arg4[%c0_120, %c0_121] : memref<256x128xbf16, #tpu.memory_space<vmem>>, vector<256x128xbf16>
    %cst_122 = arith.constant dense<0.000000e+00> : vector<8x128xf32>
    %350 = tpu.matmul %348, %349, %cst_122 {dimension_numbers = #tpu.dot_dimension_numbers<[1], [0], [0], [1], [0, 0, 1, 1], [], []>} : vector<8x256xbf16>, vector<256x128xbf16>, vector<8x128xf32> -> vector<8x128xf32>
    %c0_123 = arith.constant 0 : index
    %c0_124 = arith.constant 0 : index
    %351 = vector.load %arg5[%c0_123, %c0_124] : memref<1x128xf32, #tpu.memory_space<vmem>>, vector<1x128xf32>
    %352 = vector.broadcast %351 : vector<1x128xf32> to vector<8x128xf32>
    %353 = arith.addf %350, %352 : vector<8x128xf32>
    %c0_125 = arith.constant 0 : index
    %c0_126 = arith.constant 0 : index
    %354 = vector.load %arg6[%c0_125, %c0_126] : memref<8x128xf32, #tpu.memory_space<vmem>>, vector<8x128xf32>
    tpu.vector_store %arg6[%c0_125, %c0_126], %353 {strides = array<i32>} : memref<8x128xf32, #tpu.memory_space<vmem>>, vector<8x128xf32>,
    return
  }
}

</mosaic_0001>

<llo_original>
// kernel: char_model_forward.1
$region0: #{char_model_forward.1}
  #allocation0 [shape = 'u32[]', space=smem, size = 0x4, offset = 0x4, fixed_abs, tag = 'smem constant byte address 0x4 - core index']
  #allocation1 [shape = 'u32[144,128]{1,0:T(1,128)}', space=vmem, size = 0x12000, scoped, tag = 'internal scratch']
  %s0 = inlined_call_operand.vmem [shape: f32[8,8,1], index: 0, kind: input, shape index: {}]
  %s1 = inlined_call_operand.vmem [shape: f32[1,1024], index: 1, kind: input, shape index: {}]
  %s2 = inlined_call_operand.vmem [shape: f32[4,256,256], index: 2, kind: input, shape index: {}]
  %s3 = inlined_call_operand.vmem [shape: f32[1,1024], index: 3, kind: input, shape index: {}]
  %s4 = inlined_call_operand.vmem [shape: bf16[256,128], index: 4, kind: input, shape index: {}]
  %s5 = inlined_call_operand.vmem [shape: f32[1,128], index: 5, kind: input, shape index: {}]
  %s6 = inlined_call_operand.vmem [shape: f32[8,128], index: 6, kind: output, shape index: {}]
  %s7 = sld [smem:[#allocation0]]
  $region34: #{char_model_forward.1} parent=0
    _
  %s9 = ssub.s32 1, %s7
  %s10 = scalar_select 0, %s9, %s7
  // Predicated region
  $region2: #{char_model_forward.1} parent=0 // pred_check
    _
  $region3: #{char_model_forward.1} parent=0 // pred_check_branch
    %12 = sbr.rel (0) target = $region5
  $region4: #{char_model_forward.1} parent=0 // pred_region
    _
  $region5: #{char_model_forward.1} parent=0 // pred_fallthru
    _
  // Predicated region
  $region6: #{char_model_forward.1} parent=0 // pred_check
    _
  $region7: #{char_model_forward.1} parent=0 // pred_check_branch
    %14 = sbr.rel (0) target = $region9
  $region8: #{char_model_forward.1} parent=0 // pred_region
    _
  $region9: #{char_model_forward.1} parent=0 // pred_fallthru
    _
  // Predicated region
  $region10: #{char_model_forward.1} parent=0 // pred_check
    _
  $region11: #{char_model_forward.1} parent=0 // pred_check_branch
    %16 = sbr.rel (0) target = $region13
  $region12: #{char_model_forward.1} parent=0 // pred_region
    _
  $region13: #{char_model_forward.1} parent=0 // pred_fallthru
    _
  // Predicated region
  $region14: #{char_model_forward.1} parent=0 // pred_check
    _
  $region15: #{char_model_forward.1} parent=0 // pred_check_branch
    %18 = sbr.rel (0) target = $region17
  $region16: #{char_model_forward.1} parent=0 // pred_region
    _
  $region17: #{char_model_forward.1} parent=0 // pred_fallthru
    _
  // Predicated region
  $region18: #{char_model_forward.1} parent=0 // pred_check
    _
  $region19: #{char_model_forward.1} parent=0 // pred_check_branch
    %20 = sbr.rel (0) target = $region21
  $region20: #{char_model_forward.1} parent=0 // pred_region
    _
  $region21: #{char_model_forward.1} parent=0 // pred_fallthru
    _
  // Predicated region
  $region22: #{char_model_forward.1} parent=0 // pred_check
    _
  $region23: #{char_model_forward.1} parent=0 // pred_check_branch
    %22 = sbr.rel (0) target = $region25
  $region24: #{char_model_forward.1} parent=0 // pred_region
    _
  $region25: #{char_model_forward.1} parent=0 // pred_fallthru
    _
  %v24 = vld [vmem:[%s0] sm:$0xff]
  %v25 = vld [vmem:[%s0 + $0x8] sm:$0xff]
  %v26 = vld [vmem:[%s0 + $0x10] sm:$0xff]
  %v27 = vld [vmem:[%s0 + $0x18] sm:$0xff]
  %v28 = vld [vmem:[%s0 + $0x20] sm:$0xff]
  %v29 = vld [vmem:[%s0 + $0x28] sm:$0xff]
  %v30 = vld [vmem:[%s0 + $0x30] sm:$0xff]
  %v31 = vld [vmem:[%s0 + $0x38] sm:$0xff]
  %v32 = vld [vmem:[%s1] sm:$0xff]
  %v33 = vld [vmem:[%s3] sm:$0xff]
  %v34 = vld [vmem:[%s2] sm:$0xff]
  %v35 = vld [vmem:[%s2 + $0x8] sm:$0xff]
  %v36 = vld [vmem:[%s2 + $0x10] sm:$0xff]
  %v37 = vld [vmem:[%s2 + $0x18] sm:$0xff]
  %v38 = vld [vmem:[%s2 + $0x20] sm:$0xff]
  %v39 = vld [vmem:[%s2 + $0x28] sm:$0xff]
  %v40 = vld [vmem:[%s2 + $0x30] sm:$0xff]
  %v41 = vld [vmem:[%s2 + $0x38] sm:$0xff]
  %v42 = vld [vmem:[%s2 + $0x40] sm:$0xff]
  %v43 = vld [vmem:[%s2 + $0x48] sm:$0xff]
  %v44 = vld [vmem:[%s2 + $0x50] sm:$0xff]
  %v45 = vld [vmem:[%s2 + $0x58] sm:$0xff]
  %v46 = vld [vmem:[%s2 + $0x60] sm:$0xff]
  %v47 = vld [vmem:[%s2 + $0x68] sm:$0xff]
  %v48 = vld [vmem:[%s2 + $0x70] sm:$0xff]
  %v49 = vld [vmem:[%s2 + $0x78] sm:$0xff]
  %v50 = vld [vmem:[%s2 + $0x80] sm:$0xff]
  %v51 = vld [vmem:[%s2 + $0x88] sm:$0xff]
  %v52 = vld [vmem:[%s2 + $0x90] sm:$0xff]
  %v53 = vld [vmem:[%s2 + $0x98] sm:$0xff]
  %v54 = vld [vmem:[%s2 + $0xa0] sm:$0xff]
  %v55 = vld [vmem:[%s2 + $0xa8] sm:$0xff]
  %v56 = vld [vmem:[%s2 + $0xb0] sm:$0xff]
  %v57 = vld [vmem:[%s2 + $0xb8] sm:$0xff]
  %v58 = vld [vmem:[%s2 + $0xc0] sm:$0xff]
  %v59 = vld [vmem:[%s2 + $0xc8] sm:$0xff]
  %v60 = vld [vmem:[%s2 + $0xd0] sm:$0xff]
  %v61 = vld [vmem:[%s2 + $0xd8] sm:$0xff]
  %v62 = vld [vmem:[%s2 + $0xe0] sm:$0xff]
  %v63 = vld [vmem:[%s2 + $0xe8] sm:$0xff]
  %v64 = vld [vmem:[%s2 + $0xf0] sm:$0xff]
  %v65 = vld [vmem:[%s2 + $0xf8] sm:$0xff]
  %v66 = vld [vmem:[%s2 + $0x100] sm:$0xff]
  %v67 = vld [vmem:[%s2 + $0x108] sm:$0xff]
  %v68 = vld [vmem:[%s2 + $0x110] sm:$0xff]
  %v69 = vld [vmem:[%s2 + $0x118] sm:$0xff]
  %v70 = vld [vmem:[%s2 + $0x120] sm:$0xff]
  %v71 = vld [vmem:[%s2 + $0x128] sm:$0xff]
  %v72 = vld [vmem:[%s2 + $0x130] sm:$0xff]
  %v73 = vld [vmem:[%s2 + $0x138] sm:$0xff]
  %v74 = vld [vmem:[%s2 + $0x140] sm:$0xff]
  %v75 = vld [vmem:[%s2 + $0x148] sm:$0xff]
  %v76 = vld [vmem:[%s2 + $0x150] sm:$0xff]
  %v77 = vld [vmem:[%s2 + $0x158] sm:$0xff]
  %v78 = vld [vmem:[%s2 + $0x160] sm:$0xff]
  %v79 = vld [vmem:[%s2 + $0x168] sm:$0xff]
  %v80 = vld [vmem:[%s2 + $0x170] sm:$0xff]
  %v81 = vld [vmem:[%s2 + $0x178] sm:$0xff]
  %v82 = vld [vmem:[%s2 + $0x180] sm:$0xff]
  %v83 = vld [vmem:[%s2 + $0x188] sm:$0xff]
  %v84 = vld [vmem:[%s2 + $0x190] sm:$0xff]
  %v85 = vld [vmem:[%s2 + $0x198] sm:$0xff]
  %v86 = vld [vmem:[%s2 + $0x1a0] sm:$0xff]
  %v87 = vld [vmem:[%s2 + $0x1a8] sm:$0xff]
  %v88 = vld [vmem:[%s2 + $0x1b0] sm:$0xff]
  %v89 = vld [vmem:[%s2 + $0x1b8] sm:$0xff]
  %v90 = vld [vmem:[%s2 + $0x1c0] sm:$0xff]
  %v91 = vld [vmem:[%s2 + $0x1c8] sm:$0xff]
  %v92 = vld [vmem:[%s2 + $0x1d0] sm:$0xff]
  %v93 = vld [vmem:[%s2 + $0x1d8] sm:$0xff]
  %v94 = vld [vmem:[%s2 + $0x1e0] sm:$0xff]
  %v95 = vld [vmem:[%s2 + $0x1e8] sm:$0xff]
  %v96 = vld [vmem:[%s2 + $0x1f0] sm:$0xff]
  %v97 = vld [vmem:[%s2 + $0x1f8] sm:$0xff]
  %s98 = scalar_lea.vmem %s2, 512
  %v99 = vld [vmem:[%s98] sm:$0xff]
  %v100 = vld [vmem:[%s98 + $0x8] sm:$0xff]
  %v101 = vld [vmem:[%s98 + $0x10] sm:$0xff]
  %v102 = vld [vmem:[%s98 + $0x18] sm:$0xff]
  %v103 = vld [vmem:[%s98 + $0x20] sm:$0xff]
  %v104 = vld [vmem:[%s98 + $0x28] sm:$0xff]
  %v105 = vld [vmem:[%s98 + $0x30] sm:$0xff]
  %v106 = vld [vmem:[%s98 + $0x38] sm:$0xff]
  %v107 = vld [vmem:[%s98 + $0x40] sm:$0xff]
  %v108 = vld [vmem:[%s98 + $0x48] sm:$0xff]
  %v109 = vld [vmem:[%s98 + $0x50] sm:$0xff]
  %v110 = vld [vmem:[%s98 + $0x58] sm:$0xff]
  %v111 = vld [vmem:[%s98 + $0x60] sm:$0xff]
  %v112 = vld [vmem:[%s98 + $0x68] sm:$0xff]
  %v113 = vld [vmem:[%s98 + $0x70] sm:$0xff]
  %v114 = vld [vmem:[%s98 + $0x78] sm:$0xff]
  %v115 = vld [vmem:[%s98 + $0x80] sm:$0xff]
  %v116 = vld [vmem:[%s98 + $0x88] sm:$0xff]
  %v117 = vld [vmem:[%s98 + $0x90] sm:$0xff]
  %v118 = vld [vmem:[%s98 + $0x98] sm:$0xff]
  %v119 = vld [vmem:[%s98 + $0xa0] sm:$0xff]
  %v120 = vld [vmem:[%s98 + $0xa8] sm:$0xff]
  %v121 = vld [vmem:[%s98 + $0xb0] sm:$0xff]
  %v122 = vld [vmem:[%s98 + $0xb8] sm:$0xff]
  %v123 = vld [vmem:[%s98 + $0xc0] sm:$0xff]
  %v124 = vld [vmem:[%s98 + $0xc8] sm:$0xff]
  %v125 = vld [vmem:[%s98 + $0xd0] sm:$0xff]
  %v126 = vld [vmem:[%s98 + $0xd8] sm:$0xff]
  %v127 = vld [vmem:[%s98 + $0xe0] sm:$0xff]
  %v128 = vld [vmem:[%s98 + $0xe8] sm:$0xff]
  %v129 = vld [vmem:[%s98 + $0xf0] sm:$0xff]
  %v130 = vld [vmem:[%s98 + $0xf8] sm:$0xff]
  %v131 = vld [vmem:[%s98 + $0x100] sm:$0xff]
  %v132 = vld [vmem:[%s98 + $0x108] sm:$0xff]
  %v133 = vld [vmem:[%s98 + $0x110] sm:$0xff]
  %v134 = vld [vmem:[%s98 + $0x118] sm:$0xff]
  %v135 = vld [vmem:[%s98 + $0x120] sm:$0xff]
  %v136 = vld [vmem:[%s98 + $0x128] sm:$0xff]
  %v137 = vld [vmem:[%s98 + $0x130] sm:$0xff]
  %v138 = vld [vmem:[%s98 + $0x138] sm:$0xff]
  %v139 = vld [vmem:[%s98 + $0x140] sm:$0xff]
  %v140 = vld [vmem:[%s98 + $0x148] sm:$0xff]
  %v141 = vld [vmem:[%s98 + $0x150] sm:$0xff]
  %v142 = vld [vmem:[%s98 + $0x158] sm:$0xff]
  %v143 = vld [vmem:[%s98 + $0x160] sm:$0xff]
  %v144 = vld [vmem:[%s98 + $0x168] sm:$0xff]
  %v145 = vld [vmem:[%s98 + $0x170] sm:$0xff]
  %v146 = vld [vmem:[%s98 + $0x178] sm:$0xff]
  %v147 = vld [vmem:[%s98 + $0x180] sm:$0xff]
  %v148 = vld [vmem:[%s98 + $0x188] sm:$0xff]
  %v149 = vld [vmem:[%s98 + $0x190] sm:$0xff]
  %v150 = vld [vmem:[%s98 + $0x198] sm:$0xff]
  %v151 = vld [vmem:[%s98 + $0x1a0] sm:$0xff]
  %v152 = vld [vmem:[%s98 + $0x1a8] sm:$0xff]
  %v153 = vld [vmem:[%s98 + $0x1b0] sm:$0xff]
  %v154 = vld [vmem:[%s98 + $0x1b8] sm:$0xff]
  %v155 = vld [vmem:[%s98 + $0x1c0] sm:$0xff]
  %v156 = vld [vmem:[%s98 + $0x1c8] sm:$0xff]
  %v157 = vld [vmem:[%s98 + $0x1d0] sm:$0xff]
  %v158 = vld [vmem:[%s98 + $0x1d8] sm:$0xff]
  %v159 = vld [vmem:[%s98 + $0x1e0] sm:$0xff]
  %v160 = vld [vmem:[%s98 + $0x1e8] sm:$0xff]
  %v161 = vld [vmem:[%s98 + $0x1f0] sm:$0xff]
  %v162 = vld [vmem:[%s98 + $0x1f8] sm:$0xff]
  %s163 = scalar_lea.vmem %s2, 1024
  %v164 = vld [vmem:[%s163] sm:$0xff]
  %v165 = vld [vmem:[%s163 + $0x8] sm:$0xff]
  %v166 = vld [vmem:[%s163 + $0x10] sm:$0xff]
  %v167 = vld [vmem:[%s163 + $0x18] sm:$0xff]
  %v168 = vld [vmem:[%s163 + $0x20] sm:$0xff]
  %v169 = vld [vmem:[%s163 + $0x28] sm:$0xff]
  %v170 = vld [vmem:[%s163 + $0x30] sm:$0xff]
  %v171 = vld [vmem:[%s163 + $0x38] sm:$0xff]
  %v172 = vld [vmem:[%s163 + $0x40] sm:$0xff]
  %v173 = vld [vmem:[%s163 + $0x48] sm:$0xff]
  %v174 = vld [vmem:[%s163 + $0x50] sm:$0xff]
  %v175 = vld [vmem:[%s163 + $0x58] sm:$0xff]
  %v176 = vld [vmem:[%s163 + $0x60] sm:$0xff]
  %v177 = vld [vmem:[%s163 + $0x68] sm:$0xff]
  %v178 = vld [vmem:[%s163 + $0x70] sm:$0xff]
  %v179 = vld [vmem:[%s163 + $0x78] sm:$0xff]
  %v180 = vld [vmem:[%s163 + $0x80] sm:$0xff]
  %v181 = vld [vmem:[%s163 + $0x88] sm:$0xff]
  %v182 = vld [vmem:[%s163 + $0x90] sm:$0xff]
  %v183 = vld [vmem:[%s163 + $0x98] sm:$0xff]
  %v184 = vld [vmem:[%s163 + $0xa0] sm:$0xff]
  %v185 = vld [vmem:[%s163 + $0xa8] sm:$0xff]
  %v186 = vld [vmem:[%s163 + $0xb0] sm:$0xff]
  %v187 = vld [vmem:[%s163 + $0xb8] sm:$0xff]
  %v188 = vld [vmem:[%s163 + $0xc0] sm:$0xff]
  %v189 = vld [vmem:[%s163 + $0xc8] sm:$0xff]
  %v190 = vld [vmem:[%s163 + $0xd0] sm:$0xff]
  %v191 = vld [vmem:[%s163 + $0xd8] sm:$0xff]
  %v192 = vld [vmem:[%s163 + $0xe0] sm:$0xff]
  %v193 = vld [vmem:[%s163 + $0xe8] sm:$0xff]
  %v194 = vld [vmem:[%s163 + $0xf0] sm:$0xff]
  %v195 = vld [vmem:[%s163 + $0xf8] sm:$0xff]
  %v196 = vld [vmem:[%s163 + $0x100] sm:$0xff]
  %v197 = vld [vmem:[%s163 + $0x108] sm:$0xff]
  %v198 = vld [vmem:[%s163 + $0x110] sm:$0xff]
  %v199 = vld [vmem:[%s163 + $0x118] sm:$0xff]
  %v200 = vld [vmem:[%s163 + $0x120] sm:$0xff]
  %v201 = vld [vmem:[%s163 + $0x128] sm:$0xff]
  %v202 = vld [vmem:[%s163 + $0x130] sm:$0xff]
  %v203 = vld [vmem:[%s163 + $0x138] sm:$0xff]
  %v204 = vld [vmem:[%s163 + $0x140] sm:$0xff]
  %v205 = vld [vmem:[%s163 + $0x148] sm:$0xff]
  %v206 = vld [vmem:[%s163 + $0x150] sm:$0xff]
  %v207 = vld [vmem:[%s163 + $0x158] sm:$0xff]
  %v208 = vld [vmem:[%s163 + $0x160] sm:$0xff]
  %v209 = vld [vmem:[%s163 + $0x168] sm:$0xff]
  %v210 = vld [vmem:[%s163 + $0x170] sm:$0xff]
  %v211 = vld [vmem:[%s163 + $0x178] sm:$0xff]
  %v212 = vld [vmem:[%s163 + $0x180] sm:$0xff]
  %v213 = vld [vmem:[%s163 + $0x188] sm:$0xff]
  %v214 = vld [vmem:[%s163 + $0x190] sm:$0xff]
  %v215 = vld [vmem:[%s163 + $0x198] sm:$0xff]
  %v216 = vld [vmem:[%s163 + $0x1a0] sm:$0xff]
  %v217 = vld [vmem:[%s163 + $0x1a8] sm:$0xff]
  %v218 = vld [vmem:[%s163 + $0x1b0] sm:$0xff]
  %v219 = vld [vmem:[%s163 + $0x1b8] sm:$0xff]
  %v220 = vld [vmem:[%s163 + $0x1c0] sm:$0xff]
  %v221 = vld [vmem:[%s163 + $0x1c8] sm:$0xff]
  %v222 = vld [vmem:[%s163 + $0x1d0] sm:$0xff]
  %v223 = vld [vmem:[%s163 + $0x1d8] sm:$0xff]
  %v224 = vld [vmem:[%s163 + $0x1e0] sm:$0xff]
  %v225 = vld [vmem:[%s163 + $0x1e8] sm:$0xff]
  %v226 = vld [vmem:[%s163 + $0x1f0] sm:$0xff]
  %v227 = vld [vmem:[%s163 + $0x1f8] sm:$0xff]
  %s228 = scalar_lea.vmem %s2, 1536
  %v229 = vld [vmem:[%s228] sm:$0xff]
  %v230 = vld [vmem:[%s228 + $0x8] sm:$0xff]
  %v231 = vld [vmem:[%s228 + $0x10] sm:$0xff]
  %v232 = vld [vmem:[%s228 + $0x18] sm:$0xff]
  %v233 = vld [vmem:[%s228 + $0x20] sm:$0xff]
  %v234 = vld [vmem:[%s228 + $0x28] sm:$0xff]
  %v235 = vld [vmem:[%s228 + $0x30] sm:$0xff]
  %v236 = vld [vmem:[%s228 + $0x38] sm:$0xff]
  %v237 = vld [vmem:[%s228 + $0x40] sm:$0xff]
  %v238 = vld [vmem:[%s228 + $0x48] sm:$0xff]
  %v239 = vld [vmem:[%s228 + $0x50] sm:$0xff]
  %v240 = vld [vmem:[%s228 + $0x58] sm:$0xff]
  %v241 = vld [vmem:[%s228 + $0x60] sm:$0xff]
  %v242 = vld [vmem:[%s228 + $0x68] sm:$0xff]
  %v243 = vld [vmem:[%s228 + $0x70] sm:$0xff]
  %v244 = vld [vmem:[%s228 + $0x78] sm:$0xff]
  %v245 = vld [vmem:[%s228 + $0x80] sm:$0xff]
  %v246 = vld [vmem:[%s228 + $0x88] sm:$0xff]
  %v247 = vld [vmem:[%s228 + $0x90] sm:$0xff]
  %v248 = vld [vmem:[%s228 + $0x98] sm:$0xff]
  %v249 = vld [vmem:[%s228 + $0xa0] sm:$0xff]
  %v250 = vld [vmem:[%s228 + $0xa8] sm:$0xff]
  %v251 = vld [vmem:[%s228 + $0xb0] sm:$0xff]
  %v252 = vld [vmem:[%s228 + $0xb8] sm:$0xff]
  %v253 = vld [vmem:[%s228 + $0xc0] sm:$0xff]
  %v254 = vld [vmem:[%s228 + $0xc8] sm:$0xff]
  %v255 = vld [vmem:[%s228 + $0xd0] sm:$0xff]
  %v256 = vld [vmem:[%s228 + $0xd8] sm:$0xff]
  %v257 = vld [vmem:[%s228 + $0xe0] sm:$0xff]
  %v258 = vld [vmem:[%s228 + $0xe8] sm:$0xff]
  %v259 = vld [vmem:[%s228 + $0xf0] sm:$0xff]
  %v260 = vld [vmem:[%s228 + $0xf8] sm:$0xff]
  %v261 = vld [vmem:[%s228 + $0x100] sm:$0xff]
  %v262 = vld [vmem:[%s228 + $0x108] sm:$0xff]
  %v263 = vld [vmem:[%s228 + $0x110] sm:$0xff]
  %v264 = vld [vmem:[%s228 + $0x118] sm:$0xff]
  %v265 = vld [vmem:[%s228 + $0x120] sm:$0xff]
  %v266 = vld [vmem:[%s228 + $0x128] sm:$0xff]
  %v267 = vld [vmem:[%s228 + $0x130] sm:$0xff]
  %v268 = vld [vmem:[%s228 + $0x138] sm:$0xff]
  %v269 = vld [vmem:[%s228 + $0x140] sm:$0xff]
  %v270 = vld [vmem:[%s228 + $0x148] sm:$0xff]
  %v271 = vld [vmem:[%s228 + $0x150] sm:$0xff]
  %v272 = vld [vmem:[%s228 + $0x158] sm:$0xff]
  %v273 = vld [vmem:[%s228 + $0x160] sm:$0xff]
  %v274 = vld [vmem:[%s228 + $0x168] sm:$0xff]
  %v275 = vld [vmem:[%s228 + $0x170] sm:$0xff]
  %v276 = vld [vmem:[%s228 + $0x178] sm:$0xff]
  %v277 = vld [vmem:[%s228 + $0x180] sm:$0xff]
  %v278 = vld [vmem:[%s228 + $0x188] sm:$0xff]
  %v279 = vld [vmem:[%s228 + $0x190] sm:$0xff]
  %v280 = vld [vmem:[%s228 + $0x198] sm:$0xff]
  %v281 = vld [vmem:[%s228 + $0x1a0] sm:$0xff]
  %v282 = vld [vmem:[%s228 + $0x1a8] sm:$0xff]
  %v283 = vld [vmem:[%s228 + $0x1b0] sm:$0xff]
  %v284 = vld [vmem:[%s228 + $0x1b8] sm:$0xff]
  %v285 = vld [vmem:[%s228 + $0x1c0] sm:$0xff]
  %v286 = vld [vmem:[%s228 + $0x1c8] sm:$0xff]
  %v287 = vld [vmem:[%s228 + $0x1d0] sm:$0xff]
  %v288 = vld [vmem:[%s228 + $0x1d8] sm:$0xff]
  %v289 = vld [vmem:[%s228 + $0x1e0] sm:$0xff]
  %v290 = vld [vmem:[%s228 + $0x1e8] sm:$0xff]
  %v291 = vld [vmem:[%s228 + $0x1f0] sm:$0xff]
  %v292 = vld [vmem:[%s228 + $0x1f8] sm:$0xff]
  %294 = vset.pattern.permute.xlu0 0
  %295 = vperm.xlu0 %294, %v24
  %v296 = vpop.permute.xlu0 %295
  %299 = vset.pattern.permute.xlu0 0
  %300 = vperm.xlu0 %299, %v25
  %v301 = vpop.permute.xlu0 %300
  %304 = vset.pattern.permute.xlu0 0
  %305 = vperm.xlu0 %304, %v26
  %v306 = vpop.permute.xlu0 %305
  %309 = vset.pattern.permute.xlu0 0
  %310 = vperm.xlu0 %309, %v27
  %v311 = vpop.permute.xlu0 %310
  %314 = vset.pattern.permute.xlu0 0
  %315 = vperm.xlu0 %314, %v28
  %v316 = vpop.permute.xlu0 %315
  %319 = vset.pattern.permute.xlu0 0
  %320 = vperm.xlu0 %319, %v29
  %v321 = vpop.permute.xlu0 %320
  %324 = vset.pattern.permute.xlu0 0
  %325 = vperm.xlu0 %324, %v30
  %v326 = vpop.permute.xlu0 %325
  %329 = vset.pattern.permute.xlu0 0
  %330 = vperm.xlu0 %329, %v31
  %v331 = vpop.permute.xlu0 %330
  %v334 = vlaneseq
  %v335 = vshrl.u32 %v334, 7
  %v336 = vsub.s32 0, %v335
  %v337 = vrot.slane %v32, %v336
  %v338 = vlaneseq
  %v339 = vshrl.u32 %v338, 7
  %v340 = vsub.s32 1, %v339
  %v341 = vrot.slane %v32, %v340
  %v342 = vlaneseq
  %v343 = vshrl.u32 %v342, 7
  %v344 = vsub.s32 2, %v343
  %v345 = vrot.slane %v32, %v344
  %v346 = vlaneseq
  %v347 = vshrl.u32 %v346, 7
  %v348 = vsub.s32 3, %v347
  %v349 = vrot.slane %v32, %v348
  %v350 = vlaneseq
  %v351 = vshrl.u32 %v350, 7
  %v352 = vsub.s32 4, %v351
  %v353 = vrot.slane %v32, %v352
  %v354 = vlaneseq
  %v355 = vshrl.u32 %v354, 7
  %v356 = vsub.s32 5, %v355
  %v357 = vrot.slane %v32, %v356
  %v358 = vlaneseq
  %v359 = vshrl.u32 %v358, 7
  %v360 = vsub.s32 6, %v359
  %v361 = vrot.slane %v32, %v360
  %v362 = vlaneseq
  %v363 = vshrl.u32 %v362, 7
  %v364 = vsub.s32 7, %v363
  %v365 = vrot.slane %v32, %v364
  %v374 = vmul.f32 %v296, %v337
  %v375 = vmul.f32 %v296, %v341
  %v376 = vmul.f32 %v296, %v345
  %v377 = vmul.f32 %v296, %v349
  %v378 = vmul.f32 %v296, %v353
  %v379 = vmul.f32 %v296, %v357
  %v380 = vmul.f32 %v296, %v361
  %v381 = vmul.f32 %v296, %v365
  %v382 = vmul.f32 %v301, %v337
  %v383 = vmul.f32 %v301, %v341
  %v384 = vmul.f32 %v301, %v345
  %v385 = vmul.f32 %v301, %v349
  %v386 = vmul.f32 %v301, %v353
  %v387 = vmul.f32 %v301, %v357
  %v388 = vmul.f32 %v301, %v361
  %v389 = vmul.f32 %v301, %v365
  %v390 = vmul.f32 %v306, %v337
  %v391 = vmul.f32 %v306, %v341
  %v392 = vmul.f32 %v306, %v345
  %v393 = vmul.f32 %v306, %v349
  %v394 = vmul.f32 %v306, %v353
  %v395 = vmul.f32 %v306, %v357
  %v396 = vmul.f32 %v306, %v361
  %v397 = vmul.f32 %v306, %v365
  %v398 = vmul.f32 %v311, %v337
  %v399 = vmul.f32 %v311, %v341
  %v400 = vmul.f32 %v311, %v345
  %v401 = vmul.f32 %v311, %v349
  %v402 = vmul.f32 %v311, %v353
  %v403 = vmul.f32 %v311, %v357
  %v404 = vmul.f32 %v311, %v361
  %v405 = vmul.f32 %v311, %v365
  %v406 = vmul.f32 %v316, %v337
  %v407 = vmul.f32 %v316, %v341
  %v408 = vmul.f32 %v316, %v345
  %v409 = vmul.f32 %v316, %v349
  %v410 = vmul.f32 %v316, %v353
  %v411 = vmul.f32 %v316, %v357
  %v412 = vmul.f32 %v316, %v361
  %v413 = vmul.f32 %v316, %v365
  %v414 = vmul.f32 %v321, %v337
  %v415 = vmul.f32 %v321, %v341
  %v416 = vmul.f32 %v321, %v345
  %v417 = vmul.f32 %v321, %v349
  %v418 = vmul.f32 %v321, %v353
  %v419 = vmul.f32 %v321, %v357
  %v420 = vmul.f32 %v321, %v361
  %v421 = vmul.f32 %v321, %v365
  %v422 = vmul.f32 %v326, %v337
  %v423 = vmul.f32 %v326, %v341
  %v424 = vmul.f32 %v326, %v345
  %v425 = vmul.f32 %v326, %v349
  %v426 = vmul.f32 %v326, %v353
  %v427 = vmul.f32 %v326, %v357
  %v428 = vmul.f32 %v326, %v361
  %v429 = vmul.f32 %v326, %v365
  %v430 = vmul.f32 %v331, %v337
  %v431 = vmul.f32 %v331, %v341
  %v432 = vmul.f32 %v331, %v345
  %v433 = vmul.f32 %v331, %v349
  %v434 = vmul.f32 %v331, %v353
  %v435 = vmul.f32 %v331, %v357
  %v436 = vmul.f32 %v331, %v361
  %v437 = vmul.f32 %v331, %v365
  %v439 = vlaneseq
  %v440 = vshrl.u32 %v439, 7
  %v441 = vsub.s32 0, %v440
  %v442 = vrot.slane %v33, %v441
  %v443 = vlaneseq
  %v444 = vshrl.u32 %v443, 7
  %v445 = vsub.s32 1, %v444
  %v446 = vrot.slane %v33, %v445
  %v447 = vlaneseq
  %v448 = vshrl.u32 %v447, 7
  %v449 = vsub.s32 2, %v448
  %v450 = vrot.slane %v33, %v449
  %v451 = vlaneseq
  %v452 = vshrl.u32 %v451, 7
  %v453 = vsub.s32 3, %v452
  %v454 = vrot.slane %v33, %v453
  %v455 = vlaneseq
  %v456 = vshrl.u32 %v455, 7
  %v457 = vsub.s32 4, %v456
  %v458 = vrot.slane %v33, %v457
  %v459 = vlaneseq
  %v460 = vshrl.u32 %v459, 7
  %v461 = vsub.s32 5, %v460
  %v462 = vrot.slane %v33, %v461
  %v463 = vlaneseq
  %v464 = vshrl.u32 %v463, 7
  %v465 = vsub.s32 6, %v464
  %v466 = vrot.slane %v33, %v465
  %v467 = vlaneseq
  %v468 = vshrl.u32 %v467, 7
  %v469 = vsub.s32 7, %v468
  %v470 = vrot.slane %v33, %v469
  %v479 = vadd.f32 %v374, %v442
  %v480 = vadd.f32 %v375, %v446
  %v481 = vadd.f32 %v376, %v450
  %v482 = vadd.f32 %v377, %v454
  %v483 = vadd.f32 %v378, %v458
  %v484 = vadd.f32 %v379, %v462
  %v485 = vadd.f32 %v380, %v466
  %v486 = vadd.f32 %v381, %v470
  %v487 = vadd.f32 %v382, %v442
  %v488 = vadd.f32 %v383, %v446
  %v489 = vadd.f32 %v384, %v450
  %v490 = vadd.f32 %v385, %v454
  %v491 = vadd.f32 %v386, %v458
  %v492 = vadd.f32 %v387, %v462
  %v493 = vadd.f32 %v388, %v466
  %v494 = vadd.f32 %v389, %v470
  %v495 = vadd.f32 %v390, %v442
  %v496 = vadd.f32 %v391, %v446
  %v497 = vadd.f32 %v392, %v450
  %v498 = vadd.f32 %v393, %v454
  %v499 = vadd.f32 %v394, %v458
  %v500 = vadd.f32 %v395, %v462
  %v501 = vadd.f32 %v396, %v466
  %v502 = vadd.f32 %v397, %v470
  %v503 = vadd.f32 %v398, %v442
  %v504 = vadd.f32 %v399, %v446
  %v505 = vadd.f32 %v400, %v450
  %v506 = vadd.f32 %v401, %v454
  %v507 = vadd.f32 %v402, %v458
  %v508 = vadd.f32 %v403, %v462
  %v509 = vadd.f32 %v404, %v466
  %v510 = vadd.f32 %v405, %v470
  %v511 = vadd.f32 %v406, %v442
  %v512 = vadd.f32 %v407, %v446
  %v513 = vadd.f32 %v408, %v450
  %v514 = vadd.f32 %v409, %v454
  %v515 = vadd.f32 %v410, %v458
  %v516 = vadd.f32 %v411, %v462
  %v517 = vadd.f32 %v412, %v466
  %v518 = vadd.f32 %v413, %v470
  %v519 = vadd.f32 %v414, %v442
  %v520 = vadd.f32 %v415, %v446
  %v521 = vadd.f32 %v416, %v450
  %v522 = vadd.f32 %v417, %v454
  %v523 = vadd.f32 %v418, %v458
  %v524 = vadd.f32 %v419, %v462
  %v525 = vadd.f32 %v420, %v466
  %v526 = vadd.f32 %v421, %v470
  %v527 = vadd.f32 %v422, %v442
  %v528 = vadd.f32 %v423, %v446
  %v529 = vadd.f32 %v424, %v450
  %v530 = vadd.f32 %v425, %v454
  %v531 = vadd.f32 %v426, %v458
  %v532 = vadd.f32 %v427, %v462
  %v533 = vadd.f32 %v428, %v466
  %v534 = vadd.f32 %v429, %v470
  %v535 = vadd.f32 %v430, %v442
  %v536 = vadd.f32 %v431, %v446
  %v537 = vadd.f32 %v432, %v450
  %v538 = vadd.f32 %v433, %v454
  %v539 = vadd.f32 %v434, %v458
  %v540 = vadd.f32 %v435, %v462
  %v541 = vadd.f32 %v436, %v466
  %v542 = vadd.f32 %v437, %v470
  %543 = vmatprep.subr.mxu0 %v65
  %544 = vmatpush1.msra.mxu0 %v64
  %545 = vmatprep.subr.mxu0 %v63
  %546 = vmatpush1.msra.mxu0 %v62
  %547 = vmatprep.subr.mxu0 %v61
  %548 = vmatpush1.msra.mxu0 %v60
  %549 = vmatprep.subr.mxu0 %v59
  %550 = vmatpush1.msra.mxu0 %v58
  %551 = vmatprep.subr.mxu0 %v57
  %552 = vmatpush1.msra.mxu0 %v56
  %553 = vmatprep.subr.mxu0 %v55
  %554 = vmatpush1.msra.mxu0 %v54
  %555 = vmatprep.subr.mxu0 %v53
  %556 = vmatpush1.msra.mxu0 %v52
  %557 = vmatprep.subr.mxu0 %v51
  %558 = vmatpush1.msra.mxu0 %v50
  %559 = vmatprep.subr.mxu0 %v49
  %560 = vmatpush1.msra.mxu0 %v48
  %561 = vmatprep.subr.mxu0 %v47
  %562 = vmatpush1.msra.mxu0 %v46
  %563 = vmatprep.subr.mxu0 %v45
  %564 = vmatpush1.msra.mxu0 %v44
  %565 = vmatprep.subr.mxu0 %v43
  %566 = vmatpush1.msra.mxu0 %v42
  %567 = vmatprep.subr.mxu0 %v41
  %568 = vmatpush1.msra.mxu0 %v40
  %569 = vmatprep.subr.mxu0 %v39
  %570 = vmatpush1.msra.mxu0 %v38
  %571 = vmatprep.subr.mxu0 %v37
  %572 = vmatpush1.msra.mxu0 %v36
  %573 = vmatprep.subr.mxu0 %v35
  %574 = vmatpush1.msra.mxu0 %v34
  %575 = vmatprep.subr.mxu0 %v97
  %576 = vmatpush2.msra.mxu0 %v96
  %577 = vmatprep.subr.mxu0 %v95
  %578 = vmatpush2.msra.mxu0 %v94
  %579 = vmatprep.subr.mxu0 %v93
  %580 = vmatpush2.msra.mxu0 %v92
  %581 = vmatprep.subr.mxu0 %v91
  %582 = vmatpush2.msra.mxu0 %v90
  %583 = vmatprep.subr.mxu0 %v89
  %584 = vmatpush2.msra.mxu0 %v88
  %585 = vmatprep.subr.mxu0 %v87
  %586 = vmatpush2.msra.mxu0 %v86
  %587 = vmatprep.subr.mxu0 %v85
  %588 = vmatpush2.msra.mxu0 %v84
  %589 = vmatprep.subr.mxu0 %v83
  %590 = vmatpush2.msra.mxu0 %v82
  %591 = vmatprep.subr.mxu0 %v81
  %592 = vmatpush2.msra.mxu0 %v80
  %593 = vmatprep.subr.mxu0 %v79
  %594 = vmatpush2.msra.mxu0 %v78
  %595 = vmatprep.subr.mxu0 %v77
  %596 = vmatpush2.msra.mxu0 %v76
  %597 = vmatprep.subr.mxu0 %v75
  %598 = vmatpush2.msra.mxu0 %v74
  %599 = vmatprep.subr.mxu0 %v73
  %600 = vmatpush2.msra.mxu0 %v72
  %601 = vmatprep.subr.mxu0 %v71
  %602 = vmatpush2.msra.mxu0 %v70
  %603 = vmatprep.subr.mxu0 %v69
  %604 = vmatpush2.msra.mxu0 %v68
  %605 = vmatprep.subr.mxu0 %v67
  %606 = vmatpush2.msra.mxu0 %v66
  %607 = vmatprep.mubr.f32.mxu0 0.0
  %608 = vmatmul.mubr.f32.gmra.mxu0 0.0
  %v609 = vpop.f32.mrf.mxu0
  %v610 = vadd.f32 0.0, %v609
  %v611 = vpop.f32.mrf.mxu0
  %v612 = vadd.f32 0.0, %v611
  %613 = vdwg.mxu0
  %v614 = vadd.f32 %v479, %v610
  %v615 = vadd.f32 %v480, %v612
  %v616 = vmul.f32 %v614, 0.5
  %v617 = vmul.f32 %v615, 0.5
  %v618 = vtanh.pop %v616
  %v619 = vtanh.pop %v617
  %v620 = vmul.f32 %v618, 0.5
  %v621 = vmul.f32 %v619, 0.5
  %v622 = vadd.f32 %v620, 0.5
  %v623 = vadd.f32 %v621, 0.5
  %624 = vmatprep.subr.mxu0 %v130
  %625 = vmatpush1.msra.mxu0 %v129
  %626 = vmatprep.subr.mxu0 %v128
  %627 = vmatpush1.msra.mxu0 %v127
  %628 = vmatprep.subr.mxu0 %v126
  %629 = vmatpush1.msra.mxu0 %v125
  %630 = vmatprep.subr.mxu0 %v124
  %631 = vmatpush1.msra.mxu0 %v123
  %632 = vmatprep.subr.mxu0 %v122
  %633 = vmatpush1.msra.mxu0 %v121
  %634 = vmatprep.subr.mxu0 %v120
  %635 = vmatpush1.msra.mxu0 %v119
  %636 = vmatprep.subr.mxu0 %v118
  %637 = vmatpush1.msra.mxu0 %v117
  %638 = vmatprep.subr.mxu0 %v116
  %639 = vmatpush1.msra.mxu0 %v115
  %640 = vmatprep.subr.mxu0 %v114
  %641 = vmatpush1.msra.mxu0 %v113
  %642 = vmatprep.subr.mxu0 %v112
  %643 = vmatpush1.msra.mxu0 %v111
  %644 = vmatprep.subr.mxu0 %v110
  %645 = vmatpush1.msra.mxu0 %v109
  %646 = vmatprep.subr.mxu0 %v108
  %647 = vmatpush1.msra.mxu0 %v107
  %648 = vmatprep.subr.mxu0 %v106
  %649 = vmatpush1.msra.mxu0 %v105
  %650 = vmatprep.subr.mxu0 %v104
  %651 = vmatpush1.msra.mxu0 %v103
  %652 = vmatprep.subr.mxu0 %v102
  %653 = vmatpush1.msra.mxu0 %v101
  %654 = vmatprep.subr.mxu0 %v100
  %655 = vmatpush1.msra.mxu0 %v99
  %656 = vmatprep.subr.mxu0 %v162
  %657 = vmatpush2.msra.mxu0 %v161
  %658 = vmatprep.subr.mxu0 %v160
  %659 = vmatpush2.msra.mxu0 %v159
  %660 = vmatprep.subr.mxu0 %v158
  %661 = vmatpush2.msra.mxu0 %v157
  %662 = vmatprep.subr.mxu0 %v156
  %663 = vmatpush2.msra.mxu0 %v155
  %664 = vmatprep.subr.mxu0 %v154
  %665 = vmatpush2.msra.mxu0 %v153
  %666 = vmatprep.subr.mxu0 %v152
  %667 = vmatpush2.msra.mxu0 %v151
  %668 = vmatprep.subr.mxu0 %v150
  %669 = vmatpush2.msra.mxu0 %v149
  %670 = vmatprep.subr.mxu0 %v148
  %671 = vmatpush2.msra.mxu0 %v147
  %672 = vmatprep.subr.mxu0 %v146
  %673 = vmatpush2.msra.mxu0 %v145
  %674 = vmatprep.subr.mxu0 %v144
  %675 = vmatpush2.msra.mxu0 %v143
  %676 = vmatprep.subr.mxu0 %v142
  %677 = vmatpush2.msra.mxu0 %v141
  %678 = vmatprep.subr.mxu0 %v140
  %679 = vmatpush2.msra.mxu0 %v139
  %680 = vmatprep.subr.mxu0 %v138
  %681 = vmatpush2.msra.mxu0 %v137
  %682 = vmatprep.subr.mxu0 %v136
  %683 = vmatpush2.msra.mxu0 %v135
  %684 = vmatprep.subr.mxu0 %v134
  %685 = vmatpush2.msra.mxu0 %v133
  %686 = vmatprep.subr.mxu0 %v132
  %687 = vmatpush2.msra.mxu0 %v131
  %688 = vmatprep.mubr.f32.mxu0 0.0
  %689 = vmatmul.mubr.f32.gmra.mxu0 0.0
  %v690 = vpop.f32.mrf.mxu0
  %v691 = vadd.f32 0.0, %v690
  %v692 = vpop.f32.mrf.mxu0
  %v693 = vadd.f32 0.0, %v692
  %694 = vdwg.mxu0
  %v695 = vadd.f32 %v481, %v691
  %v696 = vadd.f32 %v482, %v693
  %v697 = vmul.f32 %v695, 0.5
  %v698 = vmul.f32 %v696, 0.5
  %v699 = vtanh.pop %v697
  %v700 = vtanh.pop %v698
  %v701 = vmul.f32 %v699, 0.5
  %v702 = vmul.f32 %v700, 0.5
  %v703 = vadd.f32 %v701, 0.5
  %v704 = vadd.f32 %v702, 0.5
  %705 = vmatprep.subr.mxu0 %v195
  %706 = vmatpush1.msra.mxu0 %v194
  %707 = vmatprep.subr.mxu0 %v193
  %708 = vmatpush1.msra.mxu0 %v192
  %709 = vmatprep.subr.mxu0 %v191
  %710 = vmatpush1.msra.mxu0 %v190
  %711 = vmatprep.subr.mxu0 %v189
  %712 = vmatpush1.msra.mxu0 %v188
  %713 = vmatprep.subr.mxu0 %v187
  %714 = vmatpush1.msra.mxu0 %v186
  %715 = vmatprep.subr.mxu0 %v185
  %716 = vmatpush1.msra.mxu0 %v184
  %717 = vmatprep.subr.mxu0 %v183
  %718 = vmatpush1.msra.mxu0 %v182
  %719 = vmatprep.subr.mxu0 %v181
  %720 = vmatpush1.msra.mxu0 %v180
  %721 = vmatprep.subr.mxu0 %v179
  %722 = vmatpush1.msra.mxu0 %v178
  %723 = vmatprep.subr.mxu0 %v177
  %724 = vmatpush1.msra.mxu0 %v176
  %725 = vmatprep.subr.mxu0 %v175
  %726 = vmatpush1.msra.mxu0 %v174
  %727 = vmatprep.subr.mxu0 %v173
  %728 = vmatpush1.msra.mxu0 %v172
  %729 = vmatprep.subr.mxu0 %v171
  %730 = vmatpush1.msra.mxu0 %v170
  %731 = vmatprep.subr.mxu0 %v169
  %732 = vmatpush1.msra.mxu0 %v168
  %733 = vmatprep.subr.mxu0 %v167
  %734 = vmatpush1.msra.mxu0 %v166
  %735 = vmatprep.subr.mxu0 %v165
  %736 = vmatpush1.msra.mxu0 %v164
  %737 = vmatprep.subr.mxu0 %v227
  %738 = vmatpush2.msra.mxu0 %v226
  %739 = vmatprep.subr.mxu0 %v225
  %740 = vmatpush2.msra.mxu0 %v224
  %741 = vmatprep.subr.mxu0 %v223
  %742 = vmatpush2.msra.mxu0 %v222
  %743 = vmatprep.subr.mxu0 %v221
  %744 = vmatpush2.msra.mxu0 %v220
  %745 = vmatprep.subr.mxu0 %v219
  %746 = vmatpush2.msra.mxu0 %v218
  %747 = vmatprep.subr.mxu0 %v217
  %748 = vmatpush2.msra.mxu0 %v216
  %749 = vmatprep.subr.mxu0 %v215
  %750 = vmatpush2.msra.mxu0 %v214
  %751 = vmatprep.subr.mxu0 %v213
  %752 = vmatpush2.msra.mxu0 %v212
  %753 = vmatprep.subr.mxu0 %v211
  %754 = vmatpush2.msra.mxu0 %v210
  %755 = vmatprep.subr.mxu0 %v209
  %756 = vmatpush2.msra.mxu0 %v208
  %757 = vmatprep.subr.mxu0 %v207
  %758 = vmatpush2.msra.mxu0 %v206
  %759 = vmatprep.subr.mxu0 %v205
  %760 = vmatpush2.msra.mxu0 %v204
  %761 = vmatprep.subr.mxu0 %v203
  %762 = vmatpush2.msra.mxu0 %v202
  %763 = vmatprep.subr.mxu0 %v201
  %764 = vmatpush2.msra.mxu0 %v200
  %765 = vmatprep.subr.mxu0 %v199
  %766 = vmatpush2.msra.mxu0 %v198
  %767 = vmatprep.subr.mxu0 %v197
  %768 = vmatpush2.msra.mxu0 %v196
  %769 = vmatprep.mubr.f32.mxu0 0.0
  %770 = vmatmul.mubr.f32.gmra.mxu0 0.0
  %v771 = vpop.f32.mrf.mxu0
  %v772 = vadd.f32 0.0, %v771
  %v773 = vpop.f32.mrf.mxu0
  %v774 = vadd.f32 0.0, %v773
  %775 = vdwg.mxu0
  %v776 = vadd.f32 %v483, %v772
  %v777 = vadd.f32 %v484, %v774
  %v778 = vtanh.pop %v776
  %v779 = vtanh.pop %v777
  %780 = vmatprep.subr.mxu0 %v260
  %781 = vmatpush1.msra.mxu0 %v259
  %782 = vmatprep.subr.mxu0 %v258
  %783 = vmatpush1.msra.mxu0 %v257
  %784 = vmatprep.subr.mxu0 %v256
  %785 = vmatpush1.msra.mxu0 %v255
  %786 = vmatprep.subr.mxu0 %v254
  %787 = vmatpush1.msra.mxu0 %v253
  %788 = vmatprep.subr.mxu0 %v252
  %789 = vmatpush1.msra.mxu0 %v251
  %790 = vmatprep.subr.mxu0 %v250
  %791 = vmatpush1.msra.mxu0 %v249
  %792 = vmatprep.subr.mxu0 %v248
  %793 = vmatpush1.msra.mxu0 %v247
  %794 = vmatprep.subr.mxu0 %v246
  %795 = vmatpush1.msra.mxu0 %v245
  %796 = vmatprep.subr.mxu0 %v244
  %797 = vmatpush1.msra.mxu0 %v243
  %798 = vmatprep.subr.mxu0 %v242
  %799 = vmatpush1.msra.mxu0 %v241
  %800 = vmatprep.subr.mxu0 %v240
  %801 = vmatpush1.msra.mxu0 %v239
  %802 = vmatprep.subr.mxu0 %v238
  %803 = vmatpush1.msra.mxu0 %v237
  %804 = vmatprep.subr.mxu0 %v236
  %805 = vmatpush1.msra.mxu0 %v235
  %806 = vmatprep.subr.mxu0 %v234
  %807 = vmatpush1.msra.mxu0 %v233
  %808 = vmatprep.subr.mxu0 %v232
  %809 = vmatpush1.msra.mxu0 %v231
  %810 = vmatprep.subr.mxu0 %v230
  %811 = vmatpush1.msra.mxu0 %v229
  %812 = vmatprep.subr.mxu0 %v292
  %813 = vmatpush2.msra.mxu0 %v291
  %814 = vmatprep.subr.mxu0 %v290
  %815 = vmatpush2.msra.mxu0 %v289
  %816 = vmatprep.subr.mxu0 %v288
  %817 = vmatpush2.msra.mxu0 %v287
  %818 = vmatprep.subr.mxu0 %v286
  %819 = vmatpush2.msra.mxu0 %v285
  %820 = vmatprep.subr.mxu0 %v284
  %821 = vmatpush2.msra.mxu0 %v283
  %822 = vmatprep.subr.mxu0 %v282
  %823 = vmatpush2.msra.mxu0 %v281
  %824 = vmatprep.subr.mxu0 %v280
  %825 = vmatpush2.msra.mxu0 %v279
  %826 = vmatprep.subr.mxu0 %v278
  %827 = vmatpush2.msra.mxu0 %v277
  %828 = vmatprep.subr.mxu0 %v276
  %829 = vmatpush2.msra.mxu0 %v275
  %830 = vmatprep.subr.mxu0 %v274
  %831 = vmatpush2.msra.mxu0 %v273
  %832 = vmatprep.subr.mxu0 %v272
  %833 = vmatpush2.msra.mxu0 %v271
  %834 = vmatprep.subr.mxu0 %v270
  %835 = vmatpush2.msra.mxu0 %v269
  %836 = vmatprep.subr.mxu0 %v268
  %837 = vmatpush2.msra.mxu0 %v267
  %838 = vmatprep.subr.mxu0 %v266
  %839 = vmatpush2.msra.mxu0 %v265
  %840 = vmatprep.subr.mxu0 %v264
  %841 = vmatpush2.msra.mxu0 %v263
  %842 = vmatprep.subr.mxu0 %v262
  %843 = vmatpush2.msra.mxu0 %v261
  %844 = vmatprep.mubr.f32.mxu0 0.0
  %845 = vmatmul.mubr.f32.gmra.mxu0 0.0
  %v846 = vpop.f32.mrf.mxu0
  %v847 = vadd.f32 0.0, %v846
  %v848 = vpop.f32.mrf.mxu0
  %v849 = vadd.f32 0.0, %v848
  %850 = vdwg.mxu0
  %v851 = vadd.f32 %v485, %v847
  %v852 = vadd.f32 %v486, %v849
  %v853 = vmul.f32 %v851, 0.5
  %v854 = vmul.f32 %v852, 0.5
  %v855 = vtanh.pop %v853
  %v856 = vtanh.pop %v854
  %v857 = vmul.f32 %v855, 0.5
  %v858 = vmul.f32 %v856, 0.5
  %v859 = vadd.f32 %v857, 0.5
  %v860 = vadd.f32 %v858, 0.5
  %v861 = vmul.f32 %v703, 0.0
  %v862 = vmul.f32 %v704, 0.0
  %v863 = vmul.f32 %v622, %v778
  %v864 = vmul.f32 %v623, %v779
  %v865 = vadd.f32 %v861, %v863
  %v866 = vadd.f32 %v862, %v864
  %v867 = vtanh.pop %v865
  %v868 = vtanh.pop %v866
  %v869 = vmul.f32 %v859, %v867
  %v870 = vmul.f32 %v860, %v868
  %871 = vmatprep.subr.mxu0 %v65
  %872 = vmatpush1.msra.mxu0 %v64
  %873 = vmatprep.subr.mxu0 %v63
  %874 = vmatpush1.msra.mxu0 %v62
  %875 = vmatprep.subr.mxu0 %v61
  %876 = vmatpush1.msra.mxu0 %v60
  %877 = vmatprep.subr.mxu0 %v59
  %878 = vmatpush1.msra.mxu0 %v58
  %879 = vmatprep.subr.mxu0 %v57
  %880 = vmatpush1.msra.mxu0 %v56
  %881 = vmatprep.subr.mxu0 %v55
  %882 = vmatpush1.msra.mxu0 %v54
  %883 = vmatprep.subr.mxu0 %v53
  %884 = vmatpush1.msra.mxu0 %v52
  %885 = vmatprep.subr.mxu0 %v51
  %886 = vmatpush1.msra.mxu0 %v50
  %887 = vmatprep.subr.mxu0 %v49
  %888 = vmatpush1.msra.mxu0 %v48
  %889 = vmatprep.subr.mxu0 %v47
  %890 = vmatpush1.msra.mxu0 %v46
  %891 = vmatprep.subr.mxu0 %v45
  %892 = vmatpush1.msra.mxu0 %v44
  %893 = vmatprep.subr.mxu0 %v43
  %894 = vmatpush1.msra.mxu0 %v42
  %895 = vmatprep.subr.mxu0 %v41
  %896 = vmatpush1.msra.mxu0 %v40
  %897 = vmatprep.subr.mxu0 %v39
  %898 = vmatpush1.msra.mxu0 %v38
  %899 = vmatprep.subr.mxu0 %v37
  %900 = vmatpush1.msra.mxu0 %v36
  %901 = vmatprep.subr.mxu0 %v35
  %902 = vmatpush1.msra.mxu0 %v34
  %903 = vmatprep.subr.mxu0 %v97
  %904 = vmatpush2.msra.mxu0 %v96
  %905 = vmatprep.subr.mxu0 %v95
  %906 = vmatpush2.msra.mxu0 %v94
  %907 = vmatprep.subr.mxu0 %v93
  %908 = vmatpush2.msra.mxu0 %v92
  %909 = vmatprep.subr.mxu0 %v91
  %910 = vmatpush2.msra.mxu0 %v90
  %911 = vmatprep.subr.mxu0 %v89
  %912 = vmatpush2.msra.mxu0 %v88
  %913 = vmatprep.subr.mxu0 %v87
  %914 = vmatpush2.msra.mxu0 %v86
  %915 = vmatprep.subr.mxu0 %v85
  %916 = vmatpush2.msra.mxu0 %v84
  %917 = vmatprep.subr.mxu0 %v83
  %918 = vmatpush2.msra.mxu0 %v82
  %919 = vmatprep.subr.mxu0 %v81
  %920 = vmatpush2.msra.mxu0 %v80
  %921 = vmatprep.subr.mxu0 %v79
  %922 = vmatpush2.msra.mxu0 %v78
  %923 = vmatprep.subr.mxu0 %v77
  %924 = vmatpush2.msra.mxu0 %v76
  %925 = vmatprep.subr.mxu0 %v75
  %926 = vmatpush2.msra.mxu0 %v74
  %927 = vmatprep.subr.mxu0 %v73
  %928 = vmatpush2.msra.mxu0 %v72
  %929 = vmatprep.subr.mxu0 %v71
  %930 = vmatpush2.msra.mxu0 %v70
  %931 = vmatprep.subr.mxu0 %v69
  %932 = vmatpush2.msra.mxu0 %v68
  %933 = vmatprep.subr.mxu0 %v67
  %934 = vmatpush2.msra.mxu0 %v66
  %935 = vmatprep.mubr.f32.mxu0 %v870
  %936 = vmatmul.mubr.f32.gmra.mxu0 %v869
  %v937 = vpop.f32.mrf.mxu0
  %v938 = vadd.f32 0.0, %v937
  %v939 = vpop.f32.mrf.mxu0
  %v940 = vadd.f32 0.0, %v939
  %941 = vdwg.mxu0
  %v942 = vadd.f32 %v487, %v938
  %v943 = vadd.f32 %v488, %v940
  %v944 = vmul.f32 %v942, 0.5
  %v945 = vmul.f32 %v943, 0.5
  %v946 = vtanh.pop %v944
  %v947 = vtanh.pop %v945
  %v948 = vmul.f32 %v946, 0.5
  %v949 = vmul.f32 %v947, 0.5
  %v950 = vadd.f32 %v948, 0.5
  %v951 = vadd.f32 %v949, 0.5
  %952 = vmatprep.subr.mxu0 %v130
  %953 = vmatpush1.msra.mxu0 %v129
  %954 = vmatprep.subr.mxu0 %v128
  %955 = vmatpush1.msra.mxu0 %v127
  %956 = vmatprep.subr.mxu0 %v126
  %957 = vmatpush1.msra.mxu0 %v125
  %958 = vmatprep.subr.mxu0 %v124
  %959 = vmatpush1.msra.mxu0 %v123
  %960 = vmatprep.subr.mxu0 %v122
  %961 = vmatpush1.msra.mxu0 %v121
  %962 = vmatprep.subr.mxu0 %v120
  %963 = vmatpush1.msra.mxu0 %v119
  %964 = vmatprep.subr.mxu0 %v118
  %965 = vmatpush1.msra.mxu0 %v117
  %966 = vmatprep.subr.mxu0 %v116
  %967 = vmatpush1.msra.mxu0 %v115
  %968 = vmatprep.subr.mxu0 %v114
  %969 = vmatpush1.msra.mxu0 %v113
  %970 = vmatprep.subr.mxu0 %v112
  %971 = vmatpush1.msra.mxu0 %v111
  %972 = vmatprep.subr.mxu0 %v110
  %973 = vmatpush1.msra.mxu0 %v109
  %974 = vmatprep.subr.mxu0 %v108
  %975 = vmatpush1.msra.mxu0 %v107
  %976 = vmatprep.subr.mxu0 %v106
  %977 = vmatpush1.msra.mxu0 %v105
  %978 = vmatprep.subr.mxu0 %v104
  %979 = vmatpush1.msra.mxu0 %v103
  %980 = vmatprep.subr.mxu0 %v102
  %981 = vmatpush1.msra.mxu0 %v101
  %982 = vmatprep.subr.mxu0 %v100
  %983 = vmatpush1.msra.mxu0 %v99
  %984 = vmatprep.subr.mxu0 %v162
  %985 = vmatpush2.msra.mxu0 %v161
  %986 = vmatprep.subr.mxu0 %v160
  %987 = vmatpush2.msra.mxu0 %v159
  %988 = vmatprep.subr.mxu0 %v158
  %989 = vmatpush2.msra.mxu0 %v157
  %990 = vmatprep.subr.mxu0 %v156
  %991 = vmatpush2.msra.mxu0 %v155
  %992 = vmatprep.subr.mxu0 %v154
  %993 = vmatpush2.msra.mxu0 %v153
  %994 = vmatprep.subr.mxu0 %v152
  %995 = vmatpush2.msra.mxu0 %v151
  %996 = vmatprep.subr.mxu0 %v150
  %997 = vmatpush2.msra.mxu0 %v149
  %998 = vmatprep.subr.mxu0 %v148
  %999 = vmatpush2.msra.mxu0 %v147
  %1000 = vmatprep.subr.mxu0 %v146
  %1001 = vmatpush2.msra.mxu0 %v145
  %1002 = vmatprep.subr.mxu0 %v144
  %1003 = vmatpush2.msra.mxu0 %v143
  %1004 = vmatprep.subr.mxu0 %v142
  %1005 = vmatpush2.msra.mxu0 %v141
  %1006 = vmatprep.subr.mxu0 %v140
  %1007 = vmatpush2.msra.mxu0 %v139
  %1008 = vmatprep.subr.mxu0 %v138
  %1009 = vmatpush2.msra.mxu0 %v137
  %1010 = vmatprep.subr.mxu0 %v136
  %1011 = vmatpush2.msra.mxu0 %v135
  %1012 = vmatprep.subr.mxu0 %v134
  %1013 = vmatpush2.msra.mxu0 %v133
  %1014 = vmatprep.subr.mxu0 %v132
  %1015 = vmatpush2.msra.mxu0 %v131
  %1016 = vmatprep.mubr.f32.mxu0 %v870
  %1017 = vmatmul.mubr.f32.gmra.mxu0 %v869
  %v1018 = vpop.f32.mrf.mxu0
  %v1019 = vadd.f32 0.0, %v1018
  %v1020 = vpop.f32.mrf.mxu0
  %v1021 = vadd.f32 0.0, %v1020
  %1022 = vdwg.mxu0
  %v1023 = vadd.f32 %v489, %v1019
  %v1024 = vadd.f32 %v490, %v1021
  %v1025 = vmul.f32 %v1023, 0.5
  %v1026 = vmul.f32 %v1024, 0.5
  %v1027 = vtanh.pop %v1025
  %v1028 = vtanh.pop %v1026
  %v1029 = vmul.f32 %v1027, 0.5
  %v1030 = vmul.f32 %v1028, 0.5
  %v1031 = vadd.f32 %v1029, 0.5
  %v1032 = vadd.f32 %v1030, 0.5
  %1033 = vmatprep.subr.mxu0 %v195
  %1034 = vmatpush1.msra.mxu0 %v194
  %1035 = vmatprep.subr.mxu0 %v193
  %1036 = vmatpush1.msra.mxu0 %v192
  %1037 = vmatprep.subr.mxu0 %v191
  %1038 = vmatpush1.msra.mxu0 %v190
  %1039 = vmatprep.subr.mxu0 %v189
  %1040 = vmatpush1.msra.mxu0 %v188
  %1041 = vmatprep.subr.mxu0 %v187
  %1042 = vmatpush1.msra.mxu0 %v186
  %1043 = vmatprep.subr.mxu0 %v185
  %1044 = vmatpush1.msra.mxu0 %v184
  %1045 = vmatprep.subr.mxu0 %v183
  %1046 = vmatpush1.msra.mxu0 %v182
  %1047 = vmatprep.subr.mxu0 %v181
  %1048 = vmatpush1.msra.mxu0 %v180
  %1049 = vmatprep.subr.mxu0 %v179
  %1050 = vmatpush1.msra.mxu0 %v178
  %1051 = vmatprep.subr.mxu0 %v177
  %1052 = vmatpush1.msra.mxu0 %v176
  %1053 = vmatprep.subr.mxu0 %v175
  %1054 = vmatpush1.msra.mxu0 %v174
  %1055 = vmatprep.subr.mxu0 %v173
  %1056 = vmatpush1.msra.mxu0 %v172
  %1057 = vmatprep.subr.mxu0 %v171
  %1058 = vmatpush1.msra.mxu0 %v170
  %1059 = vmatprep.subr.mxu0 %v169
  %1060 = vmatpush1.msra.mxu0 %v168
  %1061 = vmatprep.subr.mxu0 %v167
  %1062 = vmatpush1.msra.mxu0 %v166
  %1063 = vmatprep.subr.mxu0 %v165
  %1064 = vmatpush1.msra.mxu0 %v164
  %1065 = vmatprep.subr.mxu0 %v227
  %1066 = vmatpush2.msra.mxu0 %v226
  %1067 = vmatprep.subr.mxu0 %v225
  %1068 = vmatpush2.msra.mxu0 %v224
  %1069 = vmatprep.subr.mxu0 %v223
  %1070 = vmatpush2.msra.mxu0 %v222
  %1071 = vmatprep.subr.mxu0 %v221
  %1072 = vmatpush2.msra.mxu0 %v220
  %1073 = vmatprep.subr.mxu0 %v219
  %1074 = vmatpush2.msra.mxu0 %v218
  %1075 = vmatprep.subr.mxu0 %v217
  %1076 = vmatpush2.msra.mxu0 %v216
  %1077 = vmatprep.subr.mxu0 %v215
  %1078 = vmatpush2.msra.mxu0 %v214
  %1079 = vmatprep.subr.mxu0 %v213
  %1080 = vmatpush2.msra.mxu0 %v212
  %1081 = vmatprep.subr.mxu0 %v211
  %1082 = vmatpush2.msra.mxu0 %v210
  %1083 = vmatprep.subr.mxu0 %v209
  %1084 = vmatpush2.msra.mxu0 %v208
  %1085 = vmatprep.subr.mxu0 %v207
  %1086 = vmatpush2.msra.mxu0 %v206
  %1087 = vmatprep.subr.mxu0 %v205
  %1088 = vmatpush2.msra.mxu0 %v204
  %1089 = vmatprep.subr.mxu0 %v203
  %1090 = vmatpush2.msra.mxu0 %v202
  %1091 = vmatprep.subr.mxu0 %v201
  %1092 = vmatpush2.msra.mxu0 %v200
  %1093 = vmatprep.subr.mxu0 %v199
  %1094 = vmatpush2.msra.mxu0 %v198
  %1095 = vmatprep.subr.mxu0 %v197
  %1096 = vmatpush2.msra.mxu0 %v196
  %1097 = vmatprep.mubr.f32.mxu0 %v870
  %1098 = vmatmul.mubr.f32.gmra.mxu0 %v869
  %v1099 = vpop.f32.mrf.mxu0
  %v1100 = vadd.f32 0.0, %v1099
  %v1101 = vpop.f32.mrf.mxu0
  %v1102 = vadd.f32 0.0, %v1101
  %1103 = vdwg.mxu0
  %v1104 = vadd.f32 %v491, %v1100
  %v1105 = vadd.f32 %v492, %v1102
  %v1106 = vtanh.pop %v1104
  %v1107 = vtanh.pop %v1105
  %1108 = vmatprep.subr.mxu0 %v260
  %1109 = vmatpush1.msra.mxu0 %v259
  %1110 = vmatprep.subr.mxu0 %v258
  %1111 = vmatpush1.msra.mxu0 %v257
  %1112 = vmatprep.subr.mxu0 %v256
  %1113 = vmatpush1.msra.mxu0 %v255
  %1114 = vmatprep.subr.mxu0 %v254
  %1115 = vmatpush1.msra.mxu0 %v253
  %1116 = vmatprep.subr.mxu0 %v252
  %1117 = vmatpush1.msra.mxu0 %v251
  %1118 = vmatprep.subr.mxu0 %v250
  %1119 = vmatpush1.msra.mxu0 %v249
  %1120 = vmatprep.subr.mxu0 %v248
  %1121 = vmatpush1.msra.mxu0 %v247
  %1122 = vmatprep.subr.mxu0 %v246
  %1123 = vmatpush1.msra.mxu0 %v245
  %1124 = vmatprep.subr.mxu0 %v244
  %1125 = vmatpush1.msra.mxu0 %v243
  %1126 = vmatprep.subr.mxu0 %v242
  %1127 = vmatpush1.msra.mxu0 %v241
  %1128 = vmatprep.subr.mxu0 %v240
  %1129 = vmatpush1.msra.mxu0 %v239
  %1130 = vmatprep.subr.mxu0 %v238
  %1131 = vmatpush1.msra.mxu0 %v237
  %1132 = vmatprep.subr.mxu0 %v236
  %1133 = vmatpush1.msra.mxu0 %v235
  %1134 = vmatprep.subr.mxu0 %v234
  %1135 = vmatpush1.msra.mxu0 %v233
  %1136 = vmatprep.subr.mxu0 %v232
  %1137 = vmatpush1.msra.mxu0 %v231
  %1138 = vmatprep.subr.mxu0 %v230
  %1139 = vmatpush1.msra.mxu0 %v229
  %1140 = vmatprep.subr.mxu0 %v292
  %1141 = vmatpush2.msra.mxu0 %v291
  %1142 = vmatprep.subr.mxu0 %v290
  %1143 = vmatpush2.msra.mxu0 %v289
  %1144 = vmatprep.subr.mxu0 %v288
  %1145 = vmatpush2.msra.mxu0 %v287
  %1146 = vmatprep.subr.mxu0 %v286
  %1147 = vmatpush2.msra.mxu0 %v285
  %1148 = vmatprep.subr.mxu0 %v284
  %1149 = vmatpush2.msra.mxu0 %v283
  %1150 = vmatprep.subr.mxu0 %v282
  %1151 = vmatpush2.msra.mxu0 %v281
  %1152 = vmatprep.subr.mxu0 %v280
  %1153 = vmatpush2.msra.mxu0 %v279
  %1154 = vmatprep.subr.mxu0 %v278
  %1155 = vmatpush2.msra.mxu0 %v277
  %1156 = vmatprep.subr.mxu0 %v276
  %1157 = vmatpush2.msra.mxu0 %v275
  %1158 = vmatprep.subr.mxu0 %v274
  %1159 = vmatpush2.msra.mxu0 %v273
  %1160 = vmatprep.subr.mxu0 %v272
  %1161 = vmatpush2.msra.mxu0 %v271
  %1162 = vmatprep.subr.mxu0 %v270
  %1163 = vmatpush2.msra.mxu0 %v269
  %1164 = vmatprep.subr.mxu0 %v268
  %1165 = vmatpush2.msra.mxu0 %v267
  %1166 = vmatprep.subr.mxu0 %v266
  %1167 = vmatpush2.msra.mxu0 %v265
  %1168 = vmatprep.subr.mxu0 %v264
  %1169 = vmatpush2.msra.mxu0 %v263
  %1170 = vmatprep.subr.mxu0 %v262
  %1171 = vmatpush2.msra.mxu0 %v261
  %1172 = vmatprep.mubr.f32.mxu0 %v870
  %1173 = vmatmul.mubr.f32.gmra.mxu0 %v869
  %v1174 = vpop.f32.mrf.mxu0
  %v1175 = vadd.f32 0.0, %v1174
  %v1176 = vpop.f32.mrf.mxu0
  %v1177 = vadd.f32 0.0, %v1176
  %1178 = vdwg.mxu0
  %v1179 = vadd.f32 %v493, %v1175
  %v1180 = vadd.f32 %v494, %v1177
  %v1181 = vmul.f32 %v1179, 0.5
  %v1182 = vmul.f32 %v1180, 0.5
  %v1183 = vtanh.pop %v1181
  %v1184 = vtanh.pop %v1182
  %v1185 = vmul.f32 %v1183, 0.5
  %v1186 = vmul.f32 %v1184, 0.5
  %v1187 = vadd.f32 %v1185, 0.5
  %v1188 = vadd.f32 %v1186, 0.5
  %v1189 = vmul.f32 %v1031, %v865
  %v1190 = vmul.f32 %v1032, %v866
  %v1191 = vmul.f32 %v950, %v1106
  %v1192 = vmul.f32 %v951, %v1107
  %v1193 = vadd.f32 %v1189, %v1191
  %v1194 = vadd.f32 %v1190, %v1192
  %v1195 = vtanh.pop %v1193
  %v1196 = vtanh.pop %v1194
  %v1197 = vmul.f32 %v1187, %v1195
  %v1198 = vmul.f32 %v1188, %v1196
  %1199 = vmatprep.subr.mxu0 %v65
  %1200 = vmatpush1.msra.mxu0 %v64
  %1201 = vmatprep.subr.mxu0 %v63
  %1202 = vmatpush1.msra.mxu0 %v62
  %1203 = vmatprep.subr.mxu0 %v61
  %1204 = vmatpush1.msra.mxu0 %v60
  %1205 = vmatprep.subr.mxu0 %v59
  %1206 = vmatpush1.msra.mxu0 %v58
  %1207 = vmatprep.subr.mxu0 %v57
  %1208 = vmatpush1.msra.mxu0 %v56
  %1209 = vmatprep.subr.mxu0 %v55
  %1210 = vmatpush1.msra.mxu0 %v54
  %1211 = vmatprep.subr.mxu0 %v53
  %1212 = vmatpush1.msra.mxu0 %v52
  %1213 = vmatprep.subr.mxu0 %v51
  %1214 = vmatpush1.msra.mxu0 %v50
  %1215 = vmatprep.subr.mxu0 %v49
  %1216 = vmatpush1.msra.mxu0 %v48
  %1217 = vmatprep.subr.mxu0 %v47
  %1218 = vmatpush1.msra.mxu0 %v46
  %1219 = vmatprep.subr.mxu0 %v45
  %1220 = vmatpush1.msra.mxu0 %v44
  %1221 = vmatprep.subr.mxu0 %v43
  %1222 = vmatpush1.msra.mxu0 %v42
  %1223 = vmatprep.subr.mxu0 %v41
  %1224 = vmatpush1.msra.mxu0 %v40
  %1225 = vmatprep.subr.mxu0 %v39
  %1226 = vmatpush1.msra.mxu0 %v38
  %1227 = vmatprep.subr.mxu0 %v37
  %1228 = vmatpush1.msra.mxu0 %v36
  %1229 = vmatprep.subr.mxu0 %v35
  %1230 = vmatpush1.msra.mxu0 %v34
  %1231 = vmatprep.subr.mxu0 %v97
  %1232 = vmatpush2.msra.mxu0 %v96
  %1233 = vmatprep.subr.mxu0 %v95
  %1234 = vmatpush2.msra.mxu0 %v94
  %1235 = vmatprep.subr.mxu0 %v93
  %1236 = vmatpush2.msra.mxu0 %v92
  %1237 = vmatprep.subr.mxu0 %v91
  %1238 = vmatpush2.msra.mxu0 %v90
  %1239 = vmatprep.subr.mxu0 %v89
  %1240 = vmatpush2.msra.mxu0 %v88
  %1241 = vmatprep.subr.mxu0 %v87
  %1242 = vmatpush2.msra.mxu0 %v86
  %1243 = vmatprep.subr.mxu0 %v85
  %1244 = vmatpush2.msra.mxu0 %v84
  %1245 = vmatprep.subr.mxu0 %v83
  %1246 = vmatpush2.msra.mxu0 %v82
  %1247 = vmatprep.subr.mxu0 %v81
  %1248 = vmatpush2.msra.mxu0 %v80
  %1249 = vmatprep.subr.mxu0 %v79
  %1250 = vmatpush2.msra.mxu0 %v78
  %1251 = vmatprep.subr.mxu0 %v77
  %1252 = vmatpush2.msra.mxu0 %v76
  %1253 = vmatprep.subr.mxu0 %v75
  %1254 = vmatpush2.msra.mxu0 %v74
  %1255 = vmatprep.subr.mxu0 %v73
  %1256 = vmatpush2.msra.mxu0 %v72
  %1257 = vmatprep.subr.mxu0 %v71
  %1258 = vmatpush2.msra.mxu0 %v70
  %1259 = vmatprep.subr.mxu0 %v69
  %1260 = vmatpush2.msra.mxu0 %v68
  %1261 = vmatprep.subr.mxu0 %v67
  %1262 = vmatpush2.msra.mxu0 %v66
  %1263 = vmatprep.mubr.f32.mxu0 %v1198
  %1264 = vmatmul.mubr.f32.gmra.mxu0 %v1197
  %v1265 = vpop.f32.mrf.mxu0
  %v1266 = vadd.f32 0.0, %v1265
  %v1267 = vpop.f32.mrf.mxu0
  %v1268 = vadd.f32 0.0, %v1267
  %1269 = vdwg.mxu0
  %v1270 = vadd.f32 %v495, %v1266
  %v1271 = vadd.f32 %v496, %v1268
  %v1272 = vmul.f32 %v1270, 0.5
  %v1273 = vmul.f32 %v1271, 0.5
  %v1274 = vtanh.pop %v1272
  %v1275 = vtanh.pop %v1273
  %v1276 = vmul.f32 %v1274, 0.5
  %v1277 = vmul.f32 %v1275, 0.5
  %v1278 = vadd.f32 %v1276, 0.5
  %v1279 = vadd.f32 %v1277, 0.5
  %1280 = vmatprep.subr.mxu0 %v130
  %1281 = vmatpush1.msra.mxu0 %v129
  %1282 = vmatprep.subr.mxu0 %v128
  %1283 = vmatpush1.msra.mxu0 %v127
  %1284 = vmatprep.subr.mxu0 %v126
  %1285 = vmatpush1.msra.mxu0 %v125
  %1286 = vmatprep.subr.mxu0 %v124
  %1287 = vmatpush1.msra.mxu0 %v123
  %1288 = vmatprep.subr.mxu0 %v122
  %1289 = vmatpush1.msra.mxu0 %v121
  %1290 = vmatprep.subr.mxu0 %v120
  %1291 = vmatpush1.msra.mxu0 %v119
  %1292 = vmatprep.subr.mxu0 %v118
  %1293 = vmatpush1.msra.mxu0 %v117
  %1294 = vmatprep.subr.mxu0 %v116
  %1295 = vmatpush1.msra.mxu0 %v115
  %1296 = vmatprep.subr.mxu0 %v114
  %1297 = vmatpush1.msra.mxu0 %v113
  %1298 = vmatprep.subr.mxu0 %v112
  %1299 = vmatpush1.msra.mxu0 %v111
  %1300 = vmatprep.subr.mxu0 %v110
  %1301 = vmatpush1.msra.mxu0 %v109
  %1302 = vmatprep.subr.mxu0 %v108
  %1303 = vmatpush1.msra.mxu0 %v107
  %1304 = vmatprep.subr.mxu0 %v106
  %1305 = vmatpush1.msra.mxu0 %v105
  %1306 = vmatprep.subr.mxu0 %v104
  %1307 = vmatpush1.msra.mxu0 %v103
  %1308 = vmatprep.subr.mxu0 %v102
  %1309 = vmatpush1.msra.mxu0 %v101
  %1310 = vmatprep.subr.mxu0 %v100
  %1311 = vmatpush1.msra.mxu0 %v99
  %1312 = vmatprep.subr.mxu0 %v162
  %1313 = vmatpush2.msra.mxu0 %v161
  %1314 = vmatprep.subr.mxu0 %v160
  %1315 = vmatpush2.msra.mxu0 %v159
  %1316 = vmatprep.subr.mxu0 %v158
  %1317 = vmatpush2.msra.mxu0 %v157
  %1318 = vmatprep.subr.mxu0 %v156
  %1319 = vmatpush2.msra.mxu0 %v155
  %1320 = vmatprep.subr.mxu0 %v154
  %1321 = vmatpush2.msra.mxu0 %v153
  %1322 = vmatprep.subr.mxu0 %v152
  %1323 = vmatpush2.msra.mxu0 %v151
  %1324 = vmatprep.subr.mxu0 %v150
  %1325 = vmatpush2.msra.mxu0 %v149
  %1326 = vmatprep.subr.mxu0 %v148
  %1327 = vmatpush2.msra.mxu0 %v147
  %1328 = vmatprep.subr.mxu0 %v146
  %1329 = vmatpush2.msra.mxu0 %v145
  %1330 = vmatprep.subr.mxu0 %v144
  %1331 = vmatpush2.msra.mxu0 %v143
  %1332 = vmatprep.subr.mxu0 %v142
  %1333 = vmatpush2.msra.mxu0 %v141
  %1334 = vmatprep.subr.mxu0 %v140
  %1335 = vmatpush2.msra.mxu0 %v139
  %1336 = vmatprep.subr.mxu0 %v138
  %1337 = vmatpush2.msra.mxu0 %v137
  %1338 = vmatprep.subr.mxu0 %v136
  %1339 = vmatpush2.msra.mxu0 %v135
  %1340 = vmatprep.subr.mxu0 %v134
  %1341 = vmatpush2.msra.mxu0 %v133
  %1342 = vmatprep.subr.mxu0 %v132
  %1343 = vmatpush2.msra.mxu0 %v131
  %1344 = vmatprep.mubr.f32.mxu0 %v1198
  %1345 = vmatmul.mubr.f32.gmra.mxu0 %v1197
  %v1346 = vpop.f32.mrf.mxu0
  %v1347 = vadd.f32 0.0, %v1346
  %v1348 = vpop.f32.mrf.mxu0
  %v1349 = vadd.f32 0.0, %v1348
  %1350 = vdwg.mxu0
  %v1351 = vadd.f32 %v497, %v1347
  %v1352 = vadd.f32 %v498, %v1349
  %v1353 = vmul.f32 %v1351, 0.5
  %v1354 = vmul.f32 %v1352, 0.5
  %v1355 = vtanh.pop %v1353
  %v1356 = vtanh.pop %v1354
  %v1357 = vmul.f32 %v1355, 0.5
  %v1358 = vmul.f32 %v1356, 0.5
  %v1359 = vadd.f32 %v1357, 0.5
  %v1360 = vadd.f32 %v1358, 0.5
  %1361 = vmatprep.subr.mxu0 %v195
  %1362 = vmatpush1.msra.mxu0 %v194
  %1363 = vmatprep.subr.mxu0 %v193
  %1364 = vmatpush1.msra.mxu0 %v192
  %1365 = vmatprep.subr.mxu0 %v191
  %1366 = vmatpush1.msra.mxu0 %v190
  %1367 = vmatprep.subr.mxu0 %v189
  %1368 = vmatpush1.msra.mxu0 %v188
  %1369 = vmatprep.subr.mxu0 %v187
  %1370 = vmatpush1.msra.mxu0 %v186
  %1371 = vmatprep.subr.mxu0 %v185
  %1372 = vmatpush1.msra.mxu0 %v184
  %1373 = vmatprep.subr.mxu0 %v183
  %1374 = vmatpush1.msra.mxu0 %v182
  %1375 = vmatprep.subr.mxu0 %v181
  %1376 = vmatpush1.msra.mxu0 %v180
  %1377 = vmatprep.subr.mxu0 %v179
  %1378 = vmatpush1.msra.mxu0 %v178
  %1379 = vmatprep.subr.mxu0 %v177
  %1380 = vmatpush1.msra.mxu0 %v176
  %1381 = vmatprep.subr.mxu0 %v175
  %1382 = vmatpush1.msra.mxu0 %v174
  %1383 = vmatprep.subr.mxu0 %v173
  %1384 = vmatpush1.msra.mxu0 %v172
  %1385 = vmatprep.subr.mxu0 %v171
  %1386 = vmatpush1.msra.mxu0 %v170
  %1387 = vmatprep.subr.mxu0 %v169
  %1388 = vmatpush1.msra.mxu0 %v168
  %1389 = vmatprep.subr.mxu0 %v167
  %1390 = vmatpush1.msra.mxu0 %v166
  %1391 = vmatprep.subr.mxu0 %v165
  %1392 = vmatpush1.msra.mxu0 %v164
  %1393 = vmatprep.subr.mxu0 %v227
  %1394 = vmatpush2.msra.mxu0 %v226
  %1395 = vmatprep.subr.mxu0 %v225
  %1396 = vmatpush2.msra.mxu0 %v224
  %1397 = vmatprep.subr.mxu0 %v223
  %1398 = vmatpush2.msra.mxu0 %v222
  %1399 = vmatprep.subr.mxu0 %v221
  %1400 = vmatpush2.msra.mxu0 %v220
  %1401 = vmatprep.subr.mxu0 %v219
  %1402 = vmatpush2.msra.mxu0 %v218
  %1403 = vmatprep.subr.mxu0 %v217
  %1404 = vmatpush2.msra.mxu0 %v216
  %1405 = vmatprep.subr.mxu0 %v215
  %1406 = vmatpush2.msra.mxu0 %v214
  %1407 = vmatprep.subr.mxu0 %v213
  %1408 = vmatpush2.msra.mxu0 %v212
  %1409 = vmatprep.subr.mxu0 %v211
  %1410 = vmatpush2.msra.mxu0 %v210
  %1411 = vmatprep.subr.mxu0 %v209
  %1412 = vmatpush2.msra.mxu0 %v208
  %1413 = vmatprep.subr.mxu0 %v207
  %1414 = vmatpush2.msra.mxu0 %v206
  %1415 = vmatprep.subr.mxu0 %v205
  %1416 = vmatpush2.msra.mxu0 %v204
  %1417 = vmatprep.subr.mxu0 %v203
  %1418 = vmatpush2.msra.mxu0 %v202
  %1419 = vmatprep.subr.mxu0 %v201
  %1420 = vmatpush2.msra.mxu0 %v200
  %1421 = vmatprep.subr.mxu0 %v199
  %1422 = vmatpush2.msra.mxu0 %v198
  %1423 = vmatprep.subr.mxu0 %v197
  %1424 = vmatpush2.msra.mxu0 %v196
  %1425 = vmatprep.mubr.f32.mxu0 %v1198
  %1426 = vmatmul.mubr.f32.gmra.mxu0 %v1197
  %v1427 = vpop.f32.mrf.mxu0
  %v1428 = vadd.f32 0.0, %v1427
  %v1429 = vpop.f32.mrf.mxu0
  %v1430 = vadd.f32 0.0, %v1429
  %1431 = vdwg.mxu0
  %v1432 = vadd.f32 %v499, %v1428
  %v1433 = vadd.f32 %v500, %v1430
  %v1434 = vtanh.pop %v1432
  %v1435 = vtanh.pop %v1433
  %1436 = vmatprep.subr.mxu0 %v260
  %1437 = vmatpush1.msra.mxu0 %v259
  %1438 = vmatprep.subr.mxu0 %v258
  %1439 = vmatpush1.msra.mxu0 %v257
  %1440 = vmatprep.subr.mxu0 %v256
  %1441 = vmatpush1.msra.mxu0 %v255
  %1442 = vmatprep.subr.mxu0 %v254
  %1443 = vmatpush1.msra.mxu0 %v253
  %1444 = vmatprep.subr.mxu0 %v252
  %1445 = vmatpush1.msra.mxu0 %v251
  %1446 = vmatprep.subr.mxu0 %v250
  %1447 = vmatpush1.msra.mxu0 %v249
  %1448 = vmatprep.subr.mxu0 %v248
  %1449 = vmatpush1.msra.mxu0 %v247
  %1450 = vmatprep.subr.mxu0 %v246
  %1451 = vmatpush1.msra.mxu0 %v245
  %1452 = vmatprep.subr.mxu0 %v244
  %1453 = vmatpush1.msra.mxu0 %v243
  %1454 = vmatprep.subr.mxu0 %v242
  %1455 = vmatpush1.msra.mxu0 %v241
  %1456 = vmatprep.subr.mxu0 %v240
  %1457 = vmatpush1.msra.mxu0 %v239
  %1458 = vmatprep.subr.mxu0 %v238
  %1459 = vmatpush1.msra.mxu0 %v237
  %1460 = vmatprep.subr.mxu0 %v236
  %1461 = vmatpush1.msra.mxu0 %v235
  %1462 = vmatprep.subr.mxu0 %v234
  %1463 = vmatpush1.msra.mxu0 %v233
  %1464 = vmatprep.subr.mxu0 %v232
  %1465 = vmatpush1.msra.mxu0 %v231
  %1466 = vmatprep.subr.mxu0 %v230
  %1467 = vmatpush1.msra.mxu0 %v229
  %1468 = vmatprep.subr.mxu0 %v292
  %1469 = vmatpush2.msra.mxu0 %v291
  %1470 = vmatprep.subr.mxu0 %v290
  %1471 = vmatpush2.msra.mxu0 %v289
  %1472 = vmatprep.subr.mxu0 %v288
  %1473 = vmatpush2.msra.mxu0 %v287
  %1474 = vmatprep.subr.mxu0 %v286
  %1475 = vmatpush2.msra.mxu0 %v285
  %1476 = vmatprep.subr.mxu0 %v284
  %1477 = vmatpush2.msra.mxu0 %v283
  %1478 = vmatprep.subr.mxu0 %v282
  %1479 = vmatpush2.msra.mxu0 %v281
  %1480 = vmatprep.subr.mxu0 %v280
  %1481 = vmatpush2.msra.mxu0 %v279
  %1482 = vmatprep.subr.mxu0 %v278
  %1483 = vmatpush2.msra.mxu0 %v277
  %1484 = vmatprep.subr.mxu0 %v276
  %1485 = vmatpush2.msra.mxu0 %v275
  %1486 = vmatprep.subr.mxu0 %v274
  %1487 = vmatpush2.msra.mxu0 %v273
  %1488 = vmatprep.subr.mxu0 %v272
  %1489 = vmatpush2.msra.mxu0 %v271
  %1490 = vmatprep.subr.mxu0 %v270
  %1491 = vmatpush2.msra.mxu0 %v269
  %1492 = vmatprep.subr.mxu0 %v268
  %1493 = vmatpush2.msra.mxu0 %v267
  %1494 = vmatprep.subr.mxu0 %v266
  %1495 = vmatpush2.msra.mxu0 %v265
  %1496 = vmatprep.subr.mxu0 %v264
  %1497 = vmatpush2.msra.mxu0 %v263
  %1498 = vmatprep.subr.mxu0 %v262
  %1499 = vmatpush2.msra.mxu0 %v261
  %1500 = vmatprep.mubr.f32.mxu0 %v1198
  %1501 = vmatmul.mubr.f32.gmra.mxu0 %v1197
  %v1502 = vpop.f32.mrf.mxu0
  %v1503 = vadd.f32 0.0, %v1502
  %v1504 = vpop.f32.mrf.mxu0
  %v1505 = vadd.f32 0.0, %v1504
  %1506 = vdwg.mxu0
  %v1507 = vadd.f32 %v501, %v1503
  %v1508 = vadd.f32 %v502, %v1505
  %v1509 = vmul.f32 %v1507, 0.5
  %v1510 = vmul.f32 %v1508, 0.5
  %v1511 = vtanh.pop %v1509
  %v1512 = vtanh.pop %v1510
  %v1513 = vmul.f32 %v1511, 0.5
  %v1514 = vmul.f32 %v1512, 0.5
  %v1515 = vadd.f32 %v1513, 0.5
  %v1516 = vadd.f32 %v1514, 0.5
  %v1517 = vmul.f32 %v1359, %v1193
  %v1518 = vmul.f32 %v1360, %v1194
  %v1519 = vmul.f32 %v1278, %v1434
  %v1520 = vmul.f32 %v1279, %v1435
  %v1521 = vadd.f32 %v1517, %v1519
  %v1522 = vadd.f32 %v1518, %v1520
  %v1523 = vtanh.pop %v1521
  %v1524 = vtanh.pop %v1522
  %v1525 = vmul.f32 %v1515, %v1523
  %v1526 = vmul.f32 %v1516, %v1524
  %1527 = vmatprep.subr.mxu0 %v65
  %1528 = vmatpush1.msra.mxu0 %v64
  %1529 = vmatprep.subr.mxu0 %v63
  %1530 = vmatpush1.msra.mxu0 %v62
  %1531 = vmatprep.subr.mxu0 %v61
  %1532 = vmatpush1.msra.mxu0 %v60
  %1533 = vmatprep.subr.mxu0 %v59
  %1534 = vmatpush1.msra.mxu0 %v58
  %1535 = vmatprep.subr.mxu0 %v57
  %1536 = vmatpush1.msra.mxu0 %v56
  %1537 = vmatprep.subr.mxu0 %v55
  %1538 = vmatpush1.msra.mxu0 %v54
  %1539 = vmatprep.subr.mxu0 %v53
  %1540 = vmatpush1.msra.mxu0 %v52
  %1541 = vmatprep.subr.mxu0 %v51
  %1542 = vmatpush1.msra.mxu0 %v50
  %1543 = vmatprep.subr.mxu0 %v49
  %1544 = vmatpush1.msra.mxu0 %v48
  %1545 = vmatprep.subr.mxu0 %v47
  %1546 = vmatpush1.msra.mxu0 %v46
  %1547 = vmatprep.subr.mxu0 %v45
  %1548 = vmatpush1.msra.mxu0 %v44
  %1549 = vmatprep.subr.mxu0 %v43
  %1550 = vmatpush1.msra.mxu0 %v42
  %1551 = vmatprep.subr.mxu0 %v41
  %1552 = vmatpush1.msra.mxu0 %v40
  %1553 = vmatprep.subr.mxu0 %v39
  %1554 = vmatpush1.msra.mxu0 %v38
  %1555 = vmatprep.subr.mxu0 %v37
  %1556 = vmatpush1.msra.mxu0 %v36
  %1557 = vmatprep.subr.mxu0 %v35
  %1558 = vmatpush1.msra.mxu0 %v34
  %1559 = vmatprep.subr.mxu0 %v97
  %1560 = vmatpush2.msra.mxu0 %v96
  %1561 = vmatprep.subr.mxu0 %v95
  %1562 = vmatpush2.msra.mxu0 %v94
  %1563 = vmatprep.subr.mxu0 %v93
  %1564 = vmatpush2.msra.mxu0 %v92
  %1565 = vmatprep.subr.mxu0 %v91
  %1566 = vmatpush2.msra.mxu0 %v90
  %1567 = vmatprep.subr.mxu0 %v89
  %1568 = vmatpush2.msra.mxu0 %v88
  %1569 = vmatprep.subr.mxu0 %v87
  %1570 = vmatpush2.msra.mxu0 %v86
  %1571 = vmatprep.subr.mxu0 %v85
  %1572 = vmatpush2.msra.mxu0 %v84
  %1573 = vmatprep.subr.mxu0 %v83
  %1574 = vmatpush2.msra.mxu0 %v82
  %1575 = vmatprep.subr.mxu0 %v81
  %1576 = vmatpush2.msra.mxu0 %v80
  %1577 = vmatprep.subr.mxu0 %v79
  %1578 = vmatpush2.msra.mxu0 %v78
  %1579 = vmatprep.subr.mxu0 %v77
  %1580 = vmatpush2.msra.mxu0 %v76
  %1581 = vmatprep.subr.mxu0 %v75
  %1582 = vmatpush2.msra.mxu0 %v74
  %1583 = vmatprep.subr.mxu0 %v73
  %1584 = vmatpush2.msra.mxu0 %v72
  %1585 = vmatprep.subr.mxu0 %v71
  %1586 = vmatpush2.msra.mxu0 %v70
  %1587 = vmatprep.subr.mxu0 %v69
  %1588 = vmatpush2.msra.mxu0 %v68
  %1589 = vmatprep.subr.mxu0 %v67
  %1590 = vmatpush2.msra.mxu0 %v66
  %1591 = vmatprep.mubr.f32.mxu0 %v1526
  %1592 = vmatmul.mubr.f32.gmra.mxu0 %v1525
  %v1593 = vpop.f32.mrf.mxu0
  %v1594 = vadd.f32 0.0, %v1593
  %v1595 = vpop.f32.mrf.mxu0
  %v1596 = vadd.f32 0.0, %v1595
  %1597 = vdwg.mxu0
  %v1598 = vadd.f32 %v503, %v1594
  %v1599 = vadd.f32 %v504, %v1596
  %v1600 = vmul.f32 %v1598, 0.5
  %v1601 = vmul.f32 %v1599, 0.5
  %v1602 = vtanh.pop %v1600
  %v1603 = vtanh.pop %v1601
  %v1604 = vmul.f32 %v1602, 0.5
  %v1605 = vmul.f32 %v1603, 0.5
  %v1606 = vadd.f32 %v1604, 0.5
  %v1607 = vadd.f32 %v1605, 0.5
  %1608 = vmatprep.subr.mxu0 %v130
  %1609 = vmatpush1.msra.mxu0 %v129
  %1610 = vmatprep.subr.mxu0 %v128
  %1611 = vmatpush1.msra.mxu0 %v127
  %1612 = vmatprep.subr.mxu0 %v126
  %1613 = vmatpush1.msra.mxu0 %v125
  %1614 = vmatprep.subr.mxu0 %v124
  %1615 = vmatpush1.msra.mxu0 %v123
  %1616 = vmatprep.subr.mxu0 %v122
  %1617 = vmatpush1.msra.mxu0 %v121
  %1618 = vmatprep.subr.mxu0 %v120
  %1619 = vmatpush1.msra.mxu0 %v119
  %1620 = vmatprep.subr.mxu0 %v118
  %1621 = vmatpush1.msra.mxu0 %v117
  %1622 = vmatprep.subr.mxu0 %v116
  %1623 = vmatpush1.msra.mxu0 %v115
  %1624 = vmatprep.subr.mxu0 %v114
  %1625 = vmatpush1.msra.mxu0 %v113
  %1626 = vmatprep.subr.mxu0 %v112
  %1627 = vmatpush1.msra.mxu0 %v111
  %1628 = vmatprep.subr.mxu0 %v110
  %1629 = vmatpush1.msra.mxu0 %v109
  %1630 = vmatprep.subr.mxu0 %v108
  %1631 = vmatpush1.msra.mxu0 %v107
  %1632 = vmatprep.subr.mxu0 %v106
  %1633 = vmatpush1.msra.mxu0 %v105
  %1634 = vmatprep.subr.mxu0 %v104
  %1635 = vmatpush1.msra.mxu0 %v103
  %1636 = vmatprep.subr.mxu0 %v102
  %1637 = vmatpush1.msra.mxu0 %v101
  %1638 = vmatprep.subr.mxu0 %v100
  %1639 = vmatpush1.msra.mxu0 %v99
  %1640 = vmatprep.subr.mxu0 %v162
  %1641 = vmatpush2.msra.mxu0 %v161
  %1642 = vmatprep.subr.mxu0 %v160
  %1643 = vmatpush2.msra.mxu0 %v159
  %1644 = vmatprep.subr.mxu0 %v158
  %1645 = vmatpush2.msra.mxu0 %v157
  %1646 = vmatprep.subr.mxu0 %v156
  %1647 = vmatpush2.msra.mxu0 %v155
  %1648 = vmatprep.subr.mxu0 %v154
  %1649 = vmatpush2.msra.mxu0 %v153
  %1650 = vmatprep.subr.mxu0 %v152
  %1651 = vmatpush2.msra.mxu0 %v151
  %1652 = vmatprep.subr.mxu0 %v150
  %1653 = vmatpush2.msra.mxu0 %v149
  %1654 = vmatprep.subr.mxu0 %v148
  %1655 = vmatpush2.msra.mxu0 %v147
  %1656 = vmatprep.subr.mxu0 %v146
  %1657 = vmatpush2.msra.mxu0 %v145
  %1658 = vmatprep.subr.mxu0 %v144
  %1659 = vmatpush2.msra.mxu0 %v143
  %1660 = vmatprep.subr.mxu0 %v142
  %1661 = vmatpush2.msra.mxu0 %v141
  %1662 = vmatprep.subr.mxu0 %v140
  %1663 = vmatpush2.msra.mxu0 %v139
  %1664 = vmatprep.subr.mxu0 %v138
  %1665 = vmatpush2.msra.mxu0 %v137
  %1666 = vmatprep.subr.mxu0 %v136
  %1667 = vmatpush2.msra.mxu0 %v135
  %1668 = vmatprep.subr.mxu0 %v134
  %1669 = vmatpush2.msra.mxu0 %v133
  %1670 = vmatprep.subr.mxu0 %v132
  %1671 = vmatpush2.msra.mxu0 %v131
  %1672 = vmatprep.mubr.f32.mxu0 %v1526
  %1673 = vmatmul.mubr.f32.gmra.mxu0 %v1525
  %v1674 = vpop.f32.mrf.mxu0
  %v1675 = vadd.f32 0.0, %v1674
  %v1676 = vpop.f32.mrf.mxu0
  %v1677 = vadd.f32 0.0, %v1676
  %1678 = vdwg.mxu0
  %v1679 = vadd.f32 %v505, %v1675
  %v1680 = vadd.f32 %v506, %v1677
  %v1681 = vmul.f32 %v1679, 0.5
  %v1682 = vmul.f32 %v1680, 0.5
  %v1683 = vtanh.pop %v1681
  %v1684 = vtanh.pop %v1682
  %v1685 = vmul.f32 %v1683, 0.5
  %v1686 = vmul.f32 %v1684, 0.5
  %v1687 = vadd.f32 %v1685, 0.5
  %v1688 = vadd.f32 %v1686, 0.5
  %1689 = vmatprep.subr.mxu0 %v195
  %1690 = vmatpush1.msra.mxu0 %v194
  %1691 = vmatprep.subr.mxu0 %v193
  %1692 = vmatpush1.msra.mxu0 %v192
  %1693 = vmatprep.subr.mxu0 %v191
  %1694 = vmatpush1.msra.mxu0 %v190
  %1695 = vmatprep.subr.mxu0 %v189
  %1696 = vmatpush1.msra.mxu0 %v188
  %1697 = vmatprep.subr.mxu0 %v187
  %1698 = vmatpush1.msra.mxu0 %v186
  %1699 = vmatprep.subr.mxu0 %v185
  %1700 = vmatpush1.msra.mxu0 %v184
  %1701 = vmatprep.subr.mxu0 %v183
  %1702 = vmatpush1.msra.mxu0 %v182
  %1703 = vmatprep.subr.mxu0 %v181
  %1704 = vmatpush1.msra.mxu0 %v180
  %1705 = vmatprep.subr.mxu0 %v179
  %1706 = vmatpush1.msra.mxu0 %v178
  %1707 = vmatprep.subr.mxu0 %v177
  %1708 = vmatpush1.msra.mxu0 %v176
  %1709 = vmatprep.subr.mxu0 %v175
  %1710 = vmatpush1.msra.mxu0 %v174
  %1711 = vmatprep.subr.mxu0 %v173
  %1712 = vmatpush1.msra.mxu0 %v172
  %1713 = vmatprep.subr.mxu0 %v171
  %1714 = vmatpush1.msra.mxu0 %v170
  %1715 = vmatprep.subr.mxu0 %v169
  %1716 = vmatpush1.msra.mxu0 %v168
  %1717 = vmatprep.subr.mxu0 %v167
  %1718 = vmatpush1.msra.mxu0 %v166
  %1719 = vmatprep.subr.mxu0 %v165
  %1720 = vmatpush1.msra.mxu0 %v164
  %1721 = vmatprep.subr.mxu0 %v227
  %1722 = vmatpush2.msra.mxu0 %v226
  %1723 = vmatprep.subr.mxu0 %v225
  %1724 = vmatpush2.msra.mxu0 %v224
  %1725 = vmatprep.subr.mxu0 %v223
  %1726 = vmatpush2.msra.mxu0 %v222
  %1727 = vmatprep.subr.mxu0 %v221
  %1728 = vmatpush2.msra.mxu0 %v220
  %1729 = vmatprep.subr.mxu0 %v219
  %1730 = vmatpush2.msra.mxu0 %v218
  %1731 = vmatprep.subr.mxu0 %v217
  %1732 = vmatpush2.msra.mxu0 %v216
  %1733 = vmatprep.subr.mxu0 %v215
  %1734 = vmatpush2.msra.mxu0 %v214
  %1735 = vmatprep.subr.mxu0 %v213
  %1736 = vmatpush2.msra.mxu0 %v212
  %1737 = vmatprep.subr.mxu0 %v211
  %1738 = vmatpush2.msra.mxu0 %v210
  %1739 = vmatprep.subr.mxu0 %v209
  %1740 = vmatpush2.msra.mxu0 %v208
  %1741 = vmatprep.subr.mxu0 %v207
  %1742 = vmatpush2.msra.mxu0 %v206
  %1743 = vmatprep.subr.mxu0 %v205
  %1744 = vmatpush2.msra.mxu0 %v204
  %1745 = vmatprep.subr.mxu0 %v203
  %1746 = vmatpush2.msra.mxu0 %v202
  %1747 = vmatprep.subr.mxu0 %v201
  %1748 = vmatpush2.msra.mxu0 %v200
  %1749 = vmatprep.subr.mxu0 %v199
  %1750 = vmatpush2.msra.mxu0 %v198
  %1751 = vmatprep.subr.mxu0 %v197
  %1752 = vmatpush2.msra.mxu0 %v196
  %1753 = vmatprep.mubr.f32.mxu0 %v1526
  %1754 = vmatmul.mubr.f32.gmra.mxu0 %v1525
  %v1755 = vpop.f32.mrf.mxu0
  %v1756 = vadd.f32 0.0, %v1755
  %v1757 = vpop.f32.mrf.mxu0
  %v1758 = vadd.f32 0.0, %v1757
  %1759 = vdwg.mxu0
  %v1760 = vadd.f32 %v507, %v1756
  %v1761 = vadd.f32 %v508, %v1758
  %v1762 = vtanh.pop %v1760
  %v1763 = vtanh.pop %v1761
  %1764 = vmatprep.subr.mxu0 %v260
  %1765 = vmatpush1.msra.mxu0 %v259
  %1766 = vmatprep.subr.mxu0 %v258
  %1767 = vmatpush1.msra.mxu0 %v257
  %1768 = vmatprep.subr.mxu0 %v256
  %1769 = vmatpush1.msra.mxu0 %v255
  %1770 = vmatprep.subr.mxu0 %v254
  %1771 = vmatpush1.msra.mxu0 %v253
  %1772 = vmatprep.subr.mxu0 %v252
  %1773 = vmatpush1.msra.mxu0 %v251
  %1774 = vmatprep.subr.mxu0 %v250
  %1775 = vmatpush1.msra.mxu0 %v249
  %1776 = vmatprep.subr.mxu0 %v248
  %1777 = vmatpush1.msra.mxu0 %v247
  %1778 = vmatprep.subr.mxu0 %v246
  %1779 = vmatpush1.msra.mxu0 %v245
  %1780 = vmatprep.subr.mxu0 %v244
  %1781 = vmatpush1.msra.mxu0 %v243
  %1782 = vmatprep.subr.mxu0 %v242
  %1783 = vmatpush1.msra.mxu0 %v241
  %1784 = vmatprep.subr.mxu0 %v240
  %1785 = vmatpush1.msra.mxu0 %v239
  %1786 = vmatprep.subr.mxu0 %v238
  %1787 = vmatpush1.msra.mxu0 %v237
  %1788 = vmatprep.subr.mxu0 %v236
  %1789 = vmatpush1.msra.mxu0 %v235
  %1790 = vmatprep.subr.mxu0 %v234
  %1791 = vmatpush1.msra.mxu0 %v233
  %1792 = vmatprep.subr.mxu0 %v232
  %1793 = vmatpush1.msra.mxu0 %v231
  %1794 = vmatprep.subr.mxu0 %v230
  %1795 = vmatpush1.msra.mxu0 %v229
  %1796 = vmatprep.subr.mxu0 %v292
  %1797 = vmatpush2.msra.mxu0 %v291
  %1798 = vmatprep.subr.mxu0 %v290
  %1799 = vmatpush2.msra.mxu0 %v289
  %1800 = vmatprep.subr.mxu0 %v288
  %1801 = vmatpush2.msra.mxu0 %v287
  %1802 = vmatprep.subr.mxu0 %v286
  %1803 = vmatpush2.msra.mxu0 %v285
  %1804 = vmatprep.subr.mxu0 %v284
  %1805 = vmatpush2.msra.mxu0 %v283
  %1806 = vmatprep.subr.mxu0 %v282
  %1807 = vmatpush2.msra.mxu0 %v281
  %1808 = vmatprep.subr.mxu0 %v280
  %1809 = vmatpush2.msra.mxu0 %v279
  %1810 = vmatprep.subr.mxu0 %v278
  %1811 = vmatpush2.msra.mxu0 %v277
  %1812 = vmatprep.subr.mxu0 %v276
  %1813 = vmatpush2.msra.mxu0 %v275
  %1814 = vmatprep.subr.mxu0 %v274
  %1815 = vmatpush2.msra.mxu0 %v273
  %1816 = vmatprep.subr.mxu0 %v272
  %1817 = vmatpush2.msra.mxu0 %v271
  %1818 = vmatprep.subr.mxu0 %v270
  %1819 = vmatpush2.msra.mxu0 %v269
  %1820 = vmatprep.subr.mxu0 %v268
  %1821 = vmatpush2.msra.mxu0 %v267
  %1822 = vmatprep.subr.mxu0 %v266
  %1823 = vmatpush2.msra.mxu0 %v265
  %1824 = vmatprep.subr.mxu0 %v264
  %1825 = vmatpush2.msra.mxu0 %v263
  %1826 = vmatprep.subr.mxu0 %v262
  %1827 = vmatpush2.msra.mxu0 %v261
  %1828 = vmatprep.mubr.f32.mxu0 %v1526
  %1829 = vmatmul.mubr.f32.gmra.mxu0 %v1525
  %v1830 = vpop.f32.mrf.mxu0
  %v1831 = vadd.f32 0.0, %v1830
  %v1832 = vpop.f32.mrf.mxu0
  %v1833 = vadd.f32 0.0, %v1832
  %1834 = vdwg.mxu0
  %v1835 = vadd.f32 %v509, %v1831
  %v1836 = vadd.f32 %v510, %v1833
  %v1837 = vmul.f32 %v1835, 0.5
  %v1838 = vmul.f32 %v1836, 0.5
  %v1839 = vtanh.pop %v1837
  %v1840 = vtanh.pop %v1838
  %v1841 = vmul.f32 %v1839, 0.5
  %v1842 = vmul.f32 %v1840, 0.5
  %v1843 = vadd.f32 %v1841, 0.5
  %v1844 = vadd.f32 %v1842, 0.5
  %v1845 = vmul.f32 %v1687, %v1521
  %v1846 = vmul.f32 %v1688, %v1522
  %v1847 = vmul.f32 %v1606, %v1762
  %v1848 = vmul.f32 %v1607, %v1763
  %v1849 = vadd.f32 %v1845, %v1847
  %v1850 = vadd.f32 %v1846, %v1848
  %v1851 = vtanh.pop %v1849
  %v1852 = vtanh.pop %v1850
  %v1853 = vmul.f32 %v1843, %v1851
  %v1854 = vmul.f32 %v1844, %v1852
  %1855 = vmatprep.subr.mxu0 %v65
  %1856 = vmatpush1.msra.mxu0 %v64
  %1857 = vmatprep.subr.mxu0 %v63
  %1858 = vmatpush1.msra.mxu0 %v62
  %1859 = vmatprep.subr.mxu0 %v61
  %1860 = vmatpush1.msra.mxu0 %v60
  %1861 = vmatprep.subr.mxu0 %v59
  %1862 = vmatpush1.msra.mxu0 %v58
  %1863 = vmatprep.subr.mxu0 %v57
  %1864 = vmatpush1.msra.mxu0 %v56
  %1865 = vmatprep.subr.mxu0 %v55
  %1866 = vmatpush1.msra.mxu0 %v54
  %1867 = vmatprep.subr.mxu0 %v53
  %1868 = vmatpush1.msra.mxu0 %v52
  %1869 = vmatprep.subr.mxu0 %v51
  %1870 = vmatpush1.msra.mxu0 %v50
  %1871 = vmatprep.subr.mxu0 %v49
  %1872 = vmatpush1.msra.mxu0 %v48
  %1873 = vmatprep.subr.mxu0 %v47
  %1874 = vmatpush1.msra.mxu0 %v46
  %1875 = vmatprep.subr.mxu0 %v45
  %1876 = vmatpush1.msra.mxu0 %v44
  %1877 = vmatprep.subr.mxu0 %v43
  %1878 = vmatpush1.msra.mxu0 %v42
  %1879 = vmatprep.subr.mxu0 %v41
  %1880 = vmatpush1.msra.mxu0 %v40
  %1881 = vmatprep.subr.mxu0 %v39
  %1882 = vmatpush1.msra.mxu0 %v38
  %1883 = vmatprep.subr.mxu0 %v37
  %1884 = vmatpush1.msra.mxu0 %v36
  %1885 = vmatprep.subr.mxu0 %v35
  %1886 = vmatpush1.msra.mxu0 %v34
  %1887 = vmatprep.subr.mxu0 %v97
  %1888 = vmatpush2.msra.mxu0 %v96
  %1889 = vmatprep.subr.mxu0 %v95
  %1890 = vmatpush2.msra.mxu0 %v94
  %1891 = vmatprep.subr.mxu0 %v93
  %1892 = vmatpush2.msra.mxu0 %v92
  %1893 = vmatprep.subr.mxu0 %v91
  %1894 = vmatpush2.msra.mxu0 %v90
  %1895 = vmatprep.subr.mxu0 %v89
  %1896 = vmatpush2.msra.mxu0 %v88
  %1897 = vmatprep.subr.mxu0 %v87
  %1898 = vmatpush2.msra.mxu0 %v86
  %1899 = vmatprep.subr.mxu0 %v85
  %1900 = vmatpush2.msra.mxu0 %v84
  %1901 = vmatprep.subr.mxu0 %v83
  %1902 = vmatpush2.msra.mxu0 %v82
  %1903 = vmatprep.subr.mxu0 %v81
  %1904 = vmatpush2.msra.mxu0 %v80
  %1905 = vmatprep.subr.mxu0 %v79
  %1906 = vmatpush2.msra.mxu0 %v78
  %1907 = vmatprep.subr.mxu0 %v77
  %1908 = vmatpush2.msra.mxu0 %v76
  %1909 = vmatprep.subr.mxu0 %v75
  %1910 = vmatpush2.msra.mxu0 %v74
  %1911 = vmatprep.subr.mxu0 %v73
  %1912 = vmatpush2.msra.mxu0 %v72
  %1913 = vmatprep.subr.mxu0 %v71
  %1914 = vmatpush2.msra.mxu0 %v70
  %1915 = vmatprep.subr.mxu0 %v69
  %1916 = vmatpush2.msra.mxu0 %v68
  %1917 = vmatprep.subr.mxu0 %v67
  %1918 = vmatpush2.msra.mxu0 %v66
  %1919 = vmatprep.mubr.f32.mxu0 %v1854
  %1920 = vmatmul.mubr.f32.gmra.mxu0 %v1853
  %v1921 = vpop.f32.mrf.mxu0
  %v1922 = vadd.f32 0.0, %v1921
  %v1923 = vpop.f32.mrf.mxu0
  %v1924 = vadd.f32 0.0, %v1923
  %1925 = vdwg.mxu0
  %v1926 = vadd.f32 %v511, %v1922
  %v1927 = vadd.f32 %v512, %v1924
  %v1928 = vmul.f32 %v1926, 0.5
  %v1929 = vmul.f32 %v1927, 0.5
  %v1930 = vtanh.pop %v1928
  %v1931 = vtanh.pop %v1929
  %v1932 = vmul.f32 %v1930, 0.5
  %v1933 = vmul.f32 %v1931, 0.5
  %v1934 = vadd.f32 %v1932, 0.5
  %v1935 = vadd.f32 %v1933, 0.5
  %1936 = vmatprep.subr.mxu0 %v130
  %1937 = vmatpush1.msra.mxu0 %v129
  %1938 = vmatprep.subr.mxu0 %v128
  %1939 = vmatpush1.msra.mxu0 %v127
  %1940 = vmatprep.subr.mxu0 %v126
  %1941 = vmatpush1.msra.mxu0 %v125
  %1942 = vmatprep.subr.mxu0 %v124
  %1943 = vmatpush1.msra.mxu0 %v123
  %1944 = vmatprep.subr.mxu0 %v122
  %1945 = vmatpush1.msra.mxu0 %v121
  %1946 = vmatprep.subr.mxu0 %v120
  %1947 = vmatpush1.msra.mxu0 %v119
  %1948 = vmatprep.subr.mxu0 %v118
  %1949 = vmatpush1.msra.mxu0 %v117
  %1950 = vmatprep.subr.mxu0 %v116
  %1951 = vmatpush1.msra.mxu0 %v115
  %1952 = vmatprep.subr.mxu0 %v114
  %1953 = vmatpush1.msra.mxu0 %v113
  %1954 = vmatprep.subr.mxu0 %v112
  %1955 = vmatpush1.msra.mxu0 %v111
  %1956 = vmatprep.subr.mxu0 %v110
  %1957 = vmatpush1.msra.mxu0 %v109
  %1958 = vmatprep.subr.mxu0 %v108
  %1959 = vmatpush1.msra.mxu0 %v107
  %1960 = vmatprep.subr.mxu0 %v106
  %1961 = vmatpush1.msra.mxu0 %v105
  %1962 = vmatprep.subr.mxu0 %v104
  %1963 = vmatpush1.msra.mxu0 %v103
  %1964 = vmatprep.subr.mxu0 %v102
  %1965 = vmatpush1.msra.mxu0 %v101
  %1966 = vmatprep.subr.mxu0 %v100
  %1967 = vmatpush1.msra.mxu0 %v99
  %1968 = vmatprep.subr.mxu0 %v162
  %1969 = vmatpush2.msra.mxu0 %v161
  %1970 = vmatprep.subr.mxu0 %v160
  %1971 = vmatpush2.msra.mxu0 %v159
  %1972 = vmatprep.subr.mxu0 %v158
  %1973 = vmatpush2.msra.mxu0 %v157
  %1974 = vmatprep.subr.mxu0 %v156
  %1975 = vmatpush2.msra.mxu0 %v155
  %1976 = vmatprep.subr.mxu0 %v154
  %1977 = vmatpush2.msra.mxu0 %v153
  %1978 = vmatprep.subr.mxu0 %v152
  %1979 = vmatpush2.msra.mxu0 %v151
  %1980 = vmatprep.subr.mxu0 %v150
  %1981 = vmatpush2.msra.mxu0 %v149
  %1982 = vmatprep.subr.mxu0 %v148
  %1983 = vmatpush2.msra.mxu0 %v147
  %1984 = vmatprep.subr.mxu0 %v146
  %1985 = vmatpush2.msra.mxu0 %v145
  %1986 = vmatprep.subr.mxu0 %v144
  %1987 = vmatpush2.msra.mxu0 %v143
  %1988 = vmatprep.subr.mxu0 %v142
  %1989 = vmatpush2.msra.mxu0 %v141
  %1990 = vmatprep.subr.mxu0 %v140
  %1991 = vmatpush2.msra.mxu0 %v139
  %1992 = vmatprep.subr.mxu0 %v138
  %1993 = vmatpush2.msra.mxu0 %v137
  %1994 = vmatprep.subr.mxu0 %v136
  %1995 = vmatpush2.msra.mxu0 %v135
  %1996 = vmatprep.subr.mxu0 %v134
  %1997 = vmatpush2.msra.mxu0 %v133
  %1998 = vmatprep.subr.mxu0 %v132
  %1999 = vmatpush2.msra.mxu0 %v131
  %2000 = vmatprep.mubr.f32.mxu0 %v1854
  %2001 = vmatmul.mubr.f32.gmra.mxu0 %v1853
  %v2002 = vpop.f32.mrf.mxu0
  %v2003 = vadd.f32 0.0, %v2002
  %v2004 = vpop.f32.mrf.mxu0
  %v2005 = vadd.f32 0.0, %v2004
  %2006 = vdwg.mxu0
  %v2007 = vadd.f32 %v513, %v2003
  %v2008 = vadd.f32 %v514, %v2005
  %v2009 = vmul.f32 %v2007, 0.5
  %v2010 = vmul.f32 %v2008, 0.5
  %v2011 = vtanh.pop %v2009
  %v2012 = vtanh.pop %v2010
  %v2013 = vmul.f32 %v2011, 0.5
  %v2014 = vmul.f32 %v2012, 0.5
  %v2015 = vadd.f32 %v2013, 0.5
  %v2016 = vadd.f32 %v2014, 0.5
  %2017 = vmatprep.subr.mxu0 %v195
  %2018 = vmatpush1.msra.mxu0 %v194
  %2019 = vmatprep.subr.mxu0 %v193
  %2020 = vmatpush1.msra.mxu0 %v192
  %2021 = vmatprep.subr.mxu0 %v191
  %2022 = vmatpush1.msra.mxu0 %v190
  %2023 = vmatprep.subr.mxu0 %v189
  %2024 = vmatpush1.msra.mxu0 %v188
  %2025 = vmatprep.subr.mxu0 %v187
  %2026 = vmatpush1.msra.mxu0 %v186
  %2027 = vmatprep.subr.mxu0 %v185
  %2028 = vmatpush1.msra.mxu0 %v184
  %2029 = vmatprep.subr.mxu0 %v183
  %2030 = vmatpush1.msra.mxu0 %v182
  %2031 = vmatprep.subr.mxu0 %v181
  %2032 = vmatpush1.msra.mxu0 %v180
  %2033 = vmatprep.subr.mxu0 %v179
  %2034 = vmatpush1.msra.mxu0 %v178
  %2035 = vmatprep.subr.mxu0 %v177
  %2036 = vmatpush1.msra.mxu0 %v176
  %2037 = vmatprep.subr.mxu0 %v175
  %2038 = vmatpush1.msra.mxu0 %v174
  %2039 = vmatprep.subr.mxu0 %v173
  %2040 = vmatpush1.msra.mxu0 %v172
  %2041 = vmatprep.subr.mxu0 %v171
  %2042 = vmatpush1.msra.mxu0 %v170
  %2043 = vmatprep.subr.mxu0 %v169
  %2044 = vmatpush1.msra.mxu0 %v168
  %2045 = vmatprep.subr.mxu0 %v167
  %2046 = vmatpush1.msra.mxu0 %v166
  %2047 = vmatprep.subr.mxu0 %v165
  %2048 = vmatpush1.msra.mxu0 %v164
  %2049 = vmatprep.subr.mxu0 %v227
  %2050 = vmatpush2.msra.mxu0 %v226
  %2051 = vmatprep.subr.mxu0 %v225
  %2052 = vmatpush2.msra.mxu0 %v224
  %2053 = vmatprep.subr.mxu0 %v223
  %2054 = vmatpush2.msra.mxu0 %v222
  %2055 = vmatprep.subr.mxu0 %v221
  %2056 = vmatpush2.msra.mxu0 %v220
  %2057 = vmatprep.subr.mxu0 %v219
  %2058 = vmatpush2.msra.mxu0 %v218
  %2059 = vmatprep.subr.mxu0 %v217
  %2060 = vmatpush2.msra.mxu0 %v216
  %2061 = vmatprep.subr.mxu0 %v215
  %2062 = vmatpush2.msra.mxu0 %v214
  %2063 = vmatprep.subr.mxu0 %v213
  %2064 = vmatpush2.msra.mxu0 %v212
  %2065 = vmatprep.subr.mxu0 %v211
  %2066 = vmatpush2.msra.mxu0 %v210
  %2067 = vmatprep.subr.mxu0 %v209
  %2068 = vmatpush2.msra.mxu0 %v208
  %2069 = vmatprep.subr.mxu0 %v207
  %2070 = vmatpush2.msra.mxu0 %v206
  %2071 = vmatprep.subr.mxu0 %v205
  %2072 = vmatpush2.msra.mxu0 %v204
  %2073 = vmatprep.subr.mxu0 %v203
  %2074 = vmatpush2.msra.mxu0 %v202
  %2075 = vmatprep.subr.mxu0 %v201
  %2076 = vmatpush2.msra.mxu0 %v200
  %2077 = vmatprep.subr.mxu0 %v199
  %2078 = vmatpush2.msra.mxu0 %v198
  %2079 = vmatprep.subr.mxu0 %v197
  %2080 = vmatpush2.msra.mxu0 %v196
  %2081 = vmatprep.mubr.f32.mxu0 %v1854
  %2082 = vmatmul.mubr.f32.gmra.mxu0 %v1853
  %v2083 = vpop.f32.mrf.mxu0
  %v2084 = vadd.f32 0.0, %v2083
  %v2085 = vpop.f32.mrf.mxu0
  %v2086 = vadd.f32 0.0, %v2085
  %2087 = vdwg.mxu0
  %v2088 = vadd.f32 %v515, %v2084
  %v2089 = vadd.f32 %v516, %v2086
  %v2090 = vtanh.pop %v2088
  %v2091 = vtanh.pop %v2089
  %2092 = vmatprep.subr.mxu0 %v260
  %2093 = vmatpush1.msra.mxu0 %v259
  %2094 = vmatprep.subr.mxu0 %v258
  %2095 = vmatpush1.msra.mxu0 %v257
  %2096 = vmatprep.subr.mxu0 %v256
  %2097 = vmatpush1.msra.mxu0 %v255
  %2098 = vmatprep.subr.mxu0 %v254
  %2099 = vmatpush1.msra.mxu0 %v253
  %2100 = vmatprep.subr.mxu0 %v252
  %2101 = vmatpush1.msra.mxu0 %v251
  %2102 = vmatprep.subr.mxu0 %v250
  %2103 = vmatpush1.msra.mxu0 %v249
  %2104 = vmatprep.subr.mxu0 %v248
  %2105 = vmatpush1.msra.mxu0 %v247
  %2106 = vmatprep.subr.mxu0 %v246
  %2107 = vmatpush1.msra.mxu0 %v245
  %2108 = vmatprep.subr.mxu0 %v244
  %2109 = vmatpush1.msra.mxu0 %v243
  %2110 = vmatprep.subr.mxu0 %v242
  %2111 = vmatpush1.msra.mxu0 %v241
  %2112 = vmatprep.subr.mxu0 %v240
  %2113 = vmatpush1.msra.mxu0 %v239
  %2114 = vmatprep.subr.mxu0 %v238
  %2115 = vmatpush1.msra.mxu0 %v237
  %2116 = vmatprep.subr.mxu0 %v236
  %2117 = vmatpush1.msra.mxu0 %v235
  %2118 = vmatprep.subr.mxu0 %v234
  %2119 = vmatpush1.msra.mxu0 %v233
  %2120 = vmatprep.subr.mxu0 %v232
  %2121 = vmatpush1.msra.mxu0 %v231
  %2122 = vmatprep.subr.mxu0 %v230
  %2123 = vmatpush1.msra.mxu0 %v229
  %2124 = vmatprep.subr.mxu0 %v292
  %2125 = vmatpush2.msra.mxu0 %v291
  %2126 = vmatprep.subr.mxu0 %v290
  %2127 = vmatpush2.msra.mxu0 %v289
  %2128 = vmatprep.subr.mxu0 %v288
  %2129 = vmatpush2.msra.mxu0 %v287
  %2130 = vmatprep.subr.mxu0 %v286
  %2131 = vmatpush2.msra.mxu0 %v285
  %2132 = vmatprep.subr.mxu0 %v284
  %2133 = vmatpush2.msra.mxu0 %v283
  %2134 = vmatprep.subr.mxu0 %v282
  %2135 = vmatpush2.msra.mxu0 %v281
  %2136 = vmatprep.subr.mxu0 %v280
  %2137 = vmatpush2.msra.mxu0 %v279
  %2138 = vmatprep.subr.mxu0 %v278
  %2139 = vmatpush2.msra.mxu0 %v277
  %2140 = vmatprep.subr.mxu0 %v276
  %2141 = vmatpush2.msra.mxu0 %v275
  %2142 = vmatprep.subr.mxu0 %v274
  %2143 = vmatpush2.msra.mxu0 %v273
  %2144 = vmatprep.subr.mxu0 %v272
  %2145 = vmatpush2.msra.mxu0 %v271
  %2146 = vmatprep.subr.mxu0 %v270
  %2147 = vmatpush2.msra.mxu0 %v269
  %2148 = vmatprep.subr.mxu0 %v268
  %2149 = vmatpush2.msra.mxu0 %v267
  %2150 = vmatprep.subr.mxu0 %v266
  %2151 = vmatpush2.msra.mxu0 %v265
  %2152 = vmatprep.subr.mxu0 %v264
  %2153 = vmatpush2.msra.mxu0 %v263
  %2154 = vmatprep.subr.mxu0 %v262
  %2155 = vmatpush2.msra.mxu0 %v261
  %2156 = vmatprep.mubr.f32.mxu0 %v1854
  %2157 = vmatmul.mubr.f32.gmra.mxu0 %v1853
  %v2158 = vpop.f32.mrf.mxu0
  %v2159 = vadd.f32 0.0, %v2158
  %v2160 = vpop.f32.mrf.mxu0
  %v2161 = vadd.f32 0.0, %v2160
  %2162 = vdwg.mxu0
  %v2163 = vadd.f32 %v517, %v2159
  %v2164 = vadd.f32 %v518, %v2161
  %v2165 = vmul.f32 %v2163, 0.5
  %v2166 = vmul.f32 %v2164, 0.5
  %v2167 = vtanh.pop %v2165
  %v2168 = vtanh.pop %v2166
  %v2169 = vmul.f32 %v2167, 0.5
  %v2170 = vmul.f32 %v2168, 0.5
  %v2171 = vadd.f32 %v2169, 0.5
  %v2172 = vadd.f32 %v2170, 0.5
  %v2173 = vmul.f32 %v2015, %v1849
  %v2174 = vmul.f32 %v2016, %v1850
  %v2175 = vmul.f32 %v1934, %v2090
  %v2176 = vmul.f32 %v1935, %v2091
  %v2177 = vadd.f32 %v2173, %v2175
  %v2178 = vadd.f32 %v2174, %v2176
  %v2179 = vtanh.pop %v2177
  %v2180 = vtanh.pop %v2178
  %v2181 = vmul.f32 %v2171, %v2179
  %v2182 = vmul.f32 %v2172, %v2180
  %2183 = vmatprep.subr.mxu0 %v65
  %2184 = vmatpush1.msra.mxu0 %v64
  %2185 = vmatprep.subr.mxu0 %v63
  %2186 = vmatpush1.msra.mxu0 %v62
  %2187 = vmatprep.subr.mxu0 %v61
  %2188 = vmatpush1.msra.mxu0 %v60
  %2189 = vmatprep.subr.mxu0 %v59
  %2190 = vmatpush1.msra.mxu0 %v58
  %2191 = vmatprep.subr.mxu0 %v57
  %2192 = vmatpush1.msra.mxu0 %v56
  %2193 = vmatprep.subr.mxu0 %v55
  %2194 = vmatpush1.msra.mxu0 %v54
  %2195 = vmatprep.subr.mxu0 %v53
  %2196 = vmatpush1.msra.mxu0 %v52
  %2197 = vmatprep.subr.mxu0 %v51
  %2198 = vmatpush1.msra.mxu0 %v50
  %2199 = vmatprep.subr.mxu0 %v49
  %2200 = vmatpush1.msra.mxu0 %v48
  %2201 = vmatprep.subr.mxu0 %v47
  %2202 = vmatpush1.msra.mxu0 %v46
  %2203 = vmatprep.subr.mxu0 %v45
  %2204 = vmatpush1.msra.mxu0 %v44
  %2205 = vmatprep.subr.mxu0 %v43
  %2206 = vmatpush1.msra.mxu0 %v42
  %2207 = vmatprep.subr.mxu0 %v41
  %2208 = vmatpush1.msra.mxu0 %v40
  %2209 = vmatprep.subr.mxu0 %v39
  %2210 = vmatpush1.msra.mxu0 %v38
  %2211 = vmatprep.subr.mxu0 %v37
  %2212 = vmatpush1.msra.mxu0 %v36
  %2213 = vmatprep.subr.mxu0 %v35
  %2214 = vmatpush1.msra.mxu0 %v34
  %2215 = vmatprep.subr.mxu0 %v97
  %2216 = vmatpush2.msra.mxu0 %v96
  %2217 = vmatprep.subr.mxu0 %v95
  %2218 = vmatpush2.msra.mxu0 %v94
  %2219 = vmatprep.subr.mxu0 %v93
  %2220 = vmatpush2.msra.mxu0 %v92
  %2221 = vmatprep.subr.mxu0 %v91
  %2222 = vmatpush2.msra.mxu0 %v90
  %2223 = vmatprep.subr.mxu0 %v89
  %2224 = vmatpush2.msra.mxu0 %v88
  %2225 = vmatprep.subr.mxu0 %v87
  %2226 = vmatpush2.msra.mxu0 %v86
  %2227 = vmatprep.subr.mxu0 %v85
  %2228 = vmatpush2.msra.mxu0 %v84
  %2229 = vmatprep.subr.mxu0 %v83
  %2230 = vmatpush2.msra.mxu0 %v82
  %2231 = vmatprep.subr.mxu0 %v81
  %2232 = vmatpush2.msra.mxu0 %v80
  %2233 = vmatprep.subr.mxu0 %v79
  %2234 = vmatpush2.msra.mxu0 %v78
  %2235 = vmatprep.subr.mxu0 %v77
  %2236 = vmatpush2.msra.mxu0 %v76
  %2237 = vmatprep.subr.mxu0 %v75
  %2238 = vmatpush2.msra.mxu0 %v74
  %2239 = vmatprep.subr.mxu0 %v73
  %2240 = vmatpush2.msra.mxu0 %v72
  %2241 = vmatprep.subr.mxu0 %v71
  %2242 = vmatpush2.msra.mxu0 %v70
  %2243 = vmatprep.subr.mxu0 %v69
  %2244 = vmatpush2.msra.mxu0 %v68
  %2245 = vmatprep.subr.mxu0 %v67
  %2246 = vmatpush2.msra.mxu0 %v66
  %2247 = vmatprep.mubr.f32.mxu0 %v2182
  %2248 = vmatmul.mubr.f32.gmra.mxu0 %v2181
  %v2249 = vpop.f32.mrf.mxu0
  %v2250 = vadd.f32 0.0, %v2249
  %v2251 = vpop.f32.mrf.mxu0
  %v2252 = vadd.f32 0.0, %v2251
  %2253 = vdwg.mxu0
  %v2254 = vadd.f32 %v519, %v2250
  %v2255 = vadd.f32 %v520, %v2252
  %v2256 = vmul.f32 %v2254, 0.5
  %v2257 = vmul.f32 %v2255, 0.5
  %v2258 = vtanh.pop %v2256
  %v2259 = vtanh.pop %v2257
  %v2260 = vmul.f32 %v2258, 0.5
  %v2261 = vmul.f32 %v2259, 0.5
  %v2262 = vadd.f32 %v2260, 0.5
  %v2263 = vadd.f32 %v2261, 0.5
  %2264 = vmatprep.subr.mxu0 %v130
  %2265 = vmatpush1.msra.mxu0 %v129
  %2266 = vmatprep.subr.mxu0 %v128
  %2267 = vmatpush1.msra.mxu0 %v127
  %2268 = vmatprep.subr.mxu0 %v126
  %2269 = vmatpush1.msra.mxu0 %v125
  %2270 = vmatprep.subr.mxu0 %v124
  %2271 = vmatpush1.msra.mxu0 %v123
  %2272 = vmatprep.subr.mxu0 %v122
  %2273 = vmatpush1.msra.mxu0 %v121
  %2274 = vmatprep.subr.mxu0 %v120
  %2275 = vmatpush1.msra.mxu0 %v119
  %2276 = vmatprep.subr.mxu0 %v118
  %2277 = vmatpush1.msra.mxu0 %v117
  %2278 = vmatprep.subr.mxu0 %v116
  %2279 = vmatpush1.msra.mxu0 %v115
  %2280 = vmatprep.subr.mxu0 %v114
  %2281 = vmatpush1.msra.mxu0 %v113
  %2282 = vmatprep.subr.mxu0 %v112
  %2283 = vmatpush1.msra.mxu0 %v111
  %2284 = vmatprep.subr.mxu0 %v110
  %2285 = vmatpush1.msra.mxu0 %v109
  %2286 = vmatprep.subr.mxu0 %v108
  %2287 = vmatpush1.msra.mxu0 %v107
  %2288 = vmatprep.subr.mxu0 %v106
  %2289 = vmatpush1.msra.mxu0 %v105
  %2290 = vmatprep.subr.mxu0 %v104
  %2291 = vmatpush1.msra.mxu0 %v103
  %2292 = vmatprep.subr.mxu0 %v102
  %2293 = vmatpush1.msra.mxu0 %v101
  %2294 = vmatprep.subr.mxu0 %v100
  %2295 = vmatpush1.msra.mxu0 %v99
  %2296 = vmatprep.subr.mxu0 %v162
  %2297 = vmatpush2.msra.mxu0 %v161
  %2298 = vmatprep.subr.mxu0 %v160
  %2299 = vmatpush2.msra.mxu0 %v159
  %2300 = vmatprep.subr.mxu0 %v158
  %2301 = vmatpush2.msra.mxu0 %v157
  %2302 = vmatprep.subr.mxu0 %v156
  %2303 = vmatpush2.msra.mxu0 %v155
  %2304 = vmatprep.subr.mxu0 %v154
  %2305 = vmatpush2.msra.mxu0 %v153
  %2306 = vmatprep.subr.mxu0 %v152
  %2307 = vmatpush2.msra.mxu0 %v151
  %2308 = vmatprep.subr.mxu0 %v150
  %2309 = vmatpush2.msra.mxu0 %v149
  %2310 = vmatprep.subr.mxu0 %v148
  %2311 = vmatpush2.msra.mxu0 %v147
  %2312 = vmatprep.subr.mxu0 %v146
  %2313 = vmatpush2.msra.mxu0 %v145
  %2314 = vmatprep.subr.mxu0 %v144
  %2315 = vmatpush2.msra.mxu0 %v143
  %2316 = vmatprep.subr.mxu0 %v142
  %2317 = vmatpush2.msra.mxu0 %v141
  %2318 = vmatprep.subr.mxu0 %v140
  %2319 = vmatpush2.msra.mxu0 %v139
  %2320 = vmatprep.subr.mxu0 %v138
  %2321 = vmatpush2.msra.mxu0 %v137
  %2322 = vmatprep.subr.mxu0 %v136
  %2323 = vmatpush2.msra.mxu0 %v135
  %2324 = vmatprep.subr.mxu0 %v134
  %2325 = vmatpush2.msra.mxu0 %v133
  %2326 = vmatprep.subr.mxu0 %v132
  %2327 = vmatpush2.msra.mxu0 %v131
  %2328 = vmatprep.mubr.f32.mxu0 %v2182
  %2329 = vmatmul.mubr.f32.gmra.mxu0 %v2181
  %v2330 = vpop.f32.mrf.mxu0
  %v2331 = vadd.f32 0.0, %v2330
  %v2332 = vpop.f32.mrf.mxu0
  %v2333 = vadd.f32 0.0, %v2332
  %2334 = vdwg.mxu0
  %v2335 = vadd.f32 %v521, %v2331
  %v2336 = vadd.f32 %v522, %v2333
  %v2337 = vmul.f32 %v2335, 0.5
  %v2338 = vmul.f32 %v2336, 0.5
  %v2339 = vtanh.pop %v2337
  %v2340 = vtanh.pop %v2338
  %v2341 = vmul.f32 %v2339, 0.5
  %v2342 = vmul.f32 %v2340, 0.5
  %v2343 = vadd.f32 %v2341, 0.5
  %v2344 = vadd.f32 %v2342, 0.5
  %2345 = vmatprep.subr.mxu0 %v195
  %2346 = vmatpush1.msra.mxu0 %v194
  %2347 = vmatprep.subr.mxu0 %v193
  %2348 = vmatpush1.msra.mxu0 %v192
  %2349 = vmatprep.subr.mxu0 %v191
  %2350 = vmatpush1.msra.mxu0 %v190
  %2351 = vmatprep.subr.mxu0 %v189
  %2352 = vmatpush1.msra.mxu0 %v188
  %2353 = vmatprep.subr.mxu0 %v187
  %2354 = vmatpush1.msra.mxu0 %v186
  %2355 = vmatprep.subr.mxu0 %v185
  %2356 = vmatpush1.msra.mxu0 %v184
  %2357 = vmatprep.subr.mxu0 %v183
  %2358 = vmatpush1.msra.mxu0 %v182
  %2359 = vmatprep.subr.mxu0 %v181
  %2360 = vmatpush1.msra.mxu0 %v180
  %2361 = vmatprep.subr.mxu0 %v179
  %2362 = vmatpush1.msra.mxu0 %v178
  %2363 = vmatprep.subr.mxu0 %v177
  %2364 = vmatpush1.msra.mxu0 %v176
  %2365 = vmatprep.subr.mxu0 %v175
  %2366 = vmatpush1.msra.mxu0 %v174
  %2367 = vmatprep.subr.mxu0 %v173
  %2368 = vmatpush1.msra.mxu0 %v172
  %2369 = vmatprep.subr.mxu0 %v171
  %2370 = vmatpush1.msra.mxu0 %v170
  %2371 = vmatprep.subr.mxu0 %v169
  %2372 = vmatpush1.msra.mxu0 %v168
  %2373 = vmatprep.subr.mxu0 %v167
  %2374 = vmatpush1.msra.mxu0 %v166
  %2375 = vmatprep.subr.mxu0 %v165
  %2376 = vmatpush1.msra.mxu0 %v164
  %2377 = vmatprep.subr.mxu0 %v227
  %2378 = vmatpush2.msra.mxu0 %v226
  %2379 = vmatprep.subr.mxu0 %v225
  %2380 = vmatpush2.msra.mxu0 %v224
  %2381 = vmatprep.subr.mxu0 %v223
  %2382 = vmatpush2.msra.mxu0 %v222
  %2383 = vmatprep.subr.mxu0 %v221
  %2384 = vmatpush2.msra.mxu0 %v220
  %2385 = vmatprep.subr.mxu0 %v219
  %2386 = vmatpush2.msra.mxu0 %v218
  %2387 = vmatprep.subr.mxu0 %v217
  %2388 = vmatpush2.msra.mxu0 %v216
  %2389 = vmatprep.subr.mxu0 %v215
  %2390 = vmatpush2.msra.mxu0 %v214
  %2391 = vmatprep.subr.mxu0 %v213
  %2392 = vmatpush2.msra.mxu0 %v212
  %2393 = vmatprep.subr.mxu0 %v211
  %2394 = vmatpush2.msra.mxu0 %v210
  %2395 = vmatprep.subr.mxu0 %v209
  %2396 = vmatpush2.msra.mxu0 %v208
  %2397 = vmatprep.subr.mxu0 %v207
  %2398 = vmatpush2.msra.mxu0 %v206
  %2399 = vmatprep.subr.mxu0 %v205
  %2400 = vmatpush2.msra.mxu0 %v204
  %2401 = vmatprep.subr.mxu0 %v203
  %2402 = vmatpush2.msra.mxu0 %v202
  %2403 = vmatprep.subr.mxu0 %v201
  %2404 = vmatpush2.msra.mxu0 %v200
  %2405 = vmatprep.subr.mxu0 %v199
  %2406 = vmatpush2.msra.mxu0 %v198
  %2407 = vmatprep.subr.mxu0 %v197
  %2408 = vmatpush2.msra.mxu0 %v196
  %2409 = vmatprep.mubr.f32.mxu0 %v2182
  %2410 = vmatmul.mubr.f32.gmra.mxu0 %v2181
  %v2411 = vpop.f32.mrf.mxu0
  %v2412 = vadd.f32 0.0, %v2411
  %v2413 = vpop.f32.mrf.mxu0
  %v2414 = vadd.f32 0.0, %v2413
  %2415 = vdwg.mxu0
  %v2416 = vadd.f32 %v523, %v2412
  %v2417 = vadd.f32 %v524, %v2414
  %v2418 = vtanh.pop %v2416
  %v2419 = vtanh.pop %v2417
  %2420 = vmatprep.subr.mxu0 %v260
  %2421 = vmatpush1.msra.mxu0 %v259
  %2422 = vmatprep.subr.mxu0 %v258
  %2423 = vmatpush1.msra.mxu0 %v257
  %2424 = vmatprep.subr.mxu0 %v256
  %2425 = vmatpush1.msra.mxu0 %v255
  %2426 = vmatprep.subr.mxu0 %v254
  %2427 = vmatpush1.msra.mxu0 %v253
  %2428 = vmatprep.subr.mxu0 %v252
  %2429 = vmatpush1.msra.mxu0 %v251
  %2430 = vmatprep.subr.mxu0 %v250
  %2431 = vmatpush1.msra.mxu0 %v249
  %2432 = vmatprep.subr.mxu0 %v248
  %2433 = vmatpush1.msra.mxu0 %v247
  %2434 = vmatprep.subr.mxu0 %v246
  %2435 = vmatpush1.msra.mxu0 %v245
  %2436 = vmatprep.subr.mxu0 %v244
  %2437 = vmatpush1.msra.mxu0 %v243
  %2438 = vmatprep.subr.mxu0 %v242
  %2439 = vmatpush1.msra.mxu0 %v241
  %2440 = vmatprep.subr.mxu0 %v240
  %2441 = vmatpush1.msra.mxu0 %v239
  %2442 = vmatprep.subr.mxu0 %v238
  %2443 = vmatpush1.msra.mxu0 %v237
  %2444 = vmatprep.subr.mxu0 %v236
  %2445 = vmatpush1.msra.mxu0 %v235
  %2446 = vmatprep.subr.mxu0 %v234
  %2447 = vmatpush1.msra.mxu0 %v233
  %2448 = vmatprep.subr.mxu0 %v232
  %2449 = vmatpush1.msra.mxu0 %v231
  %2450 = vmatprep.subr.mxu0 %v230
  %2451 = vmatpush1.msra.mxu0 %v229
  %2452 = vmatprep.subr.mxu0 %v292
  %2453 = vmatpush2.msra.mxu0 %v291
  %2454 = vmatprep.subr.mxu0 %v290
  %2455 = vmatpush2.msra.mxu0 %v289
  %2456 = vmatprep.subr.mxu0 %v288
  %2457 = vmatpush2.msra.mxu0 %v287
  %2458 = vmatprep.subr.mxu0 %v286
  %2459 = vmatpush2.msra.mxu0 %v285
  %2460 = vmatprep.subr.mxu0 %v284
  %2461 = vmatpush2.msra.mxu0 %v283
  %2462 = vmatprep.subr.mxu0 %v282
  %2463 = vmatpush2.msra.mxu0 %v281
  %2464 = vmatprep.subr.mxu0 %v280
  %2465 = vmatpush2.msra.mxu0 %v279
  %2466 = vmatprep.subr.mxu0 %v278
  %2467 = vmatpush2.msra.mxu0 %v277
  %2468 = vmatprep.subr.mxu0 %v276
  %2469 = vmatpush2.msra.mxu0 %v275
  %2470 = vmatprep.subr.mxu0 %v274
  %2471 = vmatpush2.msra.mxu0 %v273
  %2472 = vmatprep.subr.mxu0 %v272
  %2473 = vmatpush2.msra.mxu0 %v271
  %2474 = vmatprep.subr.mxu0 %v270
  %2475 = vmatpush2.msra.mxu0 %v269
  %2476 = vmatprep.subr.mxu0 %v268
  %2477 = vmatpush2.msra.mxu0 %v267
  %2478 = vmatprep.subr.mxu0 %v266
  %2479 = vmatpush2.msra.mxu0 %v265
  %2480 = vmatprep.subr.mxu0 %v264
  %2481 = vmatpush2.msra.mxu0 %v263
  %2482 = vmatprep.subr.mxu0 %v262
  %2483 = vmatpush2.msra.mxu0 %v261
  %2484 = vmatprep.mubr.f32.mxu0 %v2182
  %2485 = vmatmul.mubr.f32.gmra.mxu0 %v2181
  %v2486 = vpop.f32.mrf.mxu0
  %v2487 = vadd.f32 0.0, %v2486
  %v2488 = vpop.f32.mrf.mxu0
  %v2489 = vadd.f32 0.0, %v2488
  %2490 = vdwg.mxu0
  %v2491 = vadd.f32 %v525, %v2487
  %v2492 = vadd.f32 %v526, %v2489
  %v2493 = vmul.f32 %v2491, 0.5
  %v2494 = vmul.f32 %v2492, 0.5
  %v2495 = vtanh.pop %v2493
  %v2496 = vtanh.pop %v2494
  %v2497 = vmul.f32 %v2495, 0.5
  %v2498 = vmul.f32 %v2496, 0.5
  %v2499 = vadd.f32 %v2497, 0.5
  %v2500 = vadd.f32 %v2498, 0.5
  %v2501 = vmul.f32 %v2343, %v2177
  %v2502 = vmul.f32 %v2344, %v2178
  %v2503 = vmul.f32 %v2262, %v2418
  %v2504 = vmul.f32 %v2263, %v2419
  %v2505 = vadd.f32 %v2501, %v2503
  %v2506 = vadd.f32 %v2502, %v2504
  %v2507 = vtanh.pop %v2505
  %v2508 = vtanh.pop %v2506
  %v2509 = vmul.f32 %v2499, %v2507
  %v2510 = vmul.f32 %v2500, %v2508
  %2511 = vmatprep.subr.mxu0 %v65
  %2512 = vmatpush1.msra.mxu0 %v64
  %2513 = vmatprep.subr.mxu0 %v63
  %2514 = vmatpush1.msra.mxu0 %v62
  %2515 = vmatprep.subr.mxu0 %v61
  %2516 = vmatpush1.msra.mxu0 %v60
  %2517 = vmatprep.subr.mxu0 %v59
  %2518 = vmatpush1.msra.mxu0 %v58
  %2519 = vmatprep.subr.mxu0 %v57
  %2520 = vmatpush1.msra.mxu0 %v56
  %2521 = vmatprep.subr.mxu0 %v55
  %2522 = vmatpush1.msra.mxu0 %v54
  %2523 = vmatprep.subr.mxu0 %v53
  %2524 = vmatpush1.msra.mxu0 %v52
  %2525 = vmatprep.subr.mxu0 %v51
  %2526 = vmatpush1.msra.mxu0 %v50
  %2527 = vmatprep.subr.mxu0 %v49
  %2528 = vmatpush1.msra.mxu0 %v48
  %2529 = vmatprep.subr.mxu0 %v47
  %2530 = vmatpush1.msra.mxu0 %v46
  %2531 = vmatprep.subr.mxu0 %v45
  %2532 = vmatpush1.msra.mxu0 %v44
  %2533 = vmatprep.subr.mxu0 %v43
  %2534 = vmatpush1.msra.mxu0 %v42
  %2535 = vmatprep.subr.mxu0 %v41
  %2536 = vmatpush1.msra.mxu0 %v40
  %2537 = vmatprep.subr.mxu0 %v39
  %2538 = vmatpush1.msra.mxu0 %v38
  %2539 = vmatprep.subr.mxu0 %v37
  %2540 = vmatpush1.msra.mxu0 %v36
  %2541 = vmatprep.subr.mxu0 %v35
  %2542 = vmatpush1.msra.mxu0 %v34
  %2543 = vmatprep.subr.mxu0 %v97
  %2544 = vmatpush2.msra.mxu0 %v96
  %2545 = vmatprep.subr.mxu0 %v95
  %2546 = vmatpush2.msra.mxu0 %v94
  %2547 = vmatprep.subr.mxu0 %v93
  %2548 = vmatpush2.msra.mxu0 %v92
  %2549 = vmatprep.subr.mxu0 %v91
  %2550 = vmatpush2.msra.mxu0 %v90
  %2551 = vmatprep.subr.mxu0 %v89
  %2552 = vmatpush2.msra.mxu0 %v88
  %2553 = vmatprep.subr.mxu0 %v87
  %2554 = vmatpush2.msra.mxu0 %v86
  %2555 = vmatprep.subr.mxu0 %v85
  %2556 = vmatpush2.msra.mxu0 %v84
  %2557 = vmatprep.subr.mxu0 %v83
  %2558 = vmatpush2.msra.mxu0 %v82
  %2559 = vmatprep.subr.mxu0 %v81
  %2560 = vmatpush2.msra.mxu0 %v80
  %2561 = vmatprep.subr.mxu0 %v79
  %2562 = vmatpush2.msra.mxu0 %v78
  %2563 = vmatprep.subr.mxu0 %v77
  %2564 = vmatpush2.msra.mxu0 %v76
  %2565 = vmatprep.subr.mxu0 %v75
  %2566 = vmatpush2.msra.mxu0 %v74
  %2567 = vmatprep.subr.mxu0 %v73
  %2568 = vmatpush2.msra.mxu0 %v72
  %2569 = vmatprep.subr.mxu0 %v71
  %2570 = vmatpush2.msra.mxu0 %v70
  %2571 = vmatprep.subr.mxu0 %v69
  %2572 = vmatpush2.msra.mxu0 %v68
  %2573 = vmatprep.subr.mxu0 %v67
  %2574 = vmatpush2.msra.mxu0 %v66
  %2575 = vmatprep.mubr.f32.mxu0 %v2510
  %2576 = vmatmul.mubr.f32.gmra.mxu0 %v2509
  %v2577 = vpop.f32.mrf.mxu0
  %v2578 = vadd.f32 0.0, %v2577
  %v2579 = vpop.f32.mrf.mxu0
  %v2580 = vadd.f32 0.0, %v2579
  %2581 = vdwg.mxu0
  %v2582 = vadd.f32 %v527, %v2578
  %v2583 = vadd.f32 %v528, %v2580
  %v2584 = vmul.f32 %v2582, 0.5
  %v2585 = vmul.f32 %v2583, 0.5
  %v2586 = vtanh.pop %v2584
  %v2587 = vtanh.pop %v2585
  %v2588 = vmul.f32 %v2586, 0.5
  %v2589 = vmul.f32 %v2587, 0.5
  %v2590 = vadd.f32 %v2588, 0.5
  %v2591 = vadd.f32 %v2589, 0.5
  %2592 = vmatprep.subr.mxu0 %v130
  %2593 = vmatpush1.msra.mxu0 %v129
  %2594 = vmatprep.subr.mxu0 %v128
  %2595 = vmatpush1.msra.mxu0 %v127
  %2596 = vmatprep.subr.mxu0 %v126
  %2597 = vmatpush1.msra.mxu0 %v125
  %2598 = vmatprep.subr.mxu0 %v124
  %2599 = vmatpush1.msra.mxu0 %v123
  %2600 = vmatprep.subr.mxu0 %v122
  %2601 = vmatpush1.msra.mxu0 %v121
  %2602 = vmatprep.subr.mxu0 %v120
  %2603 = vmatpush1.msra.mxu0 %v119
  %2604 = vmatprep.subr.mxu0 %v118
  %2605 = vmatpush1.msra.mxu0 %v117
  %2606 = vmatprep.subr.mxu0 %v116
  %2607 = vmatpush1.msra.mxu0 %v115
  %2608 = vmatprep.subr.mxu0 %v114
  %2609 = vmatpush1.msra.mxu0 %v113
  %2610 = vmatprep.subr.mxu0 %v112
  %2611 = vmatpush1.msra.mxu0 %v111
  %2612 = vmatprep.subr.mxu0 %v110
  %2613 = vmatpush1.msra.mxu0 %v109
  %2614 = vmatprep.subr.mxu0 %v108
  %2615 = vmatpush1.msra.mxu0 %v107
  %2616 = vmatprep.subr.mxu0 %v106
  %2617 = vmatpush1.msra.mxu0 %v105
  %2618 = vmatprep.subr.mxu0 %v104
  %2619 = vmatpush1.msra.mxu0 %v103
  %2620 = vmatprep.subr.mxu0 %v102
  %2621 = vmatpush1.msra.mxu0 %v101
  %2622 = vmatprep.subr.mxu0 %v100
  %2623 = vmatpush1.msra.mxu0 %v99
  %2624 = vmatprep.subr.mxu0 %v162
  %2625 = vmatpush2.msra.mxu0 %v161
  %2626 = vmatprep.subr.mxu0 %v160
  %2627 = vmatpush2.msra.mxu0 %v159
  %2628 = vmatprep.subr.mxu0 %v158
  %2629 = vmatpush2.msra.mxu0 %v157
  %2630 = vmatprep.subr.mxu0 %v156
  %2631 = vmatpush2.msra.mxu0 %v155
  %2632 = vmatprep.subr.mxu0 %v154
  %2633 = vmatpush2.msra.mxu0 %v153
  %2634 = vmatprep.subr.mxu0 %v152
  %2635 = vmatpush2.msra.mxu0 %v151
  %2636 = vmatprep.subr.mxu0 %v150
  %2637 = vmatpush2.msra.mxu0 %v149
  %2638 = vmatprep.subr.mxu0 %v148
  %2639 = vmatpush2.msra.mxu0 %v147
  %2640 = vmatprep.subr.mxu0 %v146
  %2641 = vmatpush2.msra.mxu0 %v145
  %2642 = vmatprep.subr.mxu0 %v144
  %2643 = vmatpush2.msra.mxu0 %v143
  %2644 = vmatprep.subr.mxu0 %v142
  %2645 = vmatpush2.msra.mxu0 %v141
  %2646 = vmatprep.subr.mxu0 %v140
  %2647 = vmatpush2.msra.mxu0 %v139
  %2648 = vmatprep.subr.mxu0 %v138
  %2649 = vmatpush2.msra.mxu0 %v137
  %2650 = vmatprep.subr.mxu0 %v136
  %2651 = vmatpush2.msra.mxu0 %v135
  %2652 = vmatprep.subr.mxu0 %v134
  %2653 = vmatpush2.msra.mxu0 %v133
  %2654 = vmatprep.subr.mxu0 %v132
  %2655 = vmatpush2.msra.mxu0 %v131
  %2656 = vmatprep.mubr.f32.mxu0 %v2510
  %2657 = vmatmul.mubr.f32.gmra.mxu0 %v2509
  %v2658 = vpop.f32.mrf.mxu0
  %v2659 = vadd.f32 0.0, %v2658
  %v2660 = vpop.f32.mrf.mxu0
  %v2661 = vadd.f32 0.0, %v2660
  %2662 = vdwg.mxu0
  %v2663 = vadd.f32 %v529, %v2659
  %v2664 = vadd.f32 %v530, %v2661
  %v2665 = vmul.f32 %v2663, 0.5
  %v2666 = vmul.f32 %v2664, 0.5
  %v2667 = vtanh.pop %v2665
  %v2668 = vtanh.pop %v2666
  %v2669 = vmul.f32 %v2667, 0.5
  %v2670 = vmul.f32 %v2668, 0.5
  %v2671 = vadd.f32 %v2669, 0.5
  %v2672 = vadd.f32 %v2670, 0.5
  %2673 = vmatprep.subr.mxu0 %v195
  %2674 = vmatpush1.msra.mxu0 %v194
  %2675 = vmatprep.subr.mxu0 %v193
  %2676 = vmatpush1.msra.mxu0 %v192
  %2677 = vmatprep.subr.mxu0 %v191
  %2678 = vmatpush1.msra.mxu0 %v190
  %2679 = vmatprep.subr.mxu0 %v189
  %2680 = vmatpush1.msra.mxu0 %v188
  %2681 = vmatprep.subr.mxu0 %v187
  %2682 = vmatpush1.msra.mxu0 %v186
  %2683 = vmatprep.subr.mxu0 %v185
  %2684 = vmatpush1.msra.mxu0 %v184
  %2685 = vmatprep.subr.mxu0 %v183
  %2686 = vmatpush1.msra.mxu0 %v182
  %2687 = vmatprep.subr.mxu0 %v181
  %2688 = vmatpush1.msra.mxu0 %v180
  %2689 = vmatprep.subr.mxu0 %v179
  %2690 = vmatpush1.msra.mxu0 %v178
  %2691 = vmatprep.subr.mxu0 %v177
  %2692 = vmatpush1.msra.mxu0 %v176
  %2693 = vmatprep.subr.mxu0 %v175
  %2694 = vmatpush1.msra.mxu0 %v174
  %2695 = vmatprep.subr.mxu0 %v173
  %2696 = vmatpush1.msra.mxu0 %v172
  %2697 = vmatprep.subr.mxu0 %v171
  %2698 = vmatpush1.msra.mxu0 %v170
  %2699 = vmatprep.subr.mxu0 %v169
  %2700 = vmatpush1.msra.mxu0 %v168
  %2701 = vmatprep.subr.mxu0 %v167
  %2702 = vmatpush1.msra.mxu0 %v166
  %2703 = vmatprep.subr.mxu0 %v165
  %2704 = vmatpush1.msra.mxu0 %v164
  %2705 = vmatprep.subr.mxu0 %v227
  %2706 = vmatpush2.msra.mxu0 %v226
  %2707 = vmatprep.subr.mxu0 %v225
  %2708 = vmatpush2.msra.mxu0 %v224
  %2709 = vmatprep.subr.mxu0 %v223
  %2710 = vmatpush2.msra.mxu0 %v222
  %2711 = vmatprep.subr.mxu0 %v221
  %2712 = vmatpush2.msra.mxu0 %v220
  %2713 = vmatprep.subr.mxu0 %v219
  %2714 = vmatpush2.msra.mxu0 %v218
  %2715 = vmatprep.subr.mxu0 %v217
  %2716 = vmatpush2.msra.mxu0 %v216
  %2717 = vmatprep.subr.mxu0 %v215
  %2718 = vmatpush2.msra.mxu0 %v214
  %2719 = vmatprep.subr.mxu0 %v213
  %2720 = vmatpush2.msra.mxu0 %v212
  %2721 = vmatprep.subr.mxu0 %v211
  %2722 = vmatpush2.msra.mxu0 %v210
  %2723 = vmatprep.subr.mxu0 %v209
  %2724 = vmatpush2.msra.mxu0 %v208
  %2725 = vmatprep.subr.mxu0 %v207
  %2726 = vmatpush2.msra.mxu0 %v206
  %2727 = vmatprep.subr.mxu0 %v205
  %2728 = vmatpush2.msra.mxu0 %v204
  %2729 = vmatprep.subr.mxu0 %v203
  %2730 = vmatpush2.msra.mxu0 %v202
  %2731 = vmatprep.subr.mxu0 %v201
  %2732 = vmatpush2.msra.mxu0 %v200
  %2733 = vmatprep.subr.mxu0 %v199
  %2734 = vmatpush2.msra.mxu0 %v198
  %2735 = vmatprep.subr.mxu0 %v197
  %2736 = vmatpush2.msra.mxu0 %v196
  %2737 = vmatprep.mubr.f32.mxu0 %v2510
  %2738 = vmatmul.mubr.f32.gmra.mxu0 %v2509
  %v2739 = vpop.f32.mrf.mxu0
  %v2740 = vadd.f32 0.0, %v2739
  %v2741 = vpop.f32.mrf.mxu0
  %v2742 = vadd.f32 0.0, %v2741
  %2743 = vdwg.mxu0
  %v2744 = vadd.f32 %v531, %v2740
  %v2745 = vadd.f32 %v532, %v2742
  %v2746 = vtanh.pop %v2744
  %v2747 = vtanh.pop %v2745
  %2748 = vmatprep.subr.mxu0 %v260
  %2749 = vmatpush1.msra.mxu0 %v259
  %2750 = vmatprep.subr.mxu0 %v258
  %2751 = vmatpush1.msra.mxu0 %v257
  %2752 = vmatprep.subr.mxu0 %v256
  %2753 = vmatpush1.msra.mxu0 %v255
  %2754 = vmatprep.subr.mxu0 %v254
  %2755 = vmatpush1.msra.mxu0 %v253
  %2756 = vmatprep.subr.mxu0 %v252
  %2757 = vmatpush1.msra.mxu0 %v251
  %2758 = vmatprep.subr.mxu0 %v250
  %2759 = vmatpush1.msra.mxu0 %v249
  %2760 = vmatprep.subr.mxu0 %v248
  %2761 = vmatpush1.msra.mxu0 %v247
  %2762 = vmatprep.subr.mxu0 %v246
  %2763 = vmatpush1.msra.mxu0 %v245
  %2764 = vmatprep.subr.mxu0 %v244
  %2765 = vmatpush1.msra.mxu0 %v243
  %2766 = vmatprep.subr.mxu0 %v242
  %2767 = vmatpush1.msra.mxu0 %v241
  %2768 = vmatprep.subr.mxu0 %v240
  %2769 = vmatpush1.msra.mxu0 %v239
  %2770 = vmatprep.subr.mxu0 %v238
  %2771 = vmatpush1.msra.mxu0 %v237
  %2772 = vmatprep.subr.mxu0 %v236
  %2773 = vmatpush1.msra.mxu0 %v235
  %2774 = vmatprep.subr.mxu0 %v234
  %2775 = vmatpush1.msra.mxu0 %v233
  %2776 = vmatprep.subr.mxu0 %v232
  %2777 = vmatpush1.msra.mxu0 %v231
  %2778 = vmatprep.subr.mxu0 %v230
  %2779 = vmatpush1.msra.mxu0 %v229
  %2780 = vmatprep.subr.mxu0 %v292
  %2781 = vmatpush2.msra.mxu0 %v291
  %2782 = vmatprep.subr.mxu0 %v290
  %2783 = vmatpush2.msra.mxu0 %v289
  %2784 = vmatprep.subr.mxu0 %v288
  %2785 = vmatpush2.msra.mxu0 %v287
  %2786 = vmatprep.subr.mxu0 %v286
  %2787 = vmatpush2.msra.mxu0 %v285
  %2788 = vmatprep.subr.mxu0 %v284
  %2789 = vmatpush2.msra.mxu0 %v283
  %2790 = vmatprep.subr.mxu0 %v282
  %2791 = vmatpush2.msra.mxu0 %v281
  %2792 = vmatprep.subr.mxu0 %v280
  %2793 = vmatpush2.msra.mxu0 %v279
  %2794 = vmatprep.subr.mxu0 %v278
  %2795 = vmatpush2.msra.mxu0 %v277
  %2796 = vmatprep.subr.mxu0 %v276
  %2797 = vmatpush2.msra.mxu0 %v275
  %2798 = vmatprep.subr.mxu0 %v274
  %2799 = vmatpush2.msra.mxu0 %v273
  %2800 = vmatprep.subr.mxu0 %v272
  %2801 = vmatpush2.msra.mxu0 %v271
  %2802 = vmatprep.subr.mxu0 %v270
  %2803 = vmatpush2.msra.mxu0 %v269
  %2804 = vmatprep.subr.mxu0 %v268
  %2805 = vmatpush2.msra.mxu0 %v267
  %2806 = vmatprep.subr.mxu0 %v266
  %2807 = vmatpush2.msra.mxu0 %v265
  %2808 = vmatprep.subr.mxu0 %v264
  %2809 = vmatpush2.msra.mxu0 %v263
  %2810 = vmatprep.subr.mxu0 %v262
  %2811 = vmatpush2.msra.mxu0 %v261
  %2812 = vmatprep.mubr.f32.mxu0 %v2510
  %2813 = vmatmul.mubr.f32.gmra.mxu0 %v2509
  %v2814 = vpop.f32.mrf.mxu0
  %v2815 = vadd.f32 0.0, %v2814
  %v2816 = vpop.f32.mrf.mxu0
  %v2817 = vadd.f32 0.0, %v2816
  %2818 = vdwg.mxu0
  %v2819 = vadd.f32 %v533, %v2815
  %v2820 = vadd.f32 %v534, %v2817
  %v2821 = vmul.f32 %v2819, 0.5
  %v2822 = vmul.f32 %v2820, 0.5
  %v2823 = vtanh.pop %v2821
  %v2824 = vtanh.pop %v2822
  %v2825 = vmul.f32 %v2823, 0.5
  %v2826 = vmul.f32 %v2824, 0.5
  %v2827 = vadd.f32 %v2825, 0.5
  %v2828 = vadd.f32 %v2826, 0.5
  %v2829 = vmul.f32 %v2671, %v2505
  %v2830 = vmul.f32 %v2672, %v2506
  %v2831 = vmul.f32 %v2590, %v2746
  %v2832 = vmul.f32 %v2591, %v2747
  %v2833 = vadd.f32 %v2829, %v2831
  %v2834 = vadd.f32 %v2830, %v2832
  %v2835 = vtanh.pop %v2833
  %v2836 = vtanh.pop %v2834
  %v2837 = vmul.f32 %v2827, %v2835
  %v2838 = vmul.f32 %v2828, %v2836
  %2839 = vmatprep.subr.mxu0 %v65
  %2840 = vmatpush1.msra.mxu0 %v64
  %2841 = vmatprep.subr.mxu0 %v63
  %2842 = vmatpush1.msra.mxu0 %v62
  %2843 = vmatprep.subr.mxu0 %v61
  %2844 = vmatpush1.msra.mxu0 %v60
  %2845 = vmatprep.subr.mxu0 %v59
  %2846 = vmatpush1.msra.mxu0 %v58
  %2847 = vmatprep.subr.mxu0 %v57
  %2848 = vmatpush1.msra.mxu0 %v56
  %2849 = vmatprep.subr.mxu0 %v55
  %2850 = vmatpush1.msra.mxu0 %v54
  %2851 = vmatprep.subr.mxu0 %v53
  %2852 = vmatpush1.msra.mxu0 %v52
  %2853 = vmatprep.subr.mxu0 %v51
  %2854 = vmatpush1.msra.mxu0 %v50
  %2855 = vmatprep.subr.mxu0 %v49
  %2856 = vmatpush1.msra.mxu0 %v48
  %2857 = vmatprep.subr.mxu0 %v47
  %2858 = vmatpush1.msra.mxu0 %v46
  %2859 = vmatprep.subr.mxu0 %v45
  %2860 = vmatpush1.msra.mxu0 %v44
  %2861 = vmatprep.subr.mxu0 %v43
  %2862 = vmatpush1.msra.mxu0 %v42
  %2863 = vmatprep.subr.mxu0 %v41
  %2864 = vmatpush1.msra.mxu0 %v40
  %2865 = vmatprep.subr.mxu0 %v39
  %2866 = vmatpush1.msra.mxu0 %v38
  %2867 = vmatprep.subr.mxu0 %v37
  %2868 = vmatpush1.msra.mxu0 %v36
  %2869 = vmatprep.subr.mxu0 %v35
  %2870 = vmatpush1.msra.mxu0 %v34
  %2871 = vmatprep.subr.mxu0 %v97
  %2872 = vmatpush2.msra.mxu0 %v96
  %2873 = vmatprep.subr.mxu0 %v95
  %2874 = vmatpush2.msra.mxu0 %v94
  %2875 = vmatprep.subr.mxu0 %v93
  %2876 = vmatpush2.msra.mxu0 %v92
  %2877 = vmatprep.subr.mxu0 %v91
  %2878 = vmatpush2.msra.mxu0 %v90
  %2879 = vmatprep.subr.mxu0 %v89
  %2880 = vmatpush2.msra.mxu0 %v88
  %2881 = vmatprep.subr.mxu0 %v87
  %2882 = vmatpush2.msra.mxu0 %v86
  %2883 = vmatprep.subr.mxu0 %v85
  %2884 = vmatpush2.msra.mxu0 %v84
  %2885 = vmatprep.subr.mxu0 %v83
  %2886 = vmatpush2.msra.mxu0 %v82
  %2887 = vmatprep.subr.mxu0 %v81
  %2888 = vmatpush2.msra.mxu0 %v80
  %2889 = vmatprep.subr.mxu0 %v79
  %2890 = vmatpush2.msra.mxu0 %v78
  %2891 = vmatprep.subr.mxu0 %v77
  %2892 = vmatpush2.msra.mxu0 %v76
  %2893 = vmatprep.subr.mxu0 %v75
  %2894 = vmatpush2.msra.mxu0 %v74
  %2895 = vmatprep.subr.mxu0 %v73
  %2896 = vmatpush2.msra.mxu0 %v72
  %2897 = vmatprep.subr.mxu0 %v71
  %2898 = vmatpush2.msra.mxu0 %v70
  %2899 = vmatprep.subr.mxu0 %v69
  %2900 = vmatpush2.msra.mxu0 %v68
  %2901 = vmatprep.subr.mxu0 %v67
  %2902 = vmatpush2.msra.mxu0 %v66
  %2903 = vmatprep.mubr.f32.mxu0 %v2838
  %2904 = vmatmul.mubr.f32.gmra.mxu0 %v2837
  %v2905 = vpop.f32.mrf.mxu0
  %v2906 = vadd.f32 0.0, %v2905
  %v2907 = vpop.f32.mrf.mxu0
  %v2908 = vadd.f32 0.0, %v2907
  %2909 = vdwg.mxu0
  %v2910 = vadd.f32 %v535, %v2906
  %v2911 = vadd.f32 %v536, %v2908
  %v2912 = vmul.f32 %v2910, 0.5
  %v2913 = vmul.f32 %v2911, 0.5
  %v2914 = vtanh.pop %v2912
  %v2915 = vtanh.pop %v2913
  %v2916 = vmul.f32 %v2914, 0.5
  %v2917 = vmul.f32 %v2915, 0.5
  %v2918 = vadd.f32 %v2916, 0.5
  %v2919 = vadd.f32 %v2917, 0.5
  %2920 = vmatprep.subr.mxu0 %v130
  %2921 = vmatpush1.msra.mxu0 %v129
  %2922 = vmatprep.subr.mxu0 %v128
  %2923 = vmatpush1.msra.mxu0 %v127
  %2924 = vmatprep.subr.mxu0 %v126
  %2925 = vmatpush1.msra.mxu0 %v125
  %2926 = vmatprep.subr.mxu0 %v124
  %2927 = vmatpush1.msra.mxu0 %v123
  %2928 = vmatprep.subr.mxu0 %v122
  %2929 = vmatpush1.msra.mxu0 %v121
  %2930 = vmatprep.subr.mxu0 %v120
  %2931 = vmatpush1.msra.mxu0 %v119
  %2932 = vmatprep.subr.mxu0 %v118
  %2933 = vmatpush1.msra.mxu0 %v117
  %2934 = vmatprep.subr.mxu0 %v116
  %2935 = vmatpush1.msra.mxu0 %v115
  %2936 = vmatprep.subr.mxu0 %v114
  %2937 = vmatpush1.msra.mxu0 %v113
  %2938 = vmatprep.subr.mxu0 %v112
  %2939 = vmatpush1.msra.mxu0 %v111
  %2940 = vmatprep.subr.mxu0 %v110
  %2941 = vmatpush1.msra.mxu0 %v109
  %2942 = vmatprep.subr.mxu0 %v108
  %2943 = vmatpush1.msra.mxu0 %v107
  %2944 = vmatprep.subr.mxu0 %v106
  %2945 = vmatpush1.msra.mxu0 %v105
  %2946 = vmatprep.subr.mxu0 %v104
  %2947 = vmatpush1.msra.mxu0 %v103
  %2948 = vmatprep.subr.mxu0 %v102
  %2949 = vmatpush1.msra.mxu0 %v101
  %2950 = vmatprep.subr.mxu0 %v100
  %2951 = vmatpush1.msra.mxu0 %v99
  %2952 = vmatprep.subr.mxu0 %v162
  %2953 = vmatpush2.msra.mxu0 %v161
  %2954 = vmatprep.subr.mxu0 %v160
  %2955 = vmatpush2.msra.mxu0 %v159
  %2956 = vmatprep.subr.mxu0 %v158
  %2957 = vmatpush2.msra.mxu0 %v157
  %2958 = vmatprep.subr.mxu0 %v156
  %2959 = vmatpush2.msra.mxu0 %v155
  %2960 = vmatprep.subr.mxu0 %v154
  %2961 = vmatpush2.msra.mxu0 %v153
  %2962 = vmatprep.subr.mxu0 %v152
  %2963 = vmatpush2.msra.mxu0 %v151
  %2964 = vmatprep.subr.mxu0 %v150
  %2965 = vmatpush2.msra.mxu0 %v149
  %2966 = vmatprep.subr.mxu0 %v148
  %2967 = vmatpush2.msra.mxu0 %v147
  %2968 = vmatprep.subr.mxu0 %v146
  %2969 = vmatpush2.msra.mxu0 %v145
  %2970 = vmatprep.subr.mxu0 %v144
  %2971 = vmatpush2.msra.mxu0 %v143
  %2972 = vmatprep.subr.mxu0 %v142
  %2973 = vmatpush2.msra.mxu0 %v141
  %2974 = vmatprep.subr.mxu0 %v140
  %2975 = vmatpush2.msra.mxu0 %v139
  %2976 = vmatprep.subr.mxu0 %v138
  %2977 = vmatpush2.msra.mxu0 %v137
  %2978 = vmatprep.subr.mxu0 %v136
  %2979 = vmatpush2.msra.mxu0 %v135
  %2980 = vmatprep.subr.mxu0 %v134
  %2981 = vmatpush2.msra.mxu0 %v133
  %2982 = vmatprep.subr.mxu0 %v132
  %2983 = vmatpush2.msra.mxu0 %v131
  %2984 = vmatprep.mubr.f32.mxu0 %v2838
  %2985 = vmatmul.mubr.f32.gmra.mxu0 %v2837
  %v2986 = vpop.f32.mrf.mxu0
  %v2987 = vadd.f32 0.0, %v2986
  %v2988 = vpop.f32.mrf.mxu0
  %v2989 = vadd.f32 0.0, %v2988
  %2990 = vdwg.mxu0
  %v2991 = vadd.f32 %v537, %v2987
  %v2992 = vadd.f32 %v538, %v2989
  %v2993 = vmul.f32 %v2991, 0.5
  %v2994 = vmul.f32 %v2992, 0.5
  %v2995 = vtanh.pop %v2993
  %v2996 = vtanh.pop %v2994
  %v2997 = vmul.f32 %v2995, 0.5
  %v2998 = vmul.f32 %v2996, 0.5
  %v2999 = vadd.f32 %v2997, 0.5
  %v3000 = vadd.f32 %v2998, 0.5
  %3001 = vmatprep.subr.mxu0 %v195
  %3002 = vmatpush1.msra.mxu0 %v194
  %3003 = vmatprep.subr.mxu0 %v193
  %3004 = vmatpush1.msra.mxu0 %v192
  %3005 = vmatprep.subr.mxu0 %v191
  %3006 = vmatpush1.msra.mxu0 %v190
  %3007 = vmatprep.subr.mxu0 %v189
  %3008 = vmatpush1.msra.mxu0 %v188
  %3009 = vmatprep.subr.mxu0 %v187
  %3010 = vmatpush1.msra.mxu0 %v186
  %3011 = vmatprep.subr.mxu0 %v185
  %3012 = vmatpush1.msra.mxu0 %v184
  %3013 = vmatprep.subr.mxu0 %v183
  %3014 = vmatpush1.msra.mxu0 %v182
  %3015 = vmatprep.subr.mxu0 %v181
  %3016 = vmatpush1.msra.mxu0 %v180
  %3017 = vmatprep.subr.mxu0 %v179
  %3018 = vmatpush1.msra.mxu0 %v178
  %3019 = vmatprep.subr.mxu0 %v177
  %3020 = vmatpush1.msra.mxu0 %v176
  %3021 = vmatprep.subr.mxu0 %v175
  %3022 = vmatpush1.msra.mxu0 %v174
  %3023 = vmatprep.subr.mxu0 %v173
  %3024 = vmatpush1.msra.mxu0 %v172
  %3025 = vmatprep.subr.mxu0 %v171
  %3026 = vmatpush1.msra.mxu0 %v170
  %3027 = vmatprep.subr.mxu0 %v169
  %3028 = vmatpush1.msra.mxu0 %v168
  %3029 = vmatprep.subr.mxu0 %v167
  %3030 = vmatpush1.msra.mxu0 %v166
  %3031 = vmatprep.subr.mxu0 %v165
  %3032 = vmatpush1.msra.mxu0 %v164
  %3033 = vmatprep.subr.mxu0 %v227
  %3034 = vmatpush2.msra.mxu0 %v226
  %3035 = vmatprep.subr.mxu0 %v225
  %3036 = vmatpush2.msra.mxu0 %v224
  %3037 = vmatprep.subr.mxu0 %v223
  %3038 = vmatpush2.msra.mxu0 %v222
  %3039 = vmatprep.subr.mxu0 %v221
  %3040 = vmatpush2.msra.mxu0 %v220
  %3041 = vmatprep.subr.mxu0 %v219
  %3042 = vmatpush2.msra.mxu0 %v218
  %3043 = vmatprep.subr.mxu0 %v217
  %3044 = vmatpush2.msra.mxu0 %v216
  %3045 = vmatprep.subr.mxu0 %v215
  %3046 = vmatpush2.msra.mxu0 %v214
  %3047 = vmatprep.subr.mxu0 %v213
  %3048 = vmatpush2.msra.mxu0 %v212
  %3049 = vmatprep.subr.mxu0 %v211
  %3050 = vmatpush2.msra.mxu0 %v210
  %3051 = vmatprep.subr.mxu0 %v209
  %3052 = vmatpush2.msra.mxu0 %v208
  %3053 = vmatprep.subr.mxu0 %v207
  %3054 = vmatpush2.msra.mxu0 %v206
  %3055 = vmatprep.subr.mxu0 %v205
  %3056 = vmatpush2.msra.mxu0 %v204
  %3057 = vmatprep.subr.mxu0 %v203
  %3058 = vmatpush2.msra.mxu0 %v202
  %3059 = vmatprep.subr.mxu0 %v201
  %3060 = vmatpush2.msra.mxu0 %v200
  %3061 = vmatprep.subr.mxu0 %v199
  %3062 = vmatpush2.msra.mxu0 %v198
  %3063 = vmatprep.subr.mxu0 %v197
  %3064 = vmatpush2.msra.mxu0 %v196
  %3065 = vmatprep.mubr.f32.mxu0 %v2838
  %3066 = vmatmul.mubr.f32.gmra.mxu0 %v2837
  %v3067 = vpop.f32.mrf.mxu0
  %v3068 = vadd.f32 0.0, %v3067
  %v3069 = vpop.f32.mrf.mxu0
  %v3070 = vadd.f32 0.0, %v3069
  %3071 = vdwg.mxu0
  %v3072 = vadd.f32 %v539, %v3068
  %v3073 = vadd.f32 %v540, %v3070
  %v3074 = vtanh.pop %v3072
  %v3075 = vtanh.pop %v3073
  %3076 = vmatprep.subr.mxu0 %v260
  %3077 = vmatpush1.msra.mxu0 %v259
  %3078 = vmatprep.subr.mxu0 %v258
  %3079 = vmatpush1.msra.mxu0 %v257
  %3080 = vmatprep.subr.mxu0 %v256
  %3081 = vmatpush1.msra.mxu0 %v255
  %3082 = vmatprep.subr.mxu0 %v254
  %3083 = vmatpush1.msra.mxu0 %v253
  %3084 = vmatprep.subr.mxu0 %v252
  %3085 = vmatpush1.msra.mxu0 %v251
  %3086 = vmatprep.subr.mxu0 %v250
  %3087 = vmatpush1.msra.mxu0 %v249
  %3088 = vmatprep.subr.mxu0 %v248
  %3089 = vmatpush1.msra.mxu0 %v247
  %3090 = vmatprep.subr.mxu0 %v246
  %3091 = vmatpush1.msra.mxu0 %v245
  %3092 = vmatprep.subr.mxu0 %v244
  %3093 = vmatpush1.msra.mxu0 %v243
  %3094 = vmatprep.subr.mxu0 %v242
  %3095 = vmatpush1.msra.mxu0 %v241
  %3096 = vmatprep.subr.mxu0 %v240
  %3097 = vmatpush1.msra.mxu0 %v239
  %3098 = vmatprep.subr.mxu0 %v238
  %3099 = vmatpush1.msra.mxu0 %v237
  %3100 = vmatprep.subr.mxu0 %v236
  %3101 = vmatpush1.msra.mxu0 %v235
  %3102 = vmatprep.subr.mxu0 %v234
  %3103 = vmatpush1.msra.mxu0 %v233
  %3104 = vmatprep.subr.mxu0 %v232
  %3105 = vmatpush1.msra.mxu0 %v231
  %3106 = vmatprep.subr.mxu0 %v230
  %3107 = vmatpush1.msra.mxu0 %v229
  %3108 = vmatprep.subr.mxu0 %v292
  %3109 = vmatpush2.msra.mxu0 %v291
  %3110 = vmatprep.subr.mxu0 %v290
  %3111 = vmatpush2.msra.mxu0 %v289
  %3112 = vmatprep.subr.mxu0 %v288
  %3113 = vmatpush2.msra.mxu0 %v287
  %3114 = vmatprep.subr.mxu0 %v286
  %3115 = vmatpush2.msra.mxu0 %v285
  %3116 = vmatprep.subr.mxu0 %v284
  %3117 = vmatpush2.msra.mxu0 %v283
  %3118 = vmatprep.subr.mxu0 %v282
  %3119 = vmatpush2.msra.mxu0 %v281
  %3120 = vmatprep.subr.mxu0 %v280
  %3121 = vmatpush2.msra.mxu0 %v279
  %3122 = vmatprep.subr.mxu0 %v278
  %3123 = vmatpush2.msra.mxu0 %v277
  %3124 = vmatprep.subr.mxu0 %v276
  %3125 = vmatpush2.msra.mxu0 %v275
  %3126 = vmatprep.subr.mxu0 %v274
  %3127 = vmatpush2.msra.mxu0 %v273
  %3128 = vmatprep.subr.mxu0 %v272
  %3129 = vmatpush2.msra.mxu0 %v271
  %3130 = vmatprep.subr.mxu0 %v270
  %3131 = vmatpush2.msra.mxu0 %v269
  %3132 = vmatprep.subr.mxu0 %v268
  %3133 = vmatpush2.msra.mxu0 %v267
  %3134 = vmatprep.subr.mxu0 %v266
  %3135 = vmatpush2.msra.mxu0 %v265
  %3136 = vmatprep.subr.mxu0 %v264
  %3137 = vmatpush2.msra.mxu0 %v263
  %3138 = vmatprep.subr.mxu0 %v262
  %3139 = vmatpush2.msra.mxu0 %v261
  %3140 = vmatprep.mubr.f32.mxu0 %v2838
  %3141 = vmatmul.mubr.f32.gmra.mxu0 %v2837
  %v3142 = vpop.f32.mrf.mxu0
  %v3143 = vadd.f32 0.0, %v3142
  %v3144 = vpop.f32.mrf.mxu0
  %v3145 = vadd.f32 0.0, %v3144
  %3146 = vdwg.mxu0
  %v3147 = vadd.f32 %v541, %v3143
  %v3148 = vadd.f32 %v542, %v3145
  %v3149 = vmul.f32 %v3147, 0.5
  %v3150 = vmul.f32 %v3148, 0.5
  %v3151 = vtanh.pop %v3149
  %v3152 = vtanh.pop %v3150
  %v3153 = vmul.f32 %v3151, 0.5
  %v3154 = vmul.f32 %v3152, 0.5
  %v3155 = vadd.f32 %v3153, 0.5
  %v3156 = vadd.f32 %v3154, 0.5
  %v3157 = vmul.f32 %v2999, %v2833
  %v3158 = vmul.f32 %v3000, %v2834
  %v3159 = vmul.f32 %v2918, %v3074
  %v3160 = vmul.f32 %v2919, %v3075
  %v3161 = vadd.f32 %v3157, %v3159
  %v3162 = vadd.f32 %v3158, %v3160
  %v3163 = vtanh.pop %v3161
  %v3164 = vtanh.pop %v3162
  %v3165 = vmul.f32 %v3155, %v3163
  %v3166 = vmul.f32 %v3156, %v3164
  %v3167 = vpack.c.bf16 %v3165, %v3165
  %v3168 = vpack.c.bf16 %v3166, %v3166
  %v3169 = vld [vmem:[%s4] sm:$0xf]
  %v3170 = vld [vmem:[%s4 + $0x4] sm:$0xf]
  %v3171 = vld [vmem:[%s4 + $0x8] sm:$0xf]
  %v3172 = vld [vmem:[%s4 + $0xc] sm:$0xf]
  %v3173 = vld [vmem:[%s4 + $0x10] sm:$0xf]
  %v3174 = vld [vmem:[%s4 + $0x14] sm:$0xf]
  %v3175 = vld [vmem:[%s4 + $0x18] sm:$0xf]
  %v3176 = vld [vmem:[%s4 + $0x1c] sm:$0xf]
  %v3177 = vld [vmem:[%s4 + $0x20] sm:$0xf]
  %v3178 = vld [vmem:[%s4 + $0x24] sm:$0xf]
  %v3179 = vld [vmem:[%s4 + $0x28] sm:$0xf]
  %v3180 = vld [vmem:[%s4 + $0x2c] sm:$0xf]
  %v3181 = vld [vmem:[%s4 + $0x30] sm:$0xf]
  %v3182 = vld [vmem:[%s4 + $0x34] sm:$0xf]
  %v3183 = vld [vmem:[%s4 + $0x38] sm:$0xf]
  %v3184 = vld [vmem:[%s4 + $0x3c] sm:$0xf]
  %v3185 = vld [vmem:[%s4 + $0x40] sm:$0xf]
  %v3186 = vld [vmem:[%s4 + $0x44] sm:$0xf]
  %v3187 = vld [vmem:[%s4 + $0x48] sm:$0xf]
  %v3188 = vld [vmem:[%s4 + $0x4c] sm:$0xf]
  %v3189 = vld [vmem:[%s4 + $0x50] sm:$0xf]
  %v3190 = vld [vmem:[%s4 + $0x54] sm:$0xf]
  %v3191 = vld [vmem:[%s4 + $0x58] sm:$0xf]
  %v3192 = vld [vmem:[%s4 + $0x5c] sm:$0xf]
  %v3193 = vld [vmem:[%s4 + $0x60] sm:$0xf]
  %v3194 = vld [vmem:[%s4 + $0x64] sm:$0xf]
  %v3195 = vld [vmem:[%s4 + $0x68] sm:$0xf]
  %v3196 = vld [vmem:[%s4 + $0x6c] sm:$0xf]
  %v3197 = vld [vmem:[%s4 + $0x70] sm:$0xf]
  %v3198 = vld [vmem:[%s4 + $0x74] sm:$0xf]
  %v3199 = vld [vmem:[%s4 + $0x78] sm:$0xf]
  %v3200 = vld [vmem:[%s4 + $0x7c] sm:$0xf]
  %v3201 = vld [vmem:[%s5] sm:$0x1]
  %v3203 = vlaneseq
  %v3204 = vshrl.u32 %v3203, 7
  %v3205 = vsub.s32 0, %v3204
  %v3206 = vrot.slane %v3201, %v3205
  %v3240 = vunpack.c.l.b16 %v3169
  %v3241 = vunpack.c.l.b16 %v3170
  %v3242 = vunpack.c.l.b16 %v3171
  %v3243 = vunpack.c.l.b16 %v3172
  %v3244 = vunpack.c.l.b16 %v3173
  %v3245 = vunpack.c.l.b16 %v3174
  %v3246 = vunpack.c.l.b16 %v3175
  %v3247 = vunpack.c.l.b16 %v3176
  %v3248 = vunpack.c.l.b16 %v3177
  %v3249 = vunpack.c.l.b16 %v3178
  %v3250 = vunpack.c.l.b16 %v3179
  %v3251 = vunpack.c.l.b16 %v3180
  %v3252 = vunpack.c.l.b16 %v3181
  %v3253 = vunpack.c.l.b16 %v3182
  %v3254 = vunpack.c.l.b16 %v3183
  %v3255 = vunpack.c.l.b16 %v3184
  %v3256 = vunpack.c.l.b16 %v3185
  %v3257 = vunpack.c.l.b16 %v3186
  %v3258 = vunpack.c.l.b16 %v3187
  %v3259 = vunpack.c.l.b16 %v3188
  %v3260 = vunpack.c.l.b16 %v3189
  %v3261 = vunpack.c.l.b16 %v3190
  %v3262 = vunpack.c.l.b16 %v3191
  %v3263 = vunpack.c.l.b16 %v3192
  %v3264 = vunpack.c.l.b16 %v3193
  %v3265 = vunpack.c.l.b16 %v3194
  %v3266 = vunpack.c.l.b16 %v3195
  %v3267 = vunpack.c.l.b16 %v3196
  %v3268 = vunpack.c.l.b16 %v3197
  %v3269 = vunpack.c.l.b16 %v3198
  %v3270 = vunpack.c.l.b16 %v3199
  %v3271 = vunpack.c.l.b16 %v3200
  %v3272 = vpack.c.b16 %v3241, %v3240
  %v3273 = vpack.c.b16 %v3243, %v3242
  %v3274 = vpack.c.b16 %v3245, %v3244
  %v3275 = vpack.c.b16 %v3247, %v3246
  %v3276 = vpack.c.b16 %v3249, %v3248
  %v3277 = vpack.c.b16 %v3251, %v3250
  %v3278 = vpack.c.b16 %v3253, %v3252
  %v3279 = vpack.c.b16 %v3255, %v3254
  %v3280 = vpack.c.b16 %v3257, %v3256
  %v3281 = vpack.c.b16 %v3259, %v3258
  %v3282 = vpack.c.b16 %v3261, %v3260
  %v3283 = vpack.c.b16 %v3263, %v3262
  %v3284 = vpack.c.b16 %v3265, %v3264
  %v3285 = vpack.c.b16 %v3267, %v3266
  %v3286 = vpack.c.b16 %v3269, %v3268
  %v3287 = vpack.c.b16 %v3271, %v3270
  %3304 = vmatprep.subr.bf16.mxu0 0
  %3305 = vmatpush1.bf16.msra.mxu0 %v3279
  %3306 = vmatprep.subr.bf16.mxu0 0
  %3307 = vmatpush1.bf16.msra.mxu0 %v3278
  %3308 = vmatprep.subr.bf16.mxu0 0
  %3309 = vmatpush1.bf16.msra.mxu0 %v3277
  %3310 = vmatprep.subr.bf16.mxu0 0
  %3311 = vmatpush1.bf16.msra.mxu0 %v3276
  %3312 = vmatprep.subr.bf16.mxu0 0
  %3313 = vmatpush1.bf16.msra.mxu0 %v3275
  %3314 = vmatprep.subr.bf16.mxu0 0
  %3315 = vmatpush1.bf16.msra.mxu0 %v3274
  %3316 = vmatprep.subr.bf16.mxu0 0
  %3317 = vmatpush1.bf16.msra.mxu0 %v3273
  %3318 = vmatprep.subr.bf16.mxu0 0
  %3319 = vmatpush1.bf16.msra.mxu0 %v3272
  %3320 = vmatprep.subr.bf16.mxu0 0
  %3321 = vmatpush2.bf16.msra.mxu0 %v3287
  %3322 = vmatprep.subr.bf16.mxu0 0
  %3323 = vmatpush2.bf16.msra.mxu0 %v3286
  %3324 = vmatprep.subr.bf16.mxu0 0
  %3325 = vmatpush2.bf16.msra.mxu0 %v3285
  %3326 = vmatprep.subr.bf16.mxu0 0
  %3327 = vmatpush2.bf16.msra.mxu0 %v3284
  %3328 = vmatprep.subr.bf16.mxu0 0
  %3329 = vmatpush2.bf16.msra.mxu0 %v3283
  %3330 = vmatprep.subr.bf16.mxu0 0
  %3331 = vmatpush2.bf16.msra.mxu0 %v3282
  %3332 = vmatprep.subr.bf16.mxu0 0
  %3333 = vmatpush2.bf16.msra.mxu0 %v3281
  %3334 = vmatprep.subr.bf16.mxu0 0
  %3335 = vmatpush2.bf16.msra.mxu0 %v3280
  %3336 = vmatprep.mubr.bf16.mxu0 %v3168
  %3337 = vmatmul.mubr.bf16.gmra.mxu0 %v3167
  %v3338 = vpop.f32.mrf.mxu0
  %v3339 = vadd.f32 %v3206, %v3338
  %v3340 = vpop.f32.mrf.mxu0
  %v3341 = vpop.f32.mrf.mxu0
  %v3342 = vpop.f32.mrf.mxu0
  %3343 = vdwg.mxu0
  %3344 = vst [vmem:[%s6] sm:$0xff] %v3339
  // Predicated region
  $region26: #{char_model_forward.1} parent=0 // pred_check
    _
  $region27: #{char_model_forward.1} parent=0 // pred_check_branch
    %3346 = sbr.rel (0) target = $region29
  $region28: #{char_model_forward.1} parent=0 // pred_region
    _
  $region29: #{char_model_forward.1} parent=0 // pred_fallthru
    _
  // Predicated region
  $region30: #{char_model_forward.1} parent=0 // pred_check
    _
  $region31: #{char_model_forward.1} parent=0 // pred_check_branch
    %3348 = sbr.rel (0) target = $region33
  $region32: #{char_model_forward.1} parent=0 // pred_region
    _
  $region33: #{char_model_forward.1} parent=0 // pred_fallthru
    _

</llo_original>
